<compile_context>
chip_gen: v7x
topology: tpu7x:2x2x1
jax: 0.10.0
libtpu: 0.0.40
codegen_flags: <defaults>
</compile_context>

<pallas_src>
import functools

import jax
import jax.numpy as jnp
from jax.experimental import pallas as pl
from jax.experimental.pallas import tpu as pltpu


def _bffn_kernel(x_ref, w1_ref, b1_ref,
                 dw1_w_ref, dw1_b_ref, bn1_s_ref, bn1_o_ref,
                 dw2_w_ref, dw2_b_ref, bn2_s_ref, bn2_o_ref,
                 w2_ref, b2_ref,
                 o_ref,
                 pad_ref,
                 *, H, W):
    N = H * W
    C = pad_ref.shape[-1]          # hidden channels (lane dimension)

    # ---- fc1: (N, Cin) @ (Cin, C) on the MXU, bf16 operands, f32 accum ----
    h = jnp.dot(x_ref[0], w1_ref[...], preferred_element_type=jnp.float32)
    h = h + b1_ref[...]                           # (N, C) f32
    # Dropout(p=0.0) is the identity in forward -> omitted.
    h = h.reshape(H, W, C)                        # NHWC view of one image

    # Zero the halo every grid step (interior is overwritten before each conv,
    # border must stay zero).  Done unconditionally: with the batch axis
    # marked "parallel" a program_id==0 guard would skip init on core 1.
    pad_ref[...] = jnp.zeros_like(pad_ref)

    def dwconv3x3(img, w_ref, b_ref):
        # img: (H, W, C) f32; w_ref: (9, C) per-tap per-channel weights (VPU work).
        pad_ref[pl.ds(1, H), pl.ds(1, W), :] = img
        # Start the accumulator at the per-channel bias (saves one full add).
        acc = jnp.broadcast_to(b_ref[...], (H, W, C)).astype(jnp.float32)
        for k in range(9):                        # unrolled: 9 shifted MACs
            dy, dx = k // 3, k % 3
            tap = w_ref[pl.ds(k, 1), :]           # (1, C) -> broadcast (H, W, C)
            acc = acc + pad_ref[pl.ds(dy, H), pl.ds(dx, W), :] * tap
        return acc

    # TODO(synk): GELU uses the tanh approximation (EUP-friendly); PyTorch
    # nn.GELU() default is the exact erf form (difference ~1e-3).
    x1 = dwconv3x3(h, dw1_w_ref, dw1_b_ref)
    x1 = jax.nn.gelu(x1, approximate=True)
    x1 = x1 * bn1_s_ref[...] + bn1_o_ref[...]     # BatchNorm (inference), folded

    x2 = dwconv3x3(x1, dw2_w_ref, dw2_b_ref)
    x2 = jax.nn.gelu(x2, approximate=True)
    x2 = x2 * bn2_s_ref[...] + bn2_o_ref[...]

    s = (x1 + x2).reshape(N, C)

    # ---- fc2: (N, C) @ (C, Cout) on the MXU, bf16 operands, f32 accum ----
    y = jnp.dot(s.astype(jnp.bfloat16), w2_ref[...],
                preferred_element_type=jnp.float32)
    y = y + b2_ref[...]
    o_ref[0] = y.astype(o_ref.dtype)


def bffn_forward(x, params, *, H, W, eps=1e-5):
    """x: (B, N, Cin) tokens with N == H*W (same layout as the PyTorch module)."""
    B, N, Cin = x.shape
    assert N == H * W, "sequence length must equal H*W"
    Chid = params["fc1_w"].shape[0]
    Cout = params["fc2_w"].shape[0]
    f32, bf16 = jnp.float32, jnp.bfloat16

    # Linear weights -> (in, out) layout, bf16 MXU operands.
    w1 = params["fc1_w"].T.astype(bf16)                       # (Cin, Chid)
    b1 = params["fc1_b"].reshape(1, Chid).astype(f32)
    w2 = params["fc2_w"].T.astype(bf16)                       # (Chid, Cout)
    b2 = params["fc2_b"].reshape(1, Cout).astype(f32)

    # Depthwise 3x3 weights (Chid, 1, 3, 3) -> (9, Chid); bias -> (1, Chid).
    dw1_w = params["dw1_w"].reshape(Chid, 9).T.astype(f32)
    dw1_b = params["dw1_b"].reshape(1, Chid).astype(f32)
    dw2_w = params["dw2_w"].reshape(Chid, 9).T.astype(f32)
    dw2_b = params["dw2_b"].reshape(1, Chid).astype(f32)

    # BatchNorm2d (inference): fold running stats + affine into scale/shift.
    # TODO(synk): training-mode batch statistics are not computed in-kernel.
    def bn_fold(g, b, rm, rv):
        s = g / jnp.sqrt(rv + eps)
        return (s.reshape(1, Chid).astype(f32),
                (b - rm * s).reshape(1, Chid).astype(f32))

    bn1_s, bn1_o = bn_fold(params["bn1_g"], params["bn1_b"],
                           params["bn1_rm"], params["bn1_rv"])
    bn2_s, bn2_o = bn_fold(params["bn2_g"], params["bn2_b"],
                           params["bn2_rm"], params["bn2_rv"])

    x_bf = x.astype(bf16)        # halve the streamed-activation DMA bytes

    const = lambda b: (0, 0)     # constant block index -> DMA'd once
    in_specs = [
        pl.BlockSpec((1, N, Cin), lambda b: (b, 0, 0)),       # x (one image)
        pl.BlockSpec((Cin, Chid), const),                     # fc1 weight
        pl.BlockSpec((1, Chid), const),                       # fc1 bias
        pl.BlockSpec((9, Chid), const),                       # dwconv1 taps
        pl.BlockSpec((1, Chid), const),                       # dwconv1 bias
        pl.BlockSpec((1, Chid), const),                       # BN1 scale
        pl.BlockSpec((1, Chid), const),                       # BN1 shift
        pl.BlockSpec((9, Chid), const),                       # dwconv2 taps
        pl.BlockSpec((1, Chid), const),                       # dwconv2 bias
        pl.BlockSpec((1, Chid), const),                       # BN2 scale
        pl.BlockSpec((1, Chid), const),                       # BN2 shift
        pl.BlockSpec((Chid, Cout), const),                    # fc2 weight
        pl.BlockSpec((1, Cout), const),                       # fc2 bias
    ]
    out_specs = pl.BlockSpec((1, N, Cout), lambda b: (b, 0, 0))

    # Advisory cost estimate: two dense matmuls + two depthwise convs + GELUs.
    flops = 2 * B * N * Chid * (Cin + Cout + 18) + 12 * B * N * Chid
    transcendentals = 2 * B * N * Chid
    bytes_accessed = (x_bf.size * 2 + (Cin * Chid + Chid * Cout) * 2
                      + B * N * Cout * 4 + (2 * 9 + 8) * Chid * 4)
    cost = pl.CostEstimate(flops=int(flops),
                           transcendentals=int(transcendentals),
                           bytes_accessed=int(bytes_accessed))

    # Per-grid-step VMEM footprint (double-buffered activations, weights,
    # halo scratch, f32 temporaries).  Only raise the scoped limit when a big
    # (H, W, Chid) config needs it, and stay under v7x's 64 MiB physical VMEM.
    vmem_est = (2 * N * Cin * 2 + 2 * N * Cout * 4
                + 2 * (Cin * Chid + Chid * Cout) * 2
                + 2 * (2 * 9 + 8) * Chid * 4
                + (H + 2) * (W + 2) * Chid * 4
                + 6 * N * Chid * 4)
    vmem_limit = int(min(max(32 * 1024 * 1024, 2 * vmem_est),
                         60 * 1024 * 1024))

    kernel = functools.partial(_bffn_kernel, H=H, W=W)
    return pl.pallas_call(
        kernel,
        out_shape=jax.ShapeDtypeStruct((B, N, Cout), jnp.float32),
        grid_spec=pltpu.PrefetchScalarGridSpec(
            num_scalar_prefetch=0,
            grid=(B,),
            in_specs=in_specs,
            out_specs=out_specs,
            scratch_shapes=[pltpu.VMEM((H + 2, W + 2, Chid), jnp.float32)],
        ),
        compiler_params=pltpu.CompilerParams(
            dimension_semantics=("parallel",),
            vmem_limit_bytes=vmem_limit),
        cost_estimate=cost,
    )(x_bf, w1, b1, dw1_w, dw1_b, bn1_s, bn1_o,
      dw2_w, dw2_b, bn2_s, bn2_o, w2, b2)


def bffn_reference(x, params, *, H, W, eps=1e-5):
    """Pure-JAX reference mirroring the kernel numerics (bf16 matmul operands)."""
    B, N, Cin = x.shape
    Chid = params["fc1_w"].shape[0]
    Cout = params["fc2_w"].shape[0]
    bf16, f32 = jnp.bfloat16, jnp.float32

    h = jnp.dot(x.astype(bf16).reshape(B * N, Cin),
                params["fc1_w"].T.astype(bf16),
                preferred_element_type=f32) + params["fc1_b"]
    h = h.reshape(B, H, W, Chid)

    def dwconv(z, w, b):
        w9 = w.reshape(Chid, 9)
        zp = jnp.pad(z, ((0, 0), (1, 1), (1, 1), (0, 0)))
        acc = jnp.zeros_like(z)
        for k in range(9):
            dy, dx = k // 3, k % 3
            acc = acc + zp[:, dy:dy + H, dx:dx + W, :] * w9[:, k]
        return acc + b

    def bn(z, g, be, rm, rv):
        s = g / jnp.sqrt(rv + eps)
        return z * s + (be - rm * s)

    x1 = bn(jax.nn.gelu(dwconv(h, params["dw1_w"], params["dw1_b"]),
                        approximate=True),
            params["bn1_g"], params["bn1_b"], params["bn1_rm"], params["bn1_rv"])
    x2 = bn(jax.nn.gelu(dwconv(x1, params["dw2_w"], params["dw2_b"]),
                        approximate=True),
            params["bn2_g"], params["bn2_b"], params["bn2_rm"], params["bn2_rv"])
    s = (x1 + x2).reshape(B * N, Chid)
    out = jnp.dot(s.astype(bf16), params["fc2_w"].T.astype(bf16),
                  preferred_element_type=f32) + params["fc2_b"]
    return out.reshape(B, N, Cout)


if __name__ == "__main__":
    # Small config consistent with the module: tokens N = H*W = 256 from a
    # 16x16 map, in_features = out_features = 32, hidden_features = 128
    # (lane-dense channels for the depthwise-conv stage), batch = 2.
    B, H, W = 2, 16, 16
    Cin = 32
    Chid = 128
    Cout = Cin
    N = H * W

    key = jax.random.PRNGKey(0)
    ks = jax.random.split(key, 17)

    def nrm(k, shape, scale=1.0):
        return scale * jax.random.normal(k, shape, dtype=jnp.float32)

    x = nrm(ks[0], (B, N, Cin))
    params = dict(
        fc1_w=nrm(ks[1], (Chid, Cin), Cin ** -0.5),
        fc1_b=nrm(ks[2], (Chid,), 0.1),
        dw1_w=nrm(ks[3], (Chid, 1, 3, 3), 1.0 / 3.0),
        dw1_b=nrm(ks[4], (Chid,), 0.1),
        bn1_g=1.0 + 0.1 * jax.random.normal(ks[5], (Chid,), jnp.float32),
        bn1_b=nrm(ks[6], (Chid,), 0.1),
        bn1_rm=nrm(ks[7], (Chid,), 0.1),
        bn1_rv=0.5 + jax.random.uniform(ks[8], (Chid,), jnp.float32),
        dw2_w=nrm(ks[9], (Chid, 1, 3, 3), 1.0 / 3.0),
        dw2_b=nrm(ks[10], (Chid,), 0.1),
        bn2_g=1.0 + 0.1 * jax.random.normal(ks[11], (Chid,), jnp.float32),
        bn2_b=nrm(ks[12], (Chid,), 0.1),
        bn2_rm=nrm(ks[13], (Chid,), 0.1),
        bn2_rv=0.5 + jax.random.uniform(ks[14], (Chid,), jnp.float32),
        fc2_w=nrm(ks[15], (Cout, Chid), Chid ** -0.5),
        fc2_b=nrm(ks[16], (Cout,), 0.1),
    )

    out = bffn_forward(x, params, H=H, W=W)
    out = jax.block_until_ready(out)

    ref = bffn_reference(x, params, H=H, W=W)
    assert out.shape == (B, N, Cout)
    err = float(jnp.max(jnp.abs(out - ref)))
    assert err < 5e-3, f"max abs err too large: {err}"
    print("KERNEL_OK")
</pallas_src>

<mosaic_0001>
module attributes {stable_mosaic.version = 11 : i64} {
  func.func @_bffn_kernel(%arg0: i32, %arg1: memref<1x256x32xbf16, #tpu.memory_space<vmem>>, %arg2: memref<32x128xbf16, #tpu.memory_space<vmem>>, %arg3: memref<1x128xf32, #tpu.memory_space<vmem>>, %arg4: memref<9x128xf32, #tpu.memory_space<vmem>>, %arg5: memref<1x128xf32, #tpu.memory_space<vmem>>, %arg6: memref<1x128xf32, #tpu.memory_space<vmem>>, %arg7: memref<1x128xf32, #tpu.memory_space<vmem>>, %arg8: memref<9x128xf32, #tpu.memory_space<vmem>>, %arg9: memref<1x128xf32, #tpu.memory_space<vmem>>, %arg10: memref<1x128xf32, #tpu.memory_space<vmem>>, %arg11: memref<1x128xf32, #tpu.memory_space<vmem>>, %arg12: memref<128x32xbf16, #tpu.memory_space<vmem>>, %arg13: memref<1x32xf32, #tpu.memory_space<vmem>>, %arg14: memref<1x256x32xf32, #tpu.memory_space<vmem>>, %arg15: memref<18x18x128xf32, #tpu.memory_space<vmem>>) attributes {dimension_semantics = [#tpu.dimension_semantics<parallel>], iteration_bounds = array<i64: 2>, scalar_prefetch = 0 : i64, scratch_operands = 1 : i64, tpu.core_type = #tpu.core_type<tc>, window_params = [{transform_indices = @transform_0, window_bounds = array<i64: 1, 256, 32>}, {pipeline_mode = #tpu.pipeline_mode<synchronous>, transform_indices = @transform_1, window_bounds = array<i64: 32, 128>}, {pipeline_mode = #tpu.pipeline_mode<synchronous>, transform_indices = @transform_2, window_bounds = array<i64: 1, 128>}, {pipeline_mode = #tpu.pipeline_mode<synchronous>, transform_indices = @transform_3, window_bounds = array<i64: 9, 128>}, {pipeline_mode = #tpu.pipeline_mode<synchronous>, transform_indices = @transform_4, window_bounds = array<i64: 1, 128>}, {pipeline_mode = #tpu.pipeline_mode<synchronous>, transform_indices = @transform_5, window_bounds = array<i64: 1, 128>}, {pipeline_mode = #tpu.pipeline_mode<synchronous>, transform_indices = @transform_6, window_bounds = array<i64: 1, 128>}, {pipeline_mode = #tpu.pipeline_mode<synchronous>, transform_indices = @transform_7, window_bounds = array<i64: 9, 128>}, {pipeline_mode = #tpu.pipeline_mode<synchronous>, transform_indices = @transform_8, window_bounds = array<i64: 1, 128>}, {pipeline_mode = #tpu.pipeline_mode<synchronous>, transform_indices = @transform_9, window_bounds = array<i64: 1, 128>}, {pipeline_mode = #tpu.pipeline_mode<synchronous>, transform_indices = @transform_10, window_bounds = array<i64: 1, 128>}, {pipeline_mode = #tpu.pipeline_mode<synchronous>, transform_indices = @transform_11, window_bounds = array<i64: 128, 32>}, {pipeline_mode = #tpu.pipeline_mode<synchronous>, transform_indices = @transform_12, window_bounds = array<i64: 1, 32>}, {transform_indices = @transform_13, window_bounds = array<i64: 1, 256, 32>}]} {
    %c0 = arith.constant 0 : index
    %c0_0 = arith.constant 0 : index
    %c0_1 = arith.constant 0 : index
    %0 = vector.load %arg1[%c0, %c0_0, %c0_1] : memref<1x256x32xbf16, #tpu.memory_space<vmem>>, vector<1x256x32xbf16>
    %1 = vector.shape_cast %0 : vector<1x256x32xbf16> to vector<256x32xbf16>
    %c0_2 = arith.constant 0 : index
    %c0_3 = arith.constant 0 : index
    %2 = vector.load %arg2[%c0_2, %c0_3] : memref<32x128xbf16, #tpu.memory_space<vmem>>, vector<32x128xbf16>
    %cst = arith.constant dense<0.000000e+00> : vector<256x128xf32>
    %3 = tpu.matmul %1, %2, %cst {dimension_numbers = #tpu.dot_dimension_numbers<[1], [0], [0], [1], [0, 0, 1, 1], [], []>} : vector<256x32xbf16>, vector<32x128xbf16>, vector<256x128xf32> -> vector<256x128xf32>
    %c0_4 = arith.constant 0 : index
    %c0_5 = arith.constant 0 : index
    %4 = vector.load %arg3[%c0_4, %c0_5] : memref<1x128xf32, #tpu.memory_space<vmem>>, vector<1x128xf32>
    %5 = vector.broadcast %4 : vector<1x128xf32> to vector<256x128xf32>
    %6 = arith.addf %3, %5 : vector<256x128xf32>
    %7 = vector.shape_cast %6 : vector<256x128xf32> to vector<16x16x128xf32>
    %cst_6 = arith.constant 0.000000e+00 : f32
    %8 = vector.broadcast %cst_6 : f32 to vector<18x18x128xf32>
    %c0_7 = arith.constant 0 : index
    %c0_8 = arith.constant 0 : index
    %c0_9 = arith.constant 0 : index
    %9 = vector.load %arg15[%c0_7, %c0_8, %c0_9] : memref<18x18x128xf32, #tpu.memory_space<vmem>>, vector<18x18x128xf32>
    tpu.vector_store %arg15[%c0_7, %c0_8, %c0_9], %8 {strides = array<i32>} : memref<18x18x128xf32, #tpu.memory_space<vmem>>, vector<18x18x128xf32>,
    %c1 = arith.constant 1 : index
    %c1_10 = arith.constant 1 : index
    %c0_11 = arith.constant 0 : index
    %10 = vector.load %arg15[%c1, %c1_10, %c0_11] : memref<18x18x128xf32, #tpu.memory_space<vmem>>, vector<16x16x128xf32>
    tpu.vector_store %arg15[%c1, %c1_10, %c0_11], %7 {strides = array<i32>} : memref<18x18x128xf32, #tpu.memory_space<vmem>>, vector<16x16x128xf32>,
    %c0_12 = arith.constant 0 : index
    %c0_13 = arith.constant 0 : index
    %11 = vector.load %arg5[%c0_12, %c0_13] : memref<1x128xf32, #tpu.memory_space<vmem>>, vector<1x128xf32>
    %12 = vector.shape_cast %11 : vector<1x128xf32> to vector<1x1x128xf32>
    %13 = vector.broadcast %12 : vector<1x1x128xf32> to vector<16x16x128xf32>
    %c0_14 = arith.constant 0 : index
    %c0_15 = arith.constant 0 : index
    %14 = vector.load %arg4[%c0_14, %c0_15] : memref<9x128xf32, #tpu.memory_space<vmem>>, vector<1x128xf32>
    %c0_16 = arith.constant 0 : index
    %c0_17 = arith.constant 0 : index
    %c0_18 = arith.constant 0 : index
    %15 = vector.load %arg15[%c0_16, %c0_17, %c0_18] : memref<18x18x128xf32, #tpu.memory_space<vmem>>, vector<16x16x128xf32>
    %16 = vector.shape_cast %14 : vector<1x128xf32> to vector<1x1x128xf32>
    %17 = vector.broadcast %16 : vector<1x1x128xf32> to vector<16x16x128xf32>
    %18 = arith.mulf %15, %17 : vector<16x16x128xf32>
    %19 = arith.addf %13, %18 : vector<16x16x128xf32>
    %c1_19 = arith.constant 1 : index
    %c0_20 = arith.constant 0 : index
    %20 = vector.load %arg4[%c1_19, %c0_20] : memref<9x128xf32, #tpu.memory_space<vmem>>, vector<1x128xf32>
    %c0_21 = arith.constant 0 : index
    %c1_22 = arith.constant 1 : index
    %c0_23 = arith.constant 0 : index
    %21 = vector.load %arg15[%c0_21, %c1_22, %c0_23] : memref<18x18x128xf32, #tpu.memory_space<vmem>>, vector<16x16x128xf32>
    %22 = vector.shape_cast %20 : vector<1x128xf32> to vector<1x1x128xf32>
    %23 = vector.broadcast %22 : vector<1x1x128xf32> to vector<16x16x128xf32>
    %24 = arith.mulf %21, %23 : vector<16x16x128xf32>
    %25 = arith.addf %19, %24 : vector<16x16x128xf32>
    %c2 = arith.constant 2 : index
    %c0_24 = arith.constant 0 : index
    %26 = vector.load %arg4[%c2, %c0_24] : memref<9x128xf32, #tpu.memory_space<vmem>>, vector<1x128xf32>
    %c0_25 = arith.constant 0 : index
    %c2_26 = arith.constant 2 : index
    %c0_27 = arith.constant 0 : index
    %27 = vector.load %arg15[%c0_25, %c2_26, %c0_27] : memref<18x18x128xf32, #tpu.memory_space<vmem>>, vector<16x16x128xf32>
    %28 = vector.shape_cast %26 : vector<1x128xf32> to vector<1x1x128xf32>
    %29 = vector.broadcast %28 : vector<1x1x128xf32> to vector<16x16x128xf32>
    %30 = arith.mulf %27, %29 : vector<16x16x128xf32>
    %31 = arith.addf %25, %30 : vector<16x16x128xf32>
    %c3 = arith.constant 3 : index
    %c0_28 = arith.constant 0 : index
    %32 = vector.load %arg4[%c3, %c0_28] : memref<9x128xf32, #tpu.memory_space<vmem>>, vector<1x128xf32>
    %c1_29 = arith.constant 1 : index
    %c0_30 = arith.constant 0 : index
    %c0_31 = arith.constant 0 : index
    %33 = vector.load %arg15[%c1_29, %c0_30, %c0_31] : memref<18x18x128xf32, #tpu.memory_space<vmem>>, vector<16x16x128xf32>
    %34 = vector.shape_cast %32 : vector<1x128xf32> to vector<1x1x128xf32>
    %35 = vector.broadcast %34 : vector<1x1x128xf32> to vector<16x16x128xf32>
    %36 = arith.mulf %33, %35 : vector<16x16x128xf32>
    %37 = arith.addf %31, %36 : vector<16x16x128xf32>
    %c4 = arith.constant 4 : index
    %c0_32 = arith.constant 0 : index
    %38 = vector.load %arg4[%c4, %c0_32] : memref<9x128xf32, #tpu.memory_space<vmem>>, vector<1x128xf32>
    %c1_33 = arith.constant 1 : index
    %c1_34 = arith.constant 1 : index
    %c0_35 = arith.constant 0 : index
    %39 = vector.load %arg15[%c1_33, %c1_34, %c0_35] : memref<18x18x128xf32, #tpu.memory_space<vmem>>, vector<16x16x128xf32>
    %40 = vector.shape_cast %38 : vector<1x128xf32> to vector<1x1x128xf32>
    %41 = vector.broadcast %40 : vector<1x1x128xf32> to vector<16x16x128xf32>
    %42 = arith.mulf %39, %41 : vector<16x16x128xf32>
    %43 = arith.addf %37, %42 : vector<16x16x128xf32>
    %c5 = arith.constant 5 : index
    %c0_36 = arith.constant 0 : index
    %44 = vector.load %arg4[%c5, %c0_36] : memref<9x128xf32, #tpu.memory_space<vmem>>, vector<1x128xf32>
    %c1_37 = arith.constant 1 : index
    %c2_38 = arith.constant 2 : index
    %c0_39 = arith.constant 0 : index
    %45 = vector.load %arg15[%c1_37, %c2_38, %c0_39] : memref<18x18x128xf32, #tpu.memory_space<vmem>>, vector<16x16x128xf32>
    %46 = vector.shape_cast %44 : vector<1x128xf32> to vector<1x1x128xf32>
    %47 = vector.broadcast %46 : vector<1x1x128xf32> to vector<16x16x128xf32>
    %48 = arith.mulf %45, %47 : vector<16x16x128xf32>
    %49 = arith.addf %43, %48 : vector<16x16x128xf32>
    %c6 = arith.constant 6 : index
    %c0_40 = arith.constant 0 : index
    %50 = vector.load %arg4[%c6, %c0_40] : memref<9x128xf32, #tpu.memory_space<vmem>>, vector<1x128xf32>
    %c2_41 = arith.constant 2 : index
    %c0_42 = arith.constant 0 : index
    %c0_43 = arith.constant 0 : index
    %51 = vector.load %arg15[%c2_41, %c0_42, %c0_43] : memref<18x18x128xf32, #tpu.memory_space<vmem>>, vector<16x16x128xf32>
    %52 = vector.shape_cast %50 : vector<1x128xf32> to vector<1x1x128xf32>
    %53 = vector.broadcast %52 : vector<1x1x128xf32> to vector<16x16x128xf32>
    %54 = arith.mulf %51, %53 : vector<16x16x128xf32>
    %55 = arith.addf %49, %54 : vector<16x16x128xf32>
    %c7 = arith.constant 7 : index
    %c0_44 = arith.constant 0 : index
    %56 = vector.load %arg4[%c7, %c0_44] : memref<9x128xf32, #tpu.memory_space<vmem>>, vector<1x128xf32>
    %c2_45 = arith.constant 2 : index
    %c1_46 = arith.constant 1 : index
    %c0_47 = arith.constant 0 : index
    %57 = vector.load %arg15[%c2_45, %c1_46, %c0_47] : memref<18x18x128xf32, #tpu.memory_space<vmem>>, vector<16x16x128xf32>
    %58 = vector.shape_cast %56 : vector<1x128xf32> to vector<1x1x128xf32>
    %59 = vector.broadcast %58 : vector<1x1x128xf32> to vector<16x16x128xf32>
    %60 = arith.mulf %57, %59 : vector<16x16x128xf32>
    %61 = arith.addf %55, %60 : vector<16x16x128xf32>
    %c8 = arith.constant 8 : index
    %c0_48 = arith.constant 0 : index
    %62 = vector.load %arg4[%c8, %c0_48] : memref<9x128xf32, #tpu.memory_space<vmem>>, vector<1x128xf32>
    %c2_49 = arith.constant 2 : index
    %c2_50 = arith.constant 2 : index
    %c0_51 = arith.constant 0 : index
    %63 = vector.load %arg15[%c2_49, %c2_50, %c0_51] : memref<18x18x128xf32, #tpu.memory_space<vmem>>, vector<16x16x128xf32>
    %64 = vector.shape_cast %62 : vector<1x128xf32> to vector<1x1x128xf32>
    %65 = vector.broadcast %64 : vector<1x1x128xf32> to vector<16x16x128xf32>
    %66 = arith.mulf %63, %65 : vector<16x16x128xf32>
    %67 = arith.addf %61, %66 : vector<16x16x128xf32>
    %68 = arith.mulf %67, %67 : vector<16x16x128xf32>
    %69 = arith.mulf %67, %68 : vector<16x16x128xf32>
    %cst_52 = arith.constant 4.471500e-02 : f32
    %70 = vector.broadcast %cst_52 : f32 to vector<16x16x128xf32>
    %71 = arith.mulf %70, %69 : vector<16x16x128xf32>
    %72 = arith.addf %67, %71 : vector<16x16x128xf32>
    %cst_53 = arith.constant 0.797884583 : f32
    %73 = vector.broadcast %cst_53 : f32 to vector<16x16x128xf32>
    %74 = arith.mulf %73, %72 : vector<16x16x128xf32>
    %75 = math.tanh %74 : vector<16x16x128xf32>
    %cst_54 = arith.constant 1.000000e+00 : f32
    %76 = vector.broadcast %cst_54 : f32 to vector<16x16x128xf32>
    %77 = arith.addf %76, %75 : vector<16x16x128xf32>
    %cst_55 = arith.constant 5.000000e-01 : f32
    %78 = vector.broadcast %cst_55 : f32 to vector<16x16x128xf32>
    %79 = arith.mulf %78, %77 : vector<16x16x128xf32>
    %80 = arith.mulf %67, %79 : vector<16x16x128xf32>
    %c0_56 = arith.constant 0 : index
    %c0_57 = arith.constant 0 : index
    %81 = vector.load %arg6[%c0_56, %c0_57] : memref<1x128xf32, #tpu.memory_space<vmem>>, vector<1x128xf32>
    %82 = vector.shape_cast %81 : vector<1x128xf32> to vector<1x1x128xf32>
    %83 = vector.broadcast %82 : vector<1x1x128xf32> to vector<16x16x128xf32>
    %84 = arith.mulf %80, %83 : vector<16x16x128xf32>
    %c0_58 = arith.constant 0 : index
    %c0_59 = arith.constant 0 : index
    %85 = vector.load %arg7[%c0_58, %c0_59] : memref<1x128xf32, #tpu.memory_space<vmem>>, vector<1x128xf32>
    %86 = vector.shape_cast %85 : vector<1x128xf32> to vector<1x1x128xf32>
    %87 = vector.broadcast %86 : vector<1x1x128xf32> to vector<16x16x128xf32>
    %88 = arith.addf %84, %87 : vector<16x16x128xf32>
    %c1_60 = arith.constant 1 : index
    %c1_61 = arith.constant 1 : index
    %c0_62 = arith.constant 0 : index
    %89 = vector.load %arg15[%c1_60, %c1_61, %c0_62] : memref<18x18x128xf32, #tpu.memory_space<vmem>>, vector<16x16x128xf32>
    tpu.vector_store %arg15[%c1_60, %c1_61, %c0_62], %88 {strides = array<i32>} : memref<18x18x128xf32, #tpu.memory_space<vmem>>, vector<16x16x128xf32>,
    %c0_63 = arith.constant 0 : index
    %c0_64 = arith.constant 0 : index
    %90 = vector.load %arg9[%c0_63, %c0_64] : memref<1x128xf32, #tpu.memory_space<vmem>>, vector<1x128xf32>
    %91 = vector.shape_cast %90 : vector<1x128xf32> to vector<1x1x128xf32>
    %92 = vector.broadcast %91 : vector<1x1x128xf32> to vector<16x16x128xf32>
    %c0_65 = arith.constant 0 : index
    %c0_66 = arith.constant 0 : index
    %93 = vector.load %arg8[%c0_65, %c0_66] : memref<9x128xf32, #tpu.memory_space<vmem>>, vector<1x128xf32>
    %c0_67 = arith.constant 0 : index
    %c0_68 = arith.constant 0 : index
    %c0_69 = arith.constant 0 : index
    %94 = vector.load %arg15[%c0_67, %c0_68, %c0_69] : memref<18x18x128xf32, #tpu.memory_space<vmem>>, vector<16x16x128xf32>
    %95 = vector.shape_cast %93 : vector<1x128xf32> to vector<1x1x128xf32>
    %96 = vector.broadcast %95 : vector<1x1x128xf32> to vector<16x16x128xf32>
    %97 = arith.mulf %94, %96 : vector<16x16x128xf32>
    %98 = arith.addf %92, %97 : vector<16x16x128xf32>
    %c1_70 = arith.constant 1 : index
    %c0_71 = arith.constant 0 : index
    %99 = vector.load %arg8[%c1_70, %c0_71] : memref<9x128xf32, #tpu.memory_space<vmem>>, vector<1x128xf32>
    %c0_72 = arith.constant 0 : index
    %c1_73 = arith.constant 1 : index
    %c0_74 = arith.constant 0 : index
    %100 = vector.load %arg15[%c0_72, %c1_73, %c0_74] : memref<18x18x128xf32, #tpu.memory_space<vmem>>, vector<16x16x128xf32>
    %101 = vector.shape_cast %99 : vector<1x128xf32> to vector<1x1x128xf32>
    %102 = vector.broadcast %101 : vector<1x1x128xf32> to vector<16x16x128xf32>
    %103 = arith.mulf %100, %102 : vector<16x16x128xf32>
    %104 = arith.addf %98, %103 : vector<16x16x128xf32>
    %c2_75 = arith.constant 2 : index
    %c0_76 = arith.constant 0 : index
    %105 = vector.load %arg8[%c2_75, %c0_76] : memref<9x128xf32, #tpu.memory_space<vmem>>, vector<1x128xf32>
    %c0_77 = arith.constant 0 : index
    %c2_78 = arith.constant 2 : index
    %c0_79 = arith.constant 0 : index
    %106 = vector.load %arg15[%c0_77, %c2_78, %c0_79] : memref<18x18x128xf32, #tpu.memory_space<vmem>>, vector<16x16x128xf32>
    %107 = vector.shape_cast %105 : vector<1x128xf32> to vector<1x1x128xf32>
    %108 = vector.broadcast %107 : vector<1x1x128xf32> to vector<16x16x128xf32>
    %109 = arith.mulf %106, %108 : vector<16x16x128xf32>
    %110 = arith.addf %104, %109 : vector<16x16x128xf32>
    %c3_80 = arith.constant 3 : index
    %c0_81 = arith.constant 0 : index
    %111 = vector.load %arg8[%c3_80, %c0_81] : memref<9x128xf32, #tpu.memory_space<vmem>>, vector<1x128xf32>
    %c1_82 = arith.constant 1 : index
    %c0_83 = arith.constant 0 : index
    %c0_84 = arith.constant 0 : index
    %112 = vector.load %arg15[%c1_82, %c0_83, %c0_84] : memref<18x18x128xf32, #tpu.memory_space<vmem>>, vector<16x16x128xf32>
    %113 = vector.shape_cast %111 : vector<1x128xf32> to vector<1x1x128xf32>
    %114 = vector.broadcast %113 : vector<1x1x128xf32> to vector<16x16x128xf32>
    %115 = arith.mulf %112, %114 : vector<16x16x128xf32>
    %116 = arith.addf %110, %115 : vector<16x16x128xf32>
    %c4_85 = arith.constant 4 : index
    %c0_86 = arith.constant 0 : index
    %117 = vector.load %arg8[%c4_85, %c0_86] : memref<9x128xf32, #tpu.memory_space<vmem>>, vector<1x128xf32>
    %c1_87 = arith.constant 1 : index
    %c1_88 = arith.constant 1 : index
    %c0_89 = arith.constant 0 : index
    %118 = vector.load %arg15[%c1_87, %c1_88, %c0_89] : memref<18x18x128xf32, #tpu.memory_space<vmem>>, vector<16x16x128xf32>
    %119 = vector.shape_cast %117 : vector<1x128xf32> to vector<1x1x128xf32>
    %120 = vector.broadcast %119 : vector<1x1x128xf32> to vector<16x16x128xf32>
    %121 = arith.mulf %118, %120 : vector<16x16x128xf32>
    %122 = arith.addf %116, %121 : vector<16x16x128xf32>
    %c5_90 = arith.constant 5 : index
    %c0_91 = arith.constant 0 : index
    %123 = vector.load %arg8[%c5_90, %c0_91] : memref<9x128xf32, #tpu.memory_space<vmem>>, vector<1x128xf32>
    %c1_92 = arith.constant 1 : index
    %c2_93 = arith.constant 2 : index
    %c0_94 = arith.constant 0 : index
    %124 = vector.load %arg15[%c1_92, %c2_93, %c0_94] : memref<18x18x128xf32, #tpu.memory_space<vmem>>, vector<16x16x128xf32>
    %125 = vector.shape_cast %123 : vector<1x128xf32> to vector<1x1x128xf32>
    %126 = vector.broadcast %125 : vector<1x1x128xf32> to vector<16x16x128xf32>
    %127 = arith.mulf %124, %126 : vector<16x16x128xf32>
    %128 = arith.addf %122, %127 : vector<16x16x128xf32>
    %c6_95 = arith.constant 6 : index
    %c0_96 = arith.constant 0 : index
    %129 = vector.load %arg8[%c6_95, %c0_96] : memref<9x128xf32, #tpu.memory_space<vmem>>, vector<1x128xf32>
    %c2_97 = arith.constant 2 : index
    %c0_98 = arith.constant 0 : index
    %c0_99 = arith.constant 0 : index
    %130 = vector.load %arg15[%c2_97, %c0_98, %c0_99] : memref<18x18x128xf32, #tpu.memory_space<vmem>>, vector<16x16x128xf32>
    %131 = vector.shape_cast %129 : vector<1x128xf32> to vector<1x1x128xf32>
    %132 = vector.broadcast %131 : vector<1x1x128xf32> to vector<16x16x128xf32>
    %133 = arith.mulf %130, %132 : vector<16x16x128xf32>
    %134 = arith.addf %128, %133 : vector<16x16x128xf32>
    %c7_100 = arith.constant 7 : index
    %c0_101 = arith.constant 0 : index
    %135 = vector.load %arg8[%c7_100, %c0_101] : memref<9x128xf32, #tpu.memory_space<vmem>>, vector<1x128xf32>
    %c2_102 = arith.constant 2 : index
    %c1_103 = arith.constant 1 : index
    %c0_104 = arith.constant 0 : index
    %136 = vector.load %arg15[%c2_102, %c1_103, %c0_104] : memref<18x18x128xf32, #tpu.memory_space<vmem>>, vector<16x16x128xf32>
    %137 = vector.shape_cast %135 : vector<1x128xf32> to vector<1x1x128xf32>
    %138 = vector.broadcast %137 : vector<1x1x128xf32> to vector<16x16x128xf32>
    %139 = arith.mulf %136, %138 : vector<16x16x128xf32>
    %140 = arith.addf %134, %139 : vector<16x16x128xf32>
    %c8_105 = arith.constant 8 : index
    %c0_106 = arith.constant 0 : index
    %141 = vector.load %arg8[%c8_105, %c0_106] : memref<9x128xf32, #tpu.memory_space<vmem>>, vector<1x128xf32>
    %c2_107 = arith.constant 2 : index
    %c2_108 = arith.constant 2 : index
    %c0_109 = arith.constant 0 : index
    %142 = vector.load %arg15[%c2_107, %c2_108, %c0_109] : memref<18x18x128xf32, #tpu.memory_space<vmem>>, vector<16x16x128xf32>
    %143 = vector.shape_cast %141 : vector<1x128xf32> to vector<1x1x128xf32>
    %144 = vector.broadcast %143 : vector<1x1x128xf32> to vector<16x16x128xf32>
    %145 = arith.mulf %142, %144 : vector<16x16x128xf32>
    %146 = arith.addf %140, %145 : vector<16x16x128xf32>
    %147 = arith.mulf %146, %146 : vector<16x16x128xf32>
    %148 = arith.mulf %146, %147 : vector<16x16x128xf32>
    %cst_110 = arith.constant 4.471500e-02 : f32
    %149 = vector.broadcast %cst_110 : f32 to vector<16x16x128xf32>
    %150 = arith.mulf %149, %148 : vector<16x16x128xf32>
    %151 = arith.addf %146, %150 : vector<16x16x128xf32>
    %cst_111 = arith.constant 0.797884583 : f32
    %152 = vector.broadcast %cst_111 : f32 to vector<16x16x128xf32>
    %153 = arith.mulf %152, %151 : vector<16x16x128xf32>
    %154 = math.tanh %153 : vector<16x16x128xf32>
    %cst_112 = arith.constant 1.000000e+00 : f32
    %155 = vector.broadcast %cst_112 : f32 to vector<16x16x128xf32>
    %156 = arith.addf %155, %154 : vector<16x16x128xf32>
    %cst_113 = arith.constant 5.000000e-01 : f32
    %157 = vector.broadcast %cst_113 : f32 to vector<16x16x128xf32>
    %158 = arith.mulf %157, %156 : vector<16x16x128xf32>
    %159 = arith.mulf %146, %158 : vector<16x16x128xf32>
    %c0_114 = arith.constant 0 : index
    %c0_115 = arith.constant 0 : index
    %160 = vector.load %arg10[%c0_114, %c0_115] : memref<1x128xf32, #tpu.memory_space<vmem>>, vector<1x128xf32>
    %161 = vector.shape_cast %160 : vector<1x128xf32> to vector<1x1x128xf32>
    %162 = vector.broadcast %161 : vector<1x1x128xf32> to vector<16x16x128xf32>
    %163 = arith.mulf %159, %162 : vector<16x16x128xf32>
    %c0_116 = arith.constant 0 : index
    %c0_117 = arith.constant 0 : index
    %164 = vector.load %arg11[%c0_116, %c0_117] : memref<1x128xf32, #tpu.memory_space<vmem>>, vector<1x128xf32>
    %165 = vector.shape_cast %164 : vector<1x128xf32> to vector<1x1x128xf32>
    %166 = vector.broadcast %165 : vector<1x1x128xf32> to vector<16x16x128xf32>
    %167 = arith.addf %163, %166 : vector<16x16x128xf32>
    %168 = arith.addf %88, %167 : vector<16x16x128xf32>
    %169 = vector.shape_cast %168 : vector<16x16x128xf32> to vector<256x128xf32>
    %170 = arith.truncf %169 : vector<256x128xf32> to vector<256x128xbf16>
    %c0_118 = arith.constant 0 : index
    %c0_119 = arith.constant 0 : index
    %171 = vector.load %arg12[%c0_118, %c0_119] : memref<128x32xbf16, #tpu.memory_space<vmem>>, vector<128x32xbf16>
    %cst_120 = arith.constant dense<0.000000e+00> : vector<256x32xf32>
    %172 = tpu.matmul %170, %171, %cst_120 {dimension_numbers = #tpu.dot_dimension_numbers<[1], [0], [0], [1], [0, 0, 1, 1], [], []>} : vector<256x128xbf16>, vector<128x32xbf16>, vector<256x32xf32> -> vector<256x32xf32>
    %c0_121 = arith.constant 0 : index
    %c0_122 = arith.constant 0 : index
    %173 = vector.load %arg13[%c0_121, %c0_122] : memref<1x32xf32, #tpu.memory_space<vmem>>, vector<1x32xf32>
    %174 = vector.broadcast %173 : vector<1x32xf32> to vector<256x32xf32>
    %175 = arith.addf %172, %174 : vector<256x32xf32>
    %c0_123 = arith.constant 0 : index
    %c0_124 = arith.constant 0 : index
    %c0_125 = arith.constant 0 : index
    %176 = vector.load %arg14[%c0_123, %c0_124, %c0_125] : memref<1x256x32xf32, #tpu.memory_space<vmem>>, vector<1x256x32xf32>
    %177 = vector.shape_cast %176 : vector<1x256x32xf32> to vector<256x32xf32>
    %178 = vector.shape_cast %175 : vector<256x32xf32> to vector<1x256x32xf32>
    tpu.vector_store %arg14[%c0_123, %c0_124, %c0_125], %178 {strides = array<i32>} : memref<1x256x32xf32, #tpu.memory_space<vmem>>, vector<1x256x32xf32>,
    return
  }
  func.func @transform_0(%arg0: i32) -> (i32, i32, i32) {
    %c0_i32 = arith.constant 0 : i32
    %c0_i32_0 = arith.constant 0 : i32
    %c0_i32_1 = arith.constant 0 : i32
    return %arg0, %c0_i32, %c0_i32_0 : i32, i32, i32
  }
  func.func @transform_1(%arg0: i32) -> (i32, i32) {
    %c0_i32 = arith.constant 0 : i32
    %c0_i32_0 = arith.constant 0 : i32
    %c0_i32_1 = arith.constant 0 : i32
    return %c0_i32, %c0_i32_0 : i32, i32
  }
  func.func @transform_2(%arg0: i32) -> (i32, i32) {
    %c0_i32 = arith.constant 0 : i32
    %c0_i32_0 = arith.constant 0 : i32
    %c0_i32_1 = arith.constant 0 : i32
    return %c0_i32, %c0_i32_0 : i32, i32
  }
  func.func @transform_3(%arg0: i32) -> (i32, i32) {
    %c0_i32 = arith.constant 0 : i32
    %c0_i32_0 = arith.constant 0 : i32
    %c0_i32_1 = arith.constant 0 : i32
    return %c0_i32, %c0_i32_0 : i32, i32
  }
  func.func @transform_4(%arg0: i32) -> (i32, i32) {
    %c0_i32 = arith.constant 0 : i32
    %c0_i32_0 = arith.constant 0 : i32
    %c0_i32_1 = arith.constant 0 : i32
    return %c0_i32, %c0_i32_0 : i32, i32
  }
  func.func @transform_5(%arg0: i32) -> (i32, i32) {
    %c0_i32 = arith.constant 0 : i32
    %c0_i32_0 = arith.constant 0 : i32
    %c0_i32_1 = arith.constant 0 : i32
    return %c0_i32, %c0_i32_0 : i32, i32
  }
  func.func @transform_6(%arg0: i32) -> (i32, i32) {
    %c0_i32 = arith.constant 0 : i32
    %c0_i32_0 = arith.constant 0 : i32
    %c0_i32_1 = arith.constant 0 : i32
    return %c0_i32, %c0_i32_0 : i32, i32
  }
  func.func @transform_7(%arg0: i32) -> (i32, i32) {
    %c0_i32 = arith.constant 0 : i32
    %c0_i32_0 = arith.constant 0 : i32
    %c0_i32_1 = arith.constant 0 : i32
    return %c0_i32, %c0_i32_0 : i32, i32
  }
  func.func @transform_8(%arg0: i32) -> (i32, i32) {
    %c0_i32 = arith.constant 0 : i32
    %c0_i32_0 = arith.constant 0 : i32
    %c0_i32_1 = arith.constant 0 : i32
    return %c0_i32, %c0_i32_0 : i32, i32
  }
  func.func @transform_9(%arg0: i32) -> (i32, i32) {
    %c0_i32 = arith.constant 0 : i32
    %c0_i32_0 = arith.constant 0 : i32
    %c0_i32_1 = arith.constant 0 : i32
    return %c0_i32, %c0_i32_0 : i32, i32
  }
  func.func @transform_10(%arg0: i32) -> (i32, i32) {
    %c0_i32 = arith.constant 0 : i32
    %c0_i32_0 = arith.constant 0 : i32
    %c0_i32_1 = arith.constant 0 : i32
    return %c0_i32, %c0_i32_0 : i32, i32
  }
  func.func @transform_11(%arg0: i32) -> (i32, i32) {
    %c0_i32 = arith.constant 0 : i32
    %c0_i32_0 = arith.constant 0 : i32
    %c0_i32_1 = arith.constant 0 : i32
    return %c0_i32, %c0_i32_0 : i32, i32
  }
  func.func @transform_12(%arg0: i32) -> (i32, i32) {
    %c0_i32 = arith.constant 0 : i32
    %c0_i32_0 = arith.constant 0 : i32
    %c0_i32_1 = arith.constant 0 : i32
    return %c0_i32, %c0_i32_0 : i32, i32
  }
  func.func @transform_13(%arg0: i32) -> (i32, i32, i32) {
    %c0_i32 = arith.constant 0 : i32
    %c0_i32_0 = arith.constant 0 : i32
    %c0_i32_1 = arith.constant 0 : i32
    return %arg0, %c0_i32, %c0_i32_0 : i32, i32, i32
  }
}

</mosaic_0001>

<llo_original>
// kernel: tpu_custom_call.1
$region0: #{tpu_custom_call.1}
  #allocation0 [shape = 'u32[]', space=smem, size = 0x4, offset = 0x4, fixed_abs, tag = 'smem constant byte address 0x4 - core index']
  #allocation1 [shape = 'u32[144,128]{1,0:T(1,128)}', space=vmem, size = 0x12000, scoped, tag = 'internal scratch']
  #allocation2 [shape = 'f32[18,18,128]{2,1,0:T(8,128)}', space=vmem, size = 0x36000, scoped, tag = 'scratch operand']
  %s0 = inlined_call_operand.vmem [shape: bf16[2,256,32], index: 0, kind: input, shape index: {}]
  %s1 = inlined_call_operand.vmem [shape: bf16[32,128], index: 1, kind: input, shape index: {}]
  %s2 = inlined_call_operand.vmem [shape: f32[1,128], index: 2, kind: input, shape index: {}]
  %s3 = inlined_call_operand.vmem [shape: f32[9,128], index: 3, kind: input, shape index: {}]
  %s4 = inlined_call_operand.vmem [shape: f32[1,128], index: 4, kind: input, shape index: {}]
  %s5 = inlined_call_operand.vmem [shape: f32[1,128], index: 5, kind: input, shape index: {}]
  %s6 = inlined_call_operand.vmem [shape: f32[1,128], index: 6, kind: input, shape index: {}]
  %s7 = inlined_call_operand.vmem [shape: f32[9,128], index: 7, kind: input, shape index: {}]
  %s8 = inlined_call_operand.vmem [shape: f32[1,128], index: 8, kind: input, shape index: {}]
  %s9 = inlined_call_operand.vmem [shape: f32[1,128], index: 9, kind: input, shape index: {}]
  %s10 = inlined_call_operand.vmem [shape: f32[1,128], index: 10, kind: input, shape index: {}]
  %s11 = inlined_call_operand.vmem [shape: bf16[128,32], index: 11, kind: input, shape index: {}]
  %s12 = inlined_call_operand.vmem [shape: f32[1,32], index: 12, kind: input, shape index: {}]
  %s13 = inlined_call_operand.vmem [shape: f32[2,256,32], index: 13, kind: output, shape index: {}]
  %s14 = sld [smem:[#allocation0]]
  $region85: #{tpu_custom_call.1} parent=0
    _
  %s16 = ssub.s32 1, %s14
  %s17 = scalar_select 0, %s16, %s14
  loop: start=0, step=1, limit=4
  $region2: #{tpu_custom_call.1} parent=0 // loop_pre_header
    _
  $region3: #{tpu_custom_call.1} parent=0 // loop_header
    %s19 = sphi 0, %s23
    %p20 = scmp.ge.s32.totalorder %s19, 4
    %s29 = sphi 0, %s31
    %s32 = sphi 0, %s29
    %s33 = sphi 0, %s32
    %s49 = sphi 0, %s33
    %s53 = sphi 0, %s53
    %s55 = sphi 0, %s53
    %s56 = sphi 0, %s55
    %s70 = sphi 0, %s56
    %s74 = sphi 0, %s74
    %s76 = sphi 0, %s74
    %s77 = sphi 0, %s76
    %s91 = sphi 0, %s77
    %s95 = sphi 0, %s95
    %s97 = sphi 0, %s95
    %s98 = sphi 0, %s97
    %s112 = sphi 0, %s98
    %s116 = sphi 0, %s116
    %s118 = sphi 0, %s116
    %s119 = sphi 0, %s118
    %s133 = sphi 0, %s119
    %s137 = sphi 0, %s137
    %s139 = sphi 0, %s137
    %s140 = sphi 0, %s139
    %s154 = sphi 0, %s140
    %s158 = sphi 0, %s158
    %s160 = sphi 0, %s158
    %s161 = sphi 0, %s160
    %s175 = sphi 0, %s161
    %s179 = sphi 0, %s179
    %s181 = sphi 0, %s179
    %s182 = sphi 0, %s181
    %s196 = sphi 0, %s182
    %s200 = sphi 0, %s200
    %s202 = sphi 0, %s200
    %s203 = sphi 0, %s202
    %s217 = sphi 0, %s203
    %s221 = sphi 0, %s221
    %s223 = sphi 0, %s221
    %s224 = sphi 0, %s223
    %s238 = sphi 0, %s224
    %s242 = sphi 0, %s242
    %s244 = sphi 0, %s242
    %s245 = sphi 0, %s244
    %s259 = sphi 0, %s245
    %s263 = sphi 0, %s263
    %s265 = sphi 0, %s263
    %s266 = sphi 0, %s265
    %s280 = sphi 0, %s266
    %s284 = sphi 0, %s284
    %s286 = sphi 0, %s284
    %s287 = sphi 0, %s286
    %s301 = sphi 0, %s287
    %s307 = sphi 0, %s309
    %s310 = sphi 0, %s307
    %s311 = sphi 0, %s310
    %s327 = sphi 0, %s311
  $region4: #{tpu_custom_call.1} parent=0 // loop_header_branch
    %22 = sbr.rel (%p20) target = $region8
  $region5: #{tpu_custom_call.1} parent=0 // loop_body
    %s24 = ssub.s32 %s19, 1
    %s25 = ssub.s32 %s19, 2
    %s26 = sadd.s32 %s19, 1
    %s27 = ssub.s32 %s19, %s26
    %p28 = scmp.eq.s32.totalorder %s27, 0
    %s30 = sadd.s32 %s29, 1
    %s31 = scalar_select %p28, %s29, %s30
    %p34 = pneg %p28
    %p35 = scmp.eq.s32.totalorder %s19, 1
    %p36 = por %p34, %p35
    %p37 = scmp.ne.s32.totalorder %s29, %s32
    %p38 = scmp.eq.s32.totalorder %s19, 0
    %p39 = por %p37, %p38
    %p40 = scmp.ne.s32.totalorder %s29, %s32
    %p41 = scmp.eq.s32.totalorder %s24, 1
    %p42 = por %p40, %p41
    %p43 = scmp.ne.s32.totalorder %s32, %s33
    %p44 = scmp.eq.s32.totalorder %s24, 0
    %p45 = por %p43, %p44
    %p46 = scmp.ne.s32.totalorder %s32, %s33
    %p47 = scmp.eq.s32.totalorder %s25, 1
    %p48 = por %p46, %p47
    %p50 = scmp.ne.s32.totalorder %s33, %s49
    %p51 = scmp.eq.s32.totalorder %s25, 0
    %p52 = por %p50, %p51
    %s54 = sadd.s32 %s53, 1
    %p57 = scmp.eq.s32.totalorder %s19, 1
    %p58 = scmp.ne.s32.totalorder %s53, %s55
    %p59 = scmp.eq.s32.totalorder %s19, 0
    %p60 = por %p58, %p59
    %p61 = scmp.ne.s32.totalorder %s53, %s55
    %p62 = scmp.eq.s32.totalorder %s24, 1
    %p63 = por %p61, %p62
    %p64 = scmp.ne.s32.totalorder %s55, %s56
    %p65 = scmp.eq.s32.totalorder %s24, 0
    %p66 = por %p64, %p65
    %p67 = scmp.ne.s32.totalorder %s55, %s56
    %p68 = scmp.eq.s32.totalorder %s25, 1
    %p69 = por %p67, %p68
    %p71 = scmp.ne.s32.totalorder %s56, %s70
    %p72 = scmp.eq.s32.totalorder %s25, 0
    %p73 = por %p71, %p72
    %s75 = sadd.s32 %s74, 1
    %p78 = scmp.eq.s32.totalorder %s19, 1
    %p79 = scmp.ne.s32.totalorder %s74, %s76
    %p80 = scmp.eq.s32.totalorder %s19, 0
    %p81 = por %p79, %p80
    %p82 = scmp.ne.s32.totalorder %s74, %s76
    %p83 = scmp.eq.s32.totalorder %s24, 1
    %p84 = por %p82, %p83
    %p85 = scmp.ne.s32.totalorder %s76, %s77
    %p86 = scmp.eq.s32.totalorder %s24, 0
    %p87 = por %p85, %p86
    %p88 = scmp.ne.s32.totalorder %s76, %s77
    %p89 = scmp.eq.s32.totalorder %s25, 1
    %p90 = por %p88, %p89
    %p92 = scmp.ne.s32.totalorder %s77, %s91
    %p93 = scmp.eq.s32.totalorder %s25, 0
    %p94 = por %p92, %p93
    %s96 = sadd.s32 %s95, 1
    %p99 = scmp.eq.s32.totalorder %s19, 1
    %p100 = scmp.ne.s32.totalorder %s95, %s97
    %p101 = scmp.eq.s32.totalorder %s19, 0
    %p102 = por %p100, %p101
    %p103 = scmp.ne.s32.totalorder %s95, %s97
    %p104 = scmp.eq.s32.totalorder %s24, 1
    %p105 = por %p103, %p104
    %p106 = scmp.ne.s32.totalorder %s97, %s98
    %p107 = scmp.eq.s32.totalorder %s24, 0
    %p108 = por %p106, %p107
    %p109 = scmp.ne.s32.totalorder %s97, %s98
    %p110 = scmp.eq.s32.totalorder %s25, 1
    %p111 = por %p109, %p110
    %p113 = scmp.ne.s32.totalorder %s98, %s112
    %p114 = scmp.eq.s32.totalorder %s25, 0
    %p115 = por %p113, %p114
    %s117 = sadd.s32 %s116, 1
    %p120 = scmp.eq.s32.totalorder %s19, 1
    %p121 = scmp.ne.s32.totalorder %s116, %s118
    %p122 = scmp.eq.s32.totalorder %s19, 0
    %p123 = por %p121, %p122
    %p124 = scmp.ne.s32.totalorder %s116, %s118
    %p125 = scmp.eq.s32.totalorder %s24, 1
    %p126 = por %p124, %p125
    %p127 = scmp.ne.s32.totalorder %s118, %s119
    %p128 = scmp.eq.s32.totalorder %s24, 0
    %p129 = por %p127, %p128
    %p130 = scmp.ne.s32.totalorder %s118, %s119
    %p131 = scmp.eq.s32.totalorder %s25, 1
    %p132 = por %p130, %p131
    %p134 = scmp.ne.s32.totalorder %s119, %s133
    %p135 = scmp.eq.s32.totalorder %s25, 0
    %p136 = por %p134, %p135
    %s138 = sadd.s32 %s137, 1
    %p141 = scmp.eq.s32.totalorder %s19, 1
    %p142 = scmp.ne.s32.totalorder %s137, %s139
    %p143 = scmp.eq.s32.totalorder %s19, 0
    %p144 = por %p142, %p143
    %p145 = scmp.ne.s32.totalorder %s137, %s139
    %p146 = scmp.eq.s32.totalorder %s24, 1
    %p147 = por %p145, %p146
    %p148 = scmp.ne.s32.totalorder %s139, %s140
    %p149 = scmp.eq.s32.totalorder %s24, 0
    %p150 = por %p148, %p149
    %p151 = scmp.ne.s32.totalorder %s139, %s140
    %p152 = scmp.eq.s32.totalorder %s25, 1
    %p153 = por %p151, %p152
    %p155 = scmp.ne.s32.totalorder %s140, %s154
    %p156 = scmp.eq.s32.totalorder %s25, 0
    %p157 = por %p155, %p156
    %s159 = sadd.s32 %s158, 1
    %p162 = scmp.eq.s32.totalorder %s19, 1
    %p163 = scmp.ne.s32.totalorder %s158, %s160
    %p164 = scmp.eq.s32.totalorder %s19, 0
    %p165 = por %p163, %p164
    %p166 = scmp.ne.s32.totalorder %s158, %s160
    %p167 = scmp.eq.s32.totalorder %s24, 1
    %p168 = por %p166, %p167
    %p169 = scmp.ne.s32.totalorder %s160, %s161
    %p170 = scmp.eq.s32.totalorder %s24, 0
    %p171 = por %p169, %p170
    %p172 = scmp.ne.s32.totalorder %s160, %s161
    %p173 = scmp.eq.s32.totalorder %s25, 1
    %p174 = por %p172, %p173
    %p176 = scmp.ne.s32.totalorder %s161, %s175
    %p177 = scmp.eq.s32.totalorder %s25, 0
    %p178 = por %p176, %p177
    %s180 = sadd.s32 %s179, 1
    %p183 = scmp.eq.s32.totalorder %s19, 1
    %p184 = scmp.ne.s32.totalorder %s179, %s181
    %p185 = scmp.eq.s32.totalorder %s19, 0
    %p186 = por %p184, %p185
    %p187 = scmp.ne.s32.totalorder %s179, %s181
    %p188 = scmp.eq.s32.totalorder %s24, 1
    %p189 = por %p187, %p188
    %p190 = scmp.ne.s32.totalorder %s181, %s182
    %p191 = scmp.eq.s32.totalorder %s24, 0
    %p192 = por %p190, %p191
    %p193 = scmp.ne.s32.totalorder %s181, %s182
    %p194 = scmp.eq.s32.totalorder %s25, 1
    %p195 = por %p193, %p194
    %p197 = scmp.ne.s32.totalorder %s182, %s196
    %p198 = scmp.eq.s32.totalorder %s25, 0
    %p199 = por %p197, %p198
    %s201 = sadd.s32 %s200, 1
    %p204 = scmp.eq.s32.totalorder %s19, 1
    %p205 = scmp.ne.s32.totalorder %s200, %s202
    %p206 = scmp.eq.s32.totalorder %s19, 0
    %p207 = por %p205, %p206
    %p208 = scmp.ne.s32.totalorder %s200, %s202
    %p209 = scmp.eq.s32.totalorder %s24, 1
    %p210 = por %p208, %p209
    %p211 = scmp.ne.s32.totalorder %s202, %s203
    %p212 = scmp.eq.s32.totalorder %s24, 0
    %p213 = por %p211, %p212
    %p214 = scmp.ne.s32.totalorder %s202, %s203
    %p215 = scmp.eq.s32.totalorder %s25, 1
    %p216 = por %p214, %p215
    %p218 = scmp.ne.s32.totalorder %s203, %s217
    %p219 = scmp.eq.s32.totalorder %s25, 0
    %p220 = por %p218, %p219
    %s222 = sadd.s32 %s221, 1
    %p225 = scmp.eq.s32.totalorder %s19, 1
    %p226 = scmp.ne.s32.totalorder %s221, %s223
    %p227 = scmp.eq.s32.totalorder %s19, 0
    %p228 = por %p226, %p227
    %p229 = scmp.ne.s32.totalorder %s221, %s223
    %p230 = scmp.eq.s32.totalorder %s24, 1
    %p231 = por %p229, %p230
    %p232 = scmp.ne.s32.totalorder %s223, %s224
    %p233 = scmp.eq.s32.totalorder %s24, 0
    %p234 = por %p232, %p233
    %p235 = scmp.ne.s32.totalorder %s223, %s224
    %p236 = scmp.eq.s32.totalorder %s25, 1
    %p237 = por %p235, %p236
    %p239 = scmp.ne.s32.totalorder %s224, %s238
    %p240 = scmp.eq.s32.totalorder %s25, 0
    %p241 = por %p239, %p240
    %s243 = sadd.s32 %s242, 1
    %p246 = scmp.eq.s32.totalorder %s19, 1
    %p247 = scmp.ne.s32.totalorder %s242, %s244
    %p248 = scmp.eq.s32.totalorder %s19, 0
    %p249 = por %p247, %p248
    %p250 = scmp.ne.s32.totalorder %s242, %s244
    %p251 = scmp.eq.s32.totalorder %s24, 1
    %p252 = por %p250, %p251
    %p253 = scmp.ne.s32.totalorder %s244, %s245
    %p254 = scmp.eq.s32.totalorder %s24, 0
    %p255 = por %p253, %p254
    %p256 = scmp.ne.s32.totalorder %s244, %s245
    %p257 = scmp.eq.s32.totalorder %s25, 1
    %p258 = por %p256, %p257
    %p260 = scmp.ne.s32.totalorder %s245, %s259
    %p261 = scmp.eq.s32.totalorder %s25, 0
    %p262 = por %p260, %p261
    %s264 = sadd.s32 %s263, 1
    %p267 = scmp.eq.s32.totalorder %s19, 1
    %p268 = scmp.ne.s32.totalorder %s263, %s265
    %p269 = scmp.eq.s32.totalorder %s19, 0
    %p270 = por %p268, %p269
    %p271 = scmp.ne.s32.totalorder %s263, %s265
    %p272 = scmp.eq.s32.totalorder %s24, 1
    %p273 = por %p271, %p272
    %p274 = scmp.ne.s32.totalorder %s265, %s266
    %p275 = scmp.eq.s32.totalorder %s24, 0
    %p276 = por %p274, %p275
    %p277 = scmp.ne.s32.totalorder %s265, %s266
    %p278 = scmp.eq.s32.totalorder %s25, 1
    %p279 = por %p277, %p278
    %p281 = scmp.ne.s32.totalorder %s266, %s280
    %p282 = scmp.eq.s32.totalorder %s25, 0
    %p283 = por %p281, %p282
    %s285 = sadd.s32 %s284, 1
    %p288 = scmp.eq.s32.totalorder %s19, 1
    %p289 = scmp.ne.s32.totalorder %s284, %s286
    %p290 = scmp.eq.s32.totalorder %s19, 0
    %p291 = por %p289, %p290
    %p292 = scmp.ne.s32.totalorder %s284, %s286
    %p293 = scmp.eq.s32.totalorder %s24, 1
    %p294 = por %p292, %p293
    %p295 = scmp.ne.s32.totalorder %s286, %s287
    %p296 = scmp.eq.s32.totalorder %s24, 0
    %p297 = por %p295, %p296
    %p298 = scmp.ne.s32.totalorder %s286, %s287
    %p299 = scmp.eq.s32.totalorder %s25, 1
    %p300 = por %p298, %p299
    %p302 = scmp.ne.s32.totalorder %s287, %s301
    %p303 = scmp.eq.s32.totalorder %s25, 0
    %p304 = por %p302, %p303
    %s305 = ssub.s32 %s19, %s26
    %p306 = scmp.eq.s32.totalorder %s305, 0
    %s308 = sadd.s32 %s307, 1
    %s309 = scalar_select %p306, %s307, %s308
    %p312 = pneg %p306
    %p313 = scmp.eq.s32.totalorder %s19, 1
    %p314 = por %p312, %p313
    %p315 = scmp.ne.s32.totalorder %s307, %s310
    %p316 = scmp.eq.s32.totalorder %s19, 0
    %p317 = por %p315, %p316
    %p318 = scmp.ne.s32.totalorder %s307, %s310
    %p319 = scmp.eq.s32.totalorder %s24, 1
    %p320 = por %p318, %p319
    %p321 = scmp.ne.s32.totalorder %s310, %s311
    %p322 = scmp.eq.s32.totalorder %s24, 0
    %p323 = por %p321, %p322
    %p324 = scmp.ne.s32.totalorder %s310, %s311
    %p325 = scmp.eq.s32.totalorder %s25, 1
    %p326 = por %p324, %p325
    %p328 = scmp.ne.s32.totalorder %s311, %s327
    %p329 = scmp.eq.s32.totalorder %s25, 0
    %p330 = por %p328, %p329
    %p331 = scmp.le.s32.totalorder 1, %s19
    %p332 = scmp.lt.s32.totalorder %s19, 3
    %p333 = pnand %p331, %p332
    %p334 = pneg %p333
    // Predicated region
    $region9: #{tpu_custom_call.1} parent=5 // pred_check
      _
    $region10: #{tpu_custom_call.1} parent=5 // pred_check_branch
      %336 = sbr.rel (%p333) target = $region12
    $region11: #{tpu_custom_call.1} parent=5 // pred_region
      %s337 = ssub.s32 %s19, 1
      // Predicated region
      $region13: #{tpu_custom_call.1} parent=11 // pred_check
        %p338 = pneg %p66
      $region14: #{tpu_custom_call.1} parent=11 // pred_check_branch
        %340 = sbr.rel (%p338) target = $region16
      $region15: #{tpu_custom_call.1} parent=11 // pred_region
        _
      $region16: #{tpu_custom_call.1} parent=11 // pred_fallthru
        _
      // Predicated region
      $region17: #{tpu_custom_call.1} parent=11 // pred_check
        %p341 = pneg %p87
      $region18: #{tpu_custom_call.1} parent=11 // pred_check_branch
        %343 = sbr.rel (%p341) target = $region20
      $region19: #{tpu_custom_call.1} parent=11 // pred_region
        _
      $region20: #{tpu_custom_call.1} parent=11 // pred_fallthru
        _
      // Predicated region
      $region21: #{tpu_custom_call.1} parent=11 // pred_check
        %p344 = pneg %p108
      $region22: #{tpu_custom_call.1} parent=11 // pred_check_branch
        %346 = sbr.rel (%p344) target = $region24
      $region23: #{tpu_custom_call.1} parent=11 // pred_region
        _
      $region24: #{tpu_custom_call.1} parent=11 // pred_fallthru
        _
      // Predicated region
      $region25: #{tpu_custom_call.1} parent=11 // pred_check
        %p347 = pneg %p129
      $region26: #{tpu_custom_call.1} parent=11 // pred_check_branch
        %349 = sbr.rel (%p347) target = $region28
      $region27: #{tpu_custom_call.1} parent=11 // pred_region
        _
      $region28: #{tpu_custom_call.1} parent=11 // pred_fallthru
        _
      // Predicated region
      $region29: #{tpu_custom_call.1} parent=11 // pred_check
        %p350 = pneg %p150
      $region30: #{tpu_custom_call.1} parent=11 // pred_check_branch
        %352 = sbr.rel (%p350) target = $region32
      $region31: #{tpu_custom_call.1} parent=11 // pred_region
        _
      $region32: #{tpu_custom_call.1} parent=11 // pred_fallthru
        _
      // Predicated region
      $region33: #{tpu_custom_call.1} parent=11 // pred_check
        %p353 = pneg %p171
      $region34: #{tpu_custom_call.1} parent=11 // pred_check_branch
        %355 = sbr.rel (%p353) target = $region36
      $region35: #{tpu_custom_call.1} parent=11 // pred_region
        _
      $region36: #{tpu_custom_call.1} parent=11 // pred_fallthru
        _
      // Predicated region
      $region37: #{tpu_custom_call.1} parent=11 // pred_check
        %p356 = pneg %p192
      $region38: #{tpu_custom_call.1} parent=11 // pred_check_branch
        %358 = sbr.rel (%p356) target = $region40
      $region39: #{tpu_custom_call.1} parent=11 // pred_region
        _
      $region40: #{tpu_custom_call.1} parent=11 // pred_fallthru
        _
      // Predicated region
      $region41: #{tpu_custom_call.1} parent=11 // pred_check
        %p359 = pneg %p213
      $region42: #{tpu_custom_call.1} parent=11 // pred_check_branch
        %361 = sbr.rel (%p359) target = $region44
      $region43: #{tpu_custom_call.1} parent=11 // pred_region
        _
      $region44: #{tpu_custom_call.1} parent=11 // pred_fallthru
        _
      // Predicated region
      $region45: #{tpu_custom_call.1} parent=11 // pred_check
        %p362 = pneg %p234
      $region46: #{tpu_custom_call.1} parent=11 // pred_check_branch
        %364 = sbr.rel (%p362) target = $region48
      $region47: #{tpu_custom_call.1} parent=11 // pred_region
        _
      $region48: #{tpu_custom_call.1} parent=11 // pred_fallthru
        _
      // Predicated region
      $region49: #{tpu_custom_call.1} parent=11 // pred_check
        %p365 = pneg %p255
      $region50: #{tpu_custom_call.1} parent=11 // pred_check_branch
        %367 = sbr.rel (%p365) target = $region52
      $region51: #{tpu_custom_call.1} parent=11 // pred_region
        _
      $region52: #{tpu_custom_call.1} parent=11 // pred_fallthru
        _
      // Predicated region
      $region53: #{tpu_custom_call.1} parent=11 // pred_check
        %p368 = pneg %p276
      $region54: #{tpu_custom_call.1} parent=11 // pred_check_branch
        %370 = sbr.rel (%p368) target = $region56
      $region55: #{tpu_custom_call.1} parent=11 // pred_region
        _
      $region56: #{tpu_custom_call.1} parent=11 // pred_fallthru
        _
      // Predicated region
      $region57: #{tpu_custom_call.1} parent=11 // pred_check
        %p371 = pneg %p297
      $region58: #{tpu_custom_call.1} parent=11 // pred_check_branch
        %373 = sbr.rel (%p371) target = $region60
      $region59: #{tpu_custom_call.1} parent=11 // pred_region
        _
      $region60: #{tpu_custom_call.1} parent=11 // pred_fallthru
        _
    $region12: #{tpu_custom_call.1} parent=5 // pred_fallthru
      _
    %p374 = scmp.lt.s32.totalorder %s19, 2
    // Predicated region
    $region61: #{tpu_custom_call.1} parent=5 // pred_check
      %p375 = pneg %p374
    $region62: #{tpu_custom_call.1} parent=5 // pred_check_branch
      %377 = sbr.rel (%p375) target = $region64
    $region63: #{tpu_custom_call.1} parent=5 // pred_region
      // Predicated region
      $region65: #{tpu_custom_call.1} parent=63 // pred_check
        %p378 = pneg %p39
      $region66: #{tpu_custom_call.1} parent=63 // pred_check_branch
        %380 = sbr.rel (%p378) target = $region68
      $region67: #{tpu_custom_call.1} parent=63 // pred_region
        %p381 = scmp.lt.s32.totalorder %s19, 1
        %s382 = scalar_select %p381, %s19, 1
        %s383 = smul.addr %s382, 32
        %s384 = smul.addr %s383, 4
        %s385 = scalar_lea.vmem %s0, %s384
      $region68: #{tpu_custom_call.1} parent=63 // pred_fallthru
        _
    $region64: #{tpu_custom_call.1} parent=5 // pred_fallthru
      _
    %p386 = scmp.le.s32.totalorder 1, %s19
    %p387 = scmp.lt.s32.totalorder %s19, 3
    %p388 = pnand %p386, %p387
    %p389 = pneg %p388
    // Predicated region
    $region69: #{tpu_custom_call.1} parent=5 // pred_check
      _
    $region70: #{tpu_custom_call.1} parent=5 // pred_check_branch
      %391 = sbr.rel (%p388) target = $region72
    $region71: #{tpu_custom_call.1} parent=5 // pred_region
      %s392 = ssub.s32 %s19, 1
      %p393 = scmp.lt.s32.totalorder %s24, 1
      %s394 = scalar_select %p393, %s24, 1
      %s395 = smul.addr %s394, 32
      %s396 = smul.addr %s395, 4
      %s397 = scalar_lea.vmem %s0, %s396
      %p398 = pneg %p45
      %p399 = pneg %p42
      %p400 = pneg %p66
      %p401 = pneg %p63
      %p402 = pneg %p87
      %p403 = pneg %p84
      %p404 = pneg %p108
      %p405 = pneg %p105
      %p406 = pneg %p129
      %p407 = pneg %p126
      %p408 = pneg %p150
      %p409 = pneg %p147
      %p410 = pneg %p171
      %p411 = pneg %p168
      %p412 = pneg %p192
      %p413 = pneg %p189
      %p414 = pneg %p213
      %p415 = pneg %p210
      %p416 = pneg %p234
      %p417 = pneg %p231
      %p418 = pneg %p255
      %p419 = pneg %p252
      %p420 = pneg %p276
      %p421 = pneg %p273
      %p422 = pneg %p297
      %p423 = pneg %p294
      %p424 = pneg %p323
      %p425 = pneg %p320
      %p426 = scmp.lt.s32.totalorder %s24, 1
      %s427 = scalar_select %p426, %s24, 1
      %s428 = smul.addr %s427, 32
      %s429 = smul.addr %s428, 8
      %s430 = scalar_lea.vmem %s13, %s429
      %p431 = scmp.lt.s32.totalorder %s24, 1
      %s432 = scalar_select %p431, %s24, 1
      %s433 = smul.addr %s432, 32
      %s434 = smul.addr %s433, 4
      %s435 = scalar_lea.vmem %s0, %s434
      %p436 = scmp.lt.s32.totalorder %s24, 1
      %s437 = scalar_select %p436, %s24, 1
      %s438 = smul.addr %s437, 32
      %s439 = smul.addr %s438, 8
      %s440 = scalar_lea.vmem %s13, %s439
      %v442 = vld [vmem:[%s435] sm:$0xf]
      %v443 = vld [vmem:[%s435 + $0x4] sm:$0xf]
      %v444 = vld [vmem:[%s435 + $0x8] sm:$0xf]
      %v445 = vld [vmem:[%s435 + $0xc] sm:$0xf]
      %v446 = vld [vmem:[%s435 + $0x10] sm:$0xf]
      %v447 = vld [vmem:[%s435 + $0x14] sm:$0xf]
      %v448 = vld [vmem:[%s435 + $0x18] sm:$0xf]
      %v449 = vld [vmem:[%s435 + $0x1c] sm:$0xf]
      %v450 = vld [vmem:[%s435 + $0x20] sm:$0xf]
      %v451 = vld [vmem:[%s435 + $0x24] sm:$0xf]
      %v452 = vld [vmem:[%s435 + $0x28] sm:$0xf]
      %v453 = vld [vmem:[%s435 + $0x2c] sm:$0xf]
      %v454 = vld [vmem:[%s435 + $0x30] sm:$0xf]
      %v455 = vld [vmem:[%s435 + $0x34] sm:$0xf]
      %v456 = vld [vmem:[%s435 + $0x38] sm:$0xf]
      %v457 = vld [vmem:[%s435 + $0x3c] sm:$0xf]
      %v458 = vld [vmem:[%s435 + $0x40] sm:$0xf]
      %v459 = vld [vmem:[%s435 + $0x44] sm:$0xf]
      %v460 = vld [vmem:[%s435 + $0x48] sm:$0xf]
      %v461 = vld [vmem:[%s435 + $0x4c] sm:$0xf]
      %v462 = vld [vmem:[%s435 + $0x50] sm:$0xf]
      %v463 = vld [vmem:[%s435 + $0x54] sm:$0xf]
      %v464 = vld [vmem:[%s435 + $0x58] sm:$0xf]
      %v465 = vld [vmem:[%s435 + $0x5c] sm:$0xf]
      %v466 = vld [vmem:[%s435 + $0x60] sm:$0xf]
      %v467 = vld [vmem:[%s435 + $0x64] sm:$0xf]
      %v468 = vld [vmem:[%s435 + $0x68] sm:$0xf]
      %v469 = vld [vmem:[%s435 + $0x6c] sm:$0xf]
      %v470 = vld [vmem:[%s435 + $0x70] sm:$0xf]
      %v471 = vld [vmem:[%s435 + $0x74] sm:$0xf]
      %v472 = vld [vmem:[%s435 + $0x78] sm:$0xf]
      %v473 = vld [vmem:[%s435 + $0x7c] sm:$0xf]
      %v474 = vld [vmem:[%s1] sm:$0xf]
      %v475 = vld [vmem:[%s1 + $0x4] sm:$0xf]
      %v476 = vld [vmem:[%s1 + $0x8] sm:$0xf]
      %v477 = vld [vmem:[%s1 + $0xc] sm:$0xf]
      %v478 = vld [vmem:[%s2] sm:$0x1]
      %v480 = vlaneseq
      %v481 = vshrl.u32 %v480, 7
      %v482 = vsub.s32 0, %v481
      %v483 = vrot.slane %v478, %v482
      %v517 = vunpack.c.l.b16 %v442
      %v518 = vunpack.c.l.b16 %v443
      %v519 = vunpack.c.l.b16 %v444
      %v520 = vunpack.c.l.b16 %v445
      %v521 = vunpack.c.l.b16 %v446
      %v522 = vunpack.c.l.b16 %v447
      %v523 = vunpack.c.l.b16 %v448
      %v524 = vunpack.c.l.b16 %v449
      %v525 = vunpack.c.l.b16 %v450
      %v526 = vunpack.c.l.b16 %v451
      %v527 = vunpack.c.l.b16 %v452
      %v528 = vunpack.c.l.b16 %v453
      %v529 = vunpack.c.l.b16 %v454
      %v530 = vunpack.c.l.b16 %v455
      %v531 = vunpack.c.l.b16 %v456
      %v532 = vunpack.c.l.b16 %v457
      %v533 = vunpack.c.l.b16 %v458
      %v534 = vunpack.c.l.b16 %v459
      %v535 = vunpack.c.l.b16 %v460
      %v536 = vunpack.c.l.b16 %v461
      %v537 = vunpack.c.l.b16 %v462
      %v538 = vunpack.c.l.b16 %v463
      %v539 = vunpack.c.l.b16 %v464
      %v540 = vunpack.c.l.b16 %v465
      %v541 = vunpack.c.l.b16 %v466
      %v542 = vunpack.c.l.b16 %v467
      %v543 = vunpack.c.l.b16 %v468
      %v544 = vunpack.c.l.b16 %v469
      %v545 = vunpack.c.l.b16 %v470
      %v546 = vunpack.c.l.b16 %v471
      %v547 = vunpack.c.l.b16 %v472
      %v548 = vunpack.c.l.b16 %v473
      %v549 = vpack.c.b16 %v518, %v517
      %v550 = vpack.c.b16 %v520, %v519
      %v551 = vpack.c.b16 %v522, %v521
      %v552 = vpack.c.b16 %v524, %v523
      %v553 = vpack.c.b16 %v526, %v525
      %v554 = vpack.c.b16 %v528, %v527
      %v555 = vpack.c.b16 %v530, %v529
      %v556 = vpack.c.b16 %v532, %v531
      %v557 = vpack.c.b16 %v534, %v533
      %v558 = vpack.c.b16 %v536, %v535
      %v559 = vpack.c.b16 %v538, %v537
      %v560 = vpack.c.b16 %v540, %v539
      %v561 = vpack.c.b16 %v542, %v541
      %v562 = vpack.c.b16 %v544, %v543
      %v563 = vpack.c.b16 %v546, %v545
      %v564 = vpack.c.b16 %v548, %v547
      %v569 = vunpack.c.l.b16 %v474
      %v570 = vunpack.c.l.b16 %v475
      %v571 = vunpack.c.l.b16 %v476
      %v572 = vunpack.c.l.b16 %v477
      %v573 = vpack.c.b16 %v570, %v569
      %v574 = vpack.c.b16 %v572, %v571
      %vm577 = vcmask 261120
      %v579 = vsel %vm577, %v549, 0
      %v582 = vsel %vm577, %v550, 0
      %v585 = vsel %vm577, %v551, 0
      %v588 = vsel %vm577, %v552, 0
      %v591 = vsel %vm577, %v553, 0
      %v594 = vsel %vm577, %v554, 0
      %v597 = vsel %vm577, %v555, 0
      %v600 = vsel %vm577, %v556, 0
      %v603 = vsel %vm577, %v557, 0
      %v606 = vsel %vm577, %v558, 0
      %v609 = vsel %vm577, %v559, 0
      %v612 = vsel %vm577, %v560, 0
      %v615 = vsel %vm577, %v561, 0
      %v618 = vsel %vm577, %v562, 0
      %v621 = vsel %vm577, %v563, 0
      %v624 = vsel %vm577, %v564, 0
      %626 = vmatprep.subr.bf16.mxu0 0
      %627 = vmatpush1.bf16.msra.mxu0 %v573
      %628 = vmatprep.subr.bf16.mxu0 0
      %629 = vmatpush1.bf16.msra.mxu0 %v574
      %630 = vmatprep.subr.bf16.mxu0 0
      %631 = vmatpush1.bf16.msra.mxu0 0
      %632 = vmatprep.subr.bf16.mxu0 0
      %633 = vmatpush1.bf16.msra.mxu0 0
      %634 = vmatprep.subr.bf16.mxu0 0
      %635 = vmatpush1.bf16.msra.mxu0 0
      %636 = vmatprep.subr.bf16.mxu0 0
      %637 = vmatpush1.bf16.msra.mxu0 0
      %638 = vmatprep.subr.bf16.mxu0 0
      %639 = vmatpush1.bf16.msra.mxu0 0
      %640 = vmatprep.subr.bf16.mxu0 0
      %641 = vmatpush1.bf16.msra.mxu0 0
      %642 = vmatprep.subr.bf16.mxu0 0
      %643 = vmatpush1.bf16.msra.mxu0 0
      %644 = vmatprep.subr.bf16.mxu0 0
      %645 = vmatpush1.bf16.msra.mxu0 0
      %646 = vmatprep.subr.bf16.mxu0 0
      %647 = vmatpush1.bf16.msra.mxu0 0
      %648 = vmatprep.subr.bf16.mxu0 0
      %649 = vmatpush1.bf16.msra.mxu0 0
      %650 = vmatprep.subr.bf16.mxu0 0
      %651 = vmatpush1.bf16.msra.mxu0 0
      %652 = vmatprep.subr.bf16.mxu0 0
      %653 = vmatpush1.bf16.msra.mxu0 0
      %654 = vmatprep.subr.bf16.mxu0 0
      %655 = vmatpush1.bf16.msra.mxu0 0
      %656 = vmatprep.subr.bf16.mxu0 0
      %657 = vmatpush1.bf16.msra.mxu0 0
      %658 = vmatprep.mubr.bf16.mxu0 0
      %659 = vmatmul.mubr.bf16.gmra.mrb[0].mxu0 %v579
      %v660 = vpop.f32.mrb[0].mxu0
      %v661 = vadd.f32 %v483, %v660
      %v662 = vpop.f32.mrb[0].mxu0
      %v663 = vpop.f32.mrb[0].mxu0
      %v664 = vadd.f32 %v483, %v663
      %v665 = vpop.f32.mrb[0].mxu0
      %666 = vmatprep.mubr.bf16.mxu0 0
      %667 = vmatmul.mubr.bf16.gmra.mrb[0].mxu0 %v582
      %v668 = vpop.f32.mrb[0].mxu0
      %v669 = vadd.f32 %v483, %v668
      %v670 = vpop.f32.mrb[0].mxu0
      %v671 = vpop.f32.mrb[0].mxu0
      %v672 = vadd.f32 %v483, %v671
      %v673 = vpop.f32.mrb[0].mxu0
      %674 = vmatprep.mubr.bf16.mxu0 0
      %675 = vmatmul.mubr.bf16.gmra.mrb[0].mxu0 %v585
      %v676 = vpop.f32.mrb[0].mxu0
      %v677 = vadd.f32 %v483, %v676
      %v678 = vpop.f32.mrb[0].mxu0
      %v679 = vpop.f32.mrb[0].mxu0
      %v680 = vadd.f32 %v483, %v679
      %v681 = vpop.f32.mrb[0].mxu0
      %682 = vmatprep.mubr.bf16.mxu0 0
      %683 = vmatmul.mubr.bf16.gmra.mrb[0].mxu0 %v588
      %v684 = vpop.f32.mrb[0].mxu0
      %v685 = vadd.f32 %v483, %v684
      %v686 = vpop.f32.mrb[0].mxu0
      %v687 = vpop.f32.mrb[0].mxu0
      %v688 = vadd.f32 %v483, %v687
      %v689 = vpop.f32.mrb[0].mxu0
      %690 = vmatprep.mubr.bf16.mxu0 0
      %691 = vmatmul.mubr.bf16.gmra.mrb[0].mxu0 %v591
      %v692 = vpop.f32.mrb[0].mxu0
      %v693 = vadd.f32 %v483, %v692
      %v694 = vpop.f32.mrb[0].mxu0
      %v695 = vpop.f32.mrb[0].mxu0
      %v696 = vadd.f32 %v483, %v695
      %v697 = vpop.f32.mrb[0].mxu0
      %698 = vmatprep.mubr.bf16.mxu0 0
      %699 = vmatmul.mubr.bf16.gmra.mrb[0].mxu0 %v594
      %v700 = vpop.f32.mrb[0].mxu0
      %v701 = vadd.f32 %v483, %v700
      %v702 = vpop.f32.mrb[0].mxu0
      %v703 = vpop.f32.mrb[0].mxu0
      %v704 = vadd.f32 %v483, %v703
      %v705 = vpop.f32.mrb[0].mxu0
      %706 = vmatprep.mubr.bf16.mxu0 0
      %707 = vmatmul.mubr.bf16.gmra.mrb[0].mxu0 %v597
      %v708 = vpop.f32.mrb[0].mxu0
      %v709 = vadd.f32 %v483, %v708
      %v710 = vpop.f32.mrb[0].mxu0
      %v711 = vpop.f32.mrb[0].mxu0
      %v712 = vadd.f32 %v483, %v711
      %v713 = vpop.f32.mrb[0].mxu0
      %714 = vmatprep.mubr.bf16.mxu0 0
      %715 = vmatmul.mubr.bf16.gmra.mrb[0].mxu0 %v600
      %v716 = vpop.f32.mrb[0].mxu0
      %v717 = vadd.f32 %v483, %v716
      %v718 = vpop.f32.mrb[0].mxu0
      %v719 = vpop.f32.mrb[0].mxu0
      %v720 = vadd.f32 %v483, %v719
      %v721 = vpop.f32.mrb[0].mxu0
      %722 = vmatprep.mubr.bf16.mxu0 0
      %723 = vmatmul.mubr.bf16.gmra.mrb[0].mxu0 %v603
      %v724 = vpop.f32.mrb[0].mxu0
      %v725 = vadd.f32 %v483, %v724
      %v726 = vpop.f32.mrb[0].mxu0
      %v727 = vpop.f32.mrb[0].mxu0
      %v728 = vadd.f32 %v483, %v727
      %v729 = vpop.f32.mrb[0].mxu0
      %730 = vmatprep.mubr.bf16.mxu0 0
      %731 = vmatmul.mubr.bf16.gmra.mrb[0].mxu0 %v606
      %v732 = vpop.f32.mrb[0].mxu0
      %v733 = vadd.f32 %v483, %v732
      %v734 = vpop.f32.mrb[0].mxu0
      %v735 = vpop.f32.mrb[0].mxu0
      %v736 = vadd.f32 %v483, %v735
      %v737 = vpop.f32.mrb[0].mxu0
      %738 = vmatprep.mubr.bf16.mxu0 0
      %739 = vmatmul.mubr.bf16.gmra.mrb[0].mxu0 %v609
      %v740 = vpop.f32.mrb[0].mxu0
      %v741 = vadd.f32 %v483, %v740
      %v742 = vpop.f32.mrb[0].mxu0
      %v743 = vpop.f32.mrb[0].mxu0
      %v744 = vadd.f32 %v483, %v743
      %v745 = vpop.f32.mrb[0].mxu0
      %746 = vmatprep.mubr.bf16.mxu0 0
      %747 = vmatmul.mubr.bf16.gmra.mrb[0].mxu0 %v612
      %v748 = vpop.f32.mrb[0].mxu0
      %v749 = vadd.f32 %v483, %v748
      %v750 = vpop.f32.mrb[0].mxu0
      %v751 = vpop.f32.mrb[0].mxu0
      %v752 = vadd.f32 %v483, %v751
      %v753 = vpop.f32.mrb[0].mxu0
      %754 = vmatprep.mubr.bf16.mxu0 0
      %755 = vmatmul.mubr.bf16.gmra.mrb[0].mxu0 %v615
      %v756 = vpop.f32.mrb[0].mxu0
      %v757 = vadd.f32 %v483, %v756
      %v758 = vpop.f32.mrb[0].mxu0
      %v759 = vpop.f32.mrb[0].mxu0
      %v760 = vadd.f32 %v483, %v759
      %v761 = vpop.f32.mrb[0].mxu0
      %762 = vmatprep.mubr.bf16.mxu0 0
      %763 = vmatmul.mubr.bf16.gmra.mrb[0].mxu0 %v618
      %v764 = vpop.f32.mrb[0].mxu0
      %v765 = vadd.f32 %v483, %v764
      %v766 = vpop.f32.mrb[0].mxu0
      %v767 = vpop.f32.mrb[0].mxu0
      %v768 = vadd.f32 %v483, %v767
      %v769 = vpop.f32.mrb[0].mxu0
      %770 = vmatprep.mubr.bf16.mxu0 0
      %771 = vmatmul.mubr.bf16.gmra.mrb[0].mxu0 %v621
      %v772 = vpop.f32.mrb[0].mxu0
      %v773 = vadd.f32 %v483, %v772
      %v774 = vpop.f32.mrb[0].mxu0
      %v775 = vpop.f32.mrb[0].mxu0
      %v776 = vadd.f32 %v483, %v775
      %v777 = vpop.f32.mrb[0].mxu0
      %778 = vmatprep.mubr.bf16.mxu0 0
      %779 = vmatmul.mubr.bf16.gmra.mrb[0].mxu0 %v624
      %v780 = vpop.f32.mrb[0].mxu0
      %v781 = vadd.f32 %v483, %v780
      %v782 = vpop.f32.mrb[0].mxu0
      %v783 = vpop.f32.mrb[0].mxu0
      %v784 = vadd.f32 %v483, %v783
      %v785 = vpop.f32.mrb[0].mxu0
      %786 = vdwg.mxu0
      %787 = vst [vmem:[#allocation2] sm:$0xff] 0.0
      %788 = vst [vmem:[#allocation2 + $0x8] sm:$0xff] 0.0
      %789 = vst [vmem:[#allocation2 + $0x10] sm:$0x3] 0.0
      %790 = vst [vmem:[#allocation2 + $0x18] sm:$0xff] 0.0
      %791 = vst [vmem:[#allocation2 + $0x20] sm:$0xff] 0.0
      %792 = vst [vmem:[#allocation2 + $0x28] sm:$0x3] 0.0
      %793 = vst [vmem:[#allocation2 + $0x30] sm:$0xff] 0.0
      %794 = vst [vmem:[#allocation2 + $0x38] sm:$0xff] 0.0
      %795 = vst [vmem:[#allocation2 + $0x40] sm:$0x3] 0.0
      %796 = vst [vmem:[#allocation2 + $0x48] sm:$0xff] 0.0
      %797 = vst [vmem:[#allocation2 + $0x50] sm:$0xff] 0.0
      %798 = vst [vmem:[#allocation2 + $0x58] sm:$0x3] 0.0
      %799 = vst [vmem:[#allocation2 + $0x60] sm:$0xff] 0.0
      %800 = vst [vmem:[#allocation2 + $0x68] sm:$0xff] 0.0
      %801 = vst [vmem:[#allocation2 + $0x70] sm:$0x3] 0.0
      %802 = vst [vmem:[#allocation2 + $0x78] sm:$0xff] 0.0
      %803 = vst [vmem:[#allocation2 + $0x80] sm:$0xff] 0.0
      %804 = vst [vmem:[#allocation2 + $0x88] sm:$0x3] 0.0
      %805 = vst [vmem:[#allocation2 + $0x90] sm:$0xff] 0.0
      %806 = vst [vmem:[#allocation2 + $0x98] sm:$0xff] 0.0
      %807 = vst [vmem:[#allocation2 + $0xa0] sm:$0x3] 0.0
      %808 = vst [vmem:[#allocation2 + $0xa8] sm:$0xff] 0.0
      %809 = vst [vmem:[#allocation2 + $0xb0] sm:$0xff] 0.0
      %810 = vst [vmem:[#allocation2 + $0xb8] sm:$0x3] 0.0
      %811 = vst [vmem:[#allocation2 + $0xc0] sm:$0xff] 0.0
      %812 = vst [vmem:[#allocation2 + $0xc8] sm:$0xff] 0.0
      %813 = vst [vmem:[#allocation2 + $0xd0] sm:$0x3] 0.0
      %814 = vst [vmem:[#allocation2 + $0xd8] sm:$0xff] 0.0
      %815 = vst [vmem:[#allocation2 + $0xe0] sm:$0xff] 0.0
      %816 = vst [vmem:[#allocation2 + $0xe8] sm:$0x3] 0.0
      %817 = vst [vmem:[#allocation2 + $0xf0] sm:$0xff] 0.0
      %818 = vst [vmem:[#allocation2 + $0xf8] sm:$0xff] 0.0
      %819 = vst [vmem:[#allocation2 + $0x100] sm:$0x3] 0.0
      %820 = vst [vmem:[#allocation2 + $0x108] sm:$0xff] 0.0
      %821 = vst [vmem:[#allocation2 + $0x110] sm:$0xff] 0.0
      %822 = vst [vmem:[#allocation2 + $0x118] sm:$0x3] 0.0
      %823 = vst [vmem:[#allocation2 + $0x120] sm:$0xff] 0.0
      %824 = vst [vmem:[#allocation2 + $0x128] sm:$0xff] 0.0
      %825 = vst [vmem:[#allocation2 + $0x130] sm:$0x3] 0.0
      %826 = vst [vmem:[#allocation2 + $0x138] sm:$0xff] 0.0
      %827 = vst [vmem:[#allocation2 + $0x140] sm:$0xff] 0.0
      %828 = vst [vmem:[#allocation2 + $0x148] sm:$0x3] 0.0
      %829 = vst [vmem:[#allocation2 + $0x150] sm:$0xff] 0.0
      %830 = vst [vmem:[#allocation2 + $0x158] sm:$0xff] 0.0
      %831 = vst [vmem:[#allocation2 + $0x160] sm:$0x3] 0.0
      %832 = vst [vmem:[#allocation2 + $0x168] sm:$0xff] 0.0
      %833 = vst [vmem:[#allocation2 + $0x170] sm:$0xff] 0.0
      %834 = vst [vmem:[#allocation2 + $0x178] sm:$0x3] 0.0
      %835 = vst [vmem:[#allocation2 + $0x180] sm:$0xff] 0.0
      %836 = vst [vmem:[#allocation2 + $0x188] sm:$0xff] 0.0
      %837 = vst [vmem:[#allocation2 + $0x190] sm:$0x3] 0.0
      %838 = vst [vmem:[#allocation2 + $0x198] sm:$0xff] 0.0
      %839 = vst [vmem:[#allocation2 + $0x1a0] sm:$0xff] 0.0
      %840 = vst [vmem:[#allocation2 + $0x1a8] sm:$0x3] 0.0
      %s841 = scalar_lea.vmem [#allocation2], 24
      %842 = vst [vmem:[%s841 + $0x1] sm:$0xff] %v661
      %843 = vst [vmem:[%s841 + $0x9] sm:$0xff] %v664
      %844 = vst [vmem:[%s841 + $0x19] sm:$0xff] %v669
      %845 = vst [vmem:[%s841 + $0x21] sm:$0xff] %v672
      %846 = vst [vmem:[%s841 + $0x31] sm:$0xff] %v677
      %847 = vst [vmem:[%s841 + $0x39] sm:$0xff] %v680
      %848 = vst [vmem:[%s841 + $0x49] sm:$0xff] %v685
      %849 = vst [vmem:[%s841 + $0x51] sm:$0xff] %v688
      %850 = vst [vmem:[%s841 + $0x61] sm:$0xff] %v693
      %851 = vst [vmem:[%s841 + $0x69] sm:$0xff] %v696
      %852 = vst [vmem:[%s841 + $0x79] sm:$0xff] %v701
      %853 = vst [vmem:[%s841 + $0x81] sm:$0xff] %v704
      %854 = vst [vmem:[%s841 + $0x91] sm:$0xff] %v709
      %855 = vst [vmem:[%s841 + $0x99] sm:$0xff] %v712
      %856 = vst [vmem:[%s841 + $0xa9] sm:$0xff] %v717
      %857 = vst [vmem:[%s841 + $0xb1] sm:$0xff] %v720
      %858 = vst [vmem:[%s841 + $0xc1] sm:$0xff] %v725
      %859 = vst [vmem:[%s841 + $0xc9] sm:$0xff] %v728
      %860 = vst [vmem:[%s841 + $0xd9] sm:$0xff] %v733
      %861 = vst [vmem:[%s841 + $0xe1] sm:$0xff] %v736
      %862 = vst [vmem:[%s841 + $0xf1] sm:$0xff] %v741
      %863 = vst [vmem:[%s841 + $0xf9] sm:$0xff] %v744
      %864 = vst [vmem:[%s841 + $0x109] sm:$0xff] %v749
      %865 = vst [vmem:[%s841 + $0x111] sm:$0xff] %v752
      %866 = vst [vmem:[%s841 + $0x121] sm:$0xff] %v757
      %867 = vst [vmem:[%s841 + $0x129] sm:$0xff] %v760
      %868 = vst [vmem:[%s841 + $0x139] sm:$0xff] %v765
      %869 = vst [vmem:[%s841 + $0x141] sm:$0xff] %v768
      %870 = vst [vmem:[%s841 + $0x151] sm:$0xff] %v773
      %871 = vst [vmem:[%s841 + $0x159] sm:$0xff] %v776
      %872 = vst [vmem:[%s841 + $0x169] sm:$0xff] %v781
      %873 = vst [vmem:[%s841 + $0x171] sm:$0xff] %v784
      %v874 = vld [vmem:[%s4] sm:$0x1]
      %v876 = vlaneseq
      %v877 = vshrl.u32 %v876, 7
      %v878 = vsub.s32 0, %v877
      %v879 = vrot.slane %v874, %v878
      %v881 = vld [vmem:[%s3] sm:$0x1]
      %v882 = vld [vmem:[#allocation2] sm:$0xff]
      %v883 = vld [vmem:[#allocation2 + $0x8] sm:$0xff]
      %v884 = vld [vmem:[#allocation2 + $0x18] sm:$0xff]
      %v885 = vld [vmem:[#allocation2 + $0x20] sm:$0xff]
      %v886 = vld [vmem:[#allocation2 + $0x30] sm:$0xff]
      %v887 = vld [vmem:[#allocation2 + $0x38] sm:$0xff]
      %v888 = vld [vmem:[#allocation2 + $0x48] sm:$0xff]
      %v889 = vld [vmem:[#allocation2 + $0x50] sm:$0xff]
      %v890 = vld [vmem:[#allocation2 + $0x60] sm:$0xff]
      %v891 = vld [vmem:[#allocation2 + $0x68] sm:$0xff]
      %v892 = vld [vmem:[#allocation2 + $0x78] sm:$0xff]
      %v893 = vld [vmem:[#allocation2 + $0x80] sm:$0xff]
      %v894 = vld [vmem:[#allocation2 + $0x90] sm:$0xff]
      %v895 = vld [vmem:[#allocation2 + $0x98] sm:$0xff]
      %v896 = vld [vmem:[#allocation2 + $0xa8] sm:$0xff]
      %v897 = vld [vmem:[#allocation2 + $0xb0] sm:$0xff]
      %v898 = vld [vmem:[#allocation2 + $0xc0] sm:$0xff]
      %v899 = vld [vmem:[#allocation2 + $0xc8] sm:$0xff]
      %v900 = vld [vmem:[#allocation2 + $0xd8] sm:$0xff]
      %v901 = vld [vmem:[#allocation2 + $0xe0] sm:$0xff]
      %v902 = vld [vmem:[#allocation2 + $0xf0] sm:$0xff]
      %v903 = vld [vmem:[#allocation2 + $0xf8] sm:$0xff]
      %v904 = vld [vmem:[#allocation2 + $0x108] sm:$0xff]
      %v905 = vld [vmem:[#allocation2 + $0x110] sm:$0xff]
      %v906 = vld [vmem:[#allocation2 + $0x120] sm:$0xff]
      %v907 = vld [vmem:[#allocation2 + $0x128] sm:$0xff]
      %v908 = vld [vmem:[#allocation2 + $0x138] sm:$0xff]
      %v909 = vld [vmem:[#allocation2 + $0x140] sm:$0xff]
      %v910 = vld [vmem:[#allocation2 + $0x150] sm:$0xff]
      %v911 = vld [vmem:[#allocation2 + $0x158] sm:$0xff]
      %v912 = vld [vmem:[#allocation2 + $0x168] sm:$0xff]
      %v913 = vld [vmem:[#allocation2 + $0x170] sm:$0xff]
      %v914 = vlaneseq
      %v915 = vshrl.u32 %v914, 7
      %v916 = vsub.s32 0, %v915
      %v917 = vrot.slane %v881, %v916
      %v918 = vmul.f32 %v882, %v917
      %v919 = vmul.f32 %v883, %v917
      %v920 = vmul.f32 %v884, %v917
      %v921 = vmul.f32 %v885, %v917
      %v922 = vmul.f32 %v886, %v917
      %v923 = vmul.f32 %v887, %v917
      %v924 = vmul.f32 %v888, %v917
      %v925 = vmul.f32 %v889, %v917
      %v926 = vmul.f32 %v890, %v917
      %v927 = vmul.f32 %v891, %v917
      %v928 = vmul.f32 %v892, %v917
      %v929 = vmul.f32 %v893, %v917
      %v930 = vmul.f32 %v894, %v917
      %v931 = vmul.f32 %v895, %v917
      %v932 = vmul.f32 %v896, %v917
      %v933 = vmul.f32 %v897, %v917
      %v934 = vmul.f32 %v898, %v917
      %v935 = vmul.f32 %v899, %v917
      %v936 = vmul.f32 %v900, %v917
      %v937 = vmul.f32 %v901, %v917
      %v938 = vmul.f32 %v902, %v917
      %v939 = vmul.f32 %v903, %v917
      %v940 = vmul.f32 %v904, %v917
      %v941 = vmul.f32 %v905, %v917
      %v942 = vmul.f32 %v906, %v917
      %v943 = vmul.f32 %v907, %v917
      %v944 = vmul.f32 %v908, %v917
      %v945 = vmul.f32 %v909, %v917
      %v946 = vmul.f32 %v910, %v917
      %v947 = vmul.f32 %v911, %v917
      %v948 = vmul.f32 %v912, %v917
      %v949 = vmul.f32 %v913, %v917
      %v950 = vadd.f32 %v879, %v918
      %v951 = vadd.f32 %v879, %v919
      %v952 = vadd.f32 %v879, %v920
      %v953 = vadd.f32 %v879, %v921
      %v954 = vadd.f32 %v879, %v922
      %v955 = vadd.f32 %v879, %v923
      %v956 = vadd.f32 %v879, %v924
      %v957 = vadd.f32 %v879, %v925
      %v958 = vadd.f32 %v879, %v926
      %v959 = vadd.f32 %v879, %v927
      %v960 = vadd.f32 %v879, %v928
      %v961 = vadd.f32 %v879, %v929
      %v962 = vadd.f32 %v879, %v930
      %v963 = vadd.f32 %v879, %v931
      %v964 = vadd.f32 %v879, %v932
      %v965 = vadd.f32 %v879, %v933
      %v966 = vadd.f32 %v879, %v934
      %v967 = vadd.f32 %v879, %v935
      %v968 = vadd.f32 %v879, %v936
      %v969 = vadd.f32 %v879, %v937
      %v970 = vadd.f32 %v879, %v938
      %v971 = vadd.f32 %v879, %v939
      %v972 = vadd.f32 %v879, %v940
      %v973 = vadd.f32 %v879, %v941
      %v974 = vadd.f32 %v879, %v942
      %v975 = vadd.f32 %v879, %v943
      %v976 = vadd.f32 %v879, %v944
      %v977 = vadd.f32 %v879, %v945
      %v978 = vadd.f32 %v879, %v946
      %v979 = vadd.f32 %v879, %v947
      %v980 = vadd.f32 %v879, %v948
      %v981 = vadd.f32 %v879, %v949
      %v982 = vld [vmem:[%s3 + $0x1] sm:$0x1]
      %v983 = vld [vmem:[#allocation2 + $0x1] sm:$0xff]
      %v984 = vld [vmem:[#allocation2 + $0x9] sm:$0xff]
      %v985 = vld [vmem:[#allocation2 + $0x19] sm:$0xff]
      %v986 = vld [vmem:[#allocation2 + $0x21] sm:$0xff]
      %v987 = vld [vmem:[#allocation2 + $0x31] sm:$0xff]
      %v988 = vld [vmem:[#allocation2 + $0x39] sm:$0xff]
      %v989 = vld [vmem:[#allocation2 + $0x49] sm:$0xff]
      %v990 = vld [vmem:[#allocation2 + $0x51] sm:$0xff]
      %v991 = vld [vmem:[#allocation2 + $0x61] sm:$0xff]
      %v992 = vld [vmem:[#allocation2 + $0x69] sm:$0xff]
      %v993 = vld [vmem:[#allocation2 + $0x79] sm:$0xff]
      %v994 = vld [vmem:[#allocation2 + $0x81] sm:$0xff]
      %v995 = vld [vmem:[#allocation2 + $0x91] sm:$0xff]
      %v996 = vld [vmem:[#allocation2 + $0x99] sm:$0xff]
      %v997 = vld [vmem:[#allocation2 + $0xa9] sm:$0xff]
      %v998 = vld [vmem:[#allocation2 + $0xb1] sm:$0xff]
      %v999 = vld [vmem:[#allocation2 + $0xc1] sm:$0xff]
      %v1000 = vld [vmem:[#allocation2 + $0xc9] sm:$0xff]
      %v1001 = vld [vmem:[#allocation2 + $0xd9] sm:$0xff]
      %v1002 = vld [vmem:[#allocation2 + $0xe1] sm:$0xff]
      %v1003 = vld [vmem:[#allocation2 + $0xf1] sm:$0xff]
      %v1004 = vld [vmem:[#allocation2 + $0xf9] sm:$0xff]
      %v1005 = vld [vmem:[#allocation2 + $0x109] sm:$0xff]
      %v1006 = vld [vmem:[#allocation2 + $0x111] sm:$0xff]
      %v1007 = vld [vmem:[#allocation2 + $0x121] sm:$0xff]
      %v1008 = vld [vmem:[#allocation2 + $0x129] sm:$0xff]
      %v1009 = vld [vmem:[#allocation2 + $0x139] sm:$0xff]
      %v1010 = vld [vmem:[#allocation2 + $0x141] sm:$0xff]
      %v1011 = vld [vmem:[#allocation2 + $0x151] sm:$0xff]
      %v1012 = vld [vmem:[#allocation2 + $0x159] sm:$0xff]
      %v1013 = vld [vmem:[#allocation2 + $0x169] sm:$0xff]
      %v1014 = vld [vmem:[#allocation2 + $0x171] sm:$0xff]
      %v1015 = vlaneseq
      %v1016 = vshrl.u32 %v1015, 7
      %v1017 = vsub.s32 0, %v1016
      %v1018 = vrot.slane %v982, %v1017
      %v1019 = vmul.f32 %v983, %v1018
      %v1020 = vmul.f32 %v984, %v1018
      %v1021 = vmul.f32 %v985, %v1018
      %v1022 = vmul.f32 %v986, %v1018
      %v1023 = vmul.f32 %v987, %v1018
      %v1024 = vmul.f32 %v988, %v1018
      %v1025 = vmul.f32 %v989, %v1018
      %v1026 = vmul.f32 %v990, %v1018
      %v1027 = vmul.f32 %v991, %v1018
      %v1028 = vmul.f32 %v992, %v1018
      %v1029 = vmul.f32 %v993, %v1018
      %v1030 = vmul.f32 %v994, %v1018
      %v1031 = vmul.f32 %v995, %v1018
      %v1032 = vmul.f32 %v996, %v1018
      %v1033 = vmul.f32 %v997, %v1018
      %v1034 = vmul.f32 %v998, %v1018
      %v1035 = vmul.f32 %v999, %v1018
      %v1036 = vmul.f32 %v1000, %v1018
      %v1037 = vmul.f32 %v1001, %v1018
      %v1038 = vmul.f32 %v1002, %v1018
      %v1039 = vmul.f32 %v1003, %v1018
      %v1040 = vmul.f32 %v1004, %v1018
      %v1041 = vmul.f32 %v1005, %v1018
      %v1042 = vmul.f32 %v1006, %v1018
      %v1043 = vmul.f32 %v1007, %v1018
      %v1044 = vmul.f32 %v1008, %v1018
      %v1045 = vmul.f32 %v1009, %v1018
      %v1046 = vmul.f32 %v1010, %v1018
      %v1047 = vmul.f32 %v1011, %v1018
      %v1048 = vmul.f32 %v1012, %v1018
      %v1049 = vmul.f32 %v1013, %v1018
      %v1050 = vmul.f32 %v1014, %v1018
      %v1051 = vadd.f32 %v950, %v1019
      %v1052 = vadd.f32 %v951, %v1020
      %v1053 = vadd.f32 %v952, %v1021
      %v1054 = vadd.f32 %v953, %v1022
      %v1055 = vadd.f32 %v954, %v1023
      %v1056 = vadd.f32 %v955, %v1024
      %v1057 = vadd.f32 %v956, %v1025
      %v1058 = vadd.f32 %v957, %v1026
      %v1059 = vadd.f32 %v958, %v1027
      %v1060 = vadd.f32 %v959, %v1028
      %v1061 = vadd.f32 %v960, %v1029
      %v1062 = vadd.f32 %v961, %v1030
      %v1063 = vadd.f32 %v962, %v1031
      %v1064 = vadd.f32 %v963, %v1032
      %v1065 = vadd.f32 %v964, %v1033
      %v1066 = vadd.f32 %v965, %v1034
      %v1067 = vadd.f32 %v966, %v1035
      %v1068 = vadd.f32 %v967, %v1036
      %v1069 = vadd.f32 %v968, %v1037
      %v1070 = vadd.f32 %v969, %v1038
      %v1071 = vadd.f32 %v970, %v1039
      %v1072 = vadd.f32 %v971, %v1040
      %v1073 = vadd.f32 %v972, %v1041
      %v1074 = vadd.f32 %v973, %v1042
      %v1075 = vadd.f32 %v974, %v1043
      %v1076 = vadd.f32 %v975, %v1044
      %v1077 = vadd.f32 %v976, %v1045
      %v1078 = vadd.f32 %v977, %v1046
      %v1079 = vadd.f32 %v978, %v1047
      %v1080 = vadd.f32 %v979, %v1048
      %v1081 = vadd.f32 %v980, %v1049
      %v1082 = vadd.f32 %v981, %v1050
      %v1083 = vld [vmem:[%s3 + $0x2] sm:$0x1]
      %v1084 = vld [vmem:[#allocation2 + $0x2] sm:$0xff]
      %v1085 = vld [vmem:[#allocation2 + $0xa] sm:$0xff]
      %v1086 = vld [vmem:[#allocation2 + $0x1a] sm:$0xff]
      %v1087 = vld [vmem:[#allocation2 + $0x22] sm:$0xff]
      %v1088 = vld [vmem:[#allocation2 + $0x32] sm:$0xff]
      %v1089 = vld [vmem:[#allocation2 + $0x3a] sm:$0xff]
      %v1090 = vld [vmem:[#allocation2 + $0x4a] sm:$0xff]
      %v1091 = vld [vmem:[#allocation2 + $0x52] sm:$0xff]
      %v1092 = vld [vmem:[#allocation2 + $0x62] sm:$0xff]
      %v1093 = vld [vmem:[#allocation2 + $0x6a] sm:$0xff]
      %v1094 = vld [vmem:[#allocation2 + $0x7a] sm:$0xff]
      %v1095 = vld [vmem:[#allocation2 + $0x82] sm:$0xff]
      %v1096 = vld [vmem:[#allocation2 + $0x92] sm:$0xff]
      %v1097 = vld [vmem:[#allocation2 + $0x9a] sm:$0xff]
      %v1098 = vld [vmem:[#allocation2 + $0xaa] sm:$0xff]
      %v1099 = vld [vmem:[#allocation2 + $0xb2] sm:$0xff]
      %v1100 = vld [vmem:[#allocation2 + $0xc2] sm:$0xff]
      %v1101 = vld [vmem:[#allocation2 + $0xca] sm:$0xff]
      %v1102 = vld [vmem:[#allocation2 + $0xda] sm:$0xff]
      %v1103 = vld [vmem:[#allocation2 + $0xe2] sm:$0xff]
      %v1104 = vld [vmem:[#allocation2 + $0xf2] sm:$0xff]
      %v1105 = vld [vmem:[#allocation2 + $0xfa] sm:$0xff]
      %v1106 = vld [vmem:[#allocation2 + $0x10a] sm:$0xff]
      %v1107 = vld [vmem:[#allocation2 + $0x112] sm:$0xff]
      %v1108 = vld [vmem:[#allocation2 + $0x122] sm:$0xff]
      %v1109 = vld [vmem:[#allocation2 + $0x12a] sm:$0xff]
      %v1110 = vld [vmem:[#allocation2 + $0x13a] sm:$0xff]
      %v1111 = vld [vmem:[#allocation2 + $0x142] sm:$0xff]
      %v1112 = vld [vmem:[#allocation2 + $0x152] sm:$0xff]
      %v1113 = vld [vmem:[#allocation2 + $0x15a] sm:$0xff]
      %v1114 = vld [vmem:[#allocation2 + $0x16a] sm:$0xff]
      %v1115 = vld [vmem:[#allocation2 + $0x172] sm:$0xff]
      %v1116 = vlaneseq
      %v1117 = vshrl.u32 %v1116, 7
      %v1118 = vsub.s32 0, %v1117
      %v1119 = vrot.slane %v1083, %v1118
      %v1120 = vmul.f32 %v1084, %v1119
      %v1121 = vmul.f32 %v1085, %v1119
      %v1122 = vmul.f32 %v1086, %v1119
      %v1123 = vmul.f32 %v1087, %v1119
      %v1124 = vmul.f32 %v1088, %v1119
      %v1125 = vmul.f32 %v1089, %v1119
      %v1126 = vmul.f32 %v1090, %v1119
      %v1127 = vmul.f32 %v1091, %v1119
      %v1128 = vmul.f32 %v1092, %v1119
      %v1129 = vmul.f32 %v1093, %v1119
      %v1130 = vmul.f32 %v1094, %v1119
      %v1131 = vmul.f32 %v1095, %v1119
      %v1132 = vmul.f32 %v1096, %v1119
      %v1133 = vmul.f32 %v1097, %v1119
      %v1134 = vmul.f32 %v1098, %v1119
      %v1135 = vmul.f32 %v1099, %v1119
      %v1136 = vmul.f32 %v1100, %v1119
      %v1137 = vmul.f32 %v1101, %v1119
      %v1138 = vmul.f32 %v1102, %v1119
      %v1139 = vmul.f32 %v1103, %v1119
      %v1140 = vmul.f32 %v1104, %v1119
      %v1141 = vmul.f32 %v1105, %v1119
      %v1142 = vmul.f32 %v1106, %v1119
      %v1143 = vmul.f32 %v1107, %v1119
      %v1144 = vmul.f32 %v1108, %v1119
      %v1145 = vmul.f32 %v1109, %v1119
      %v1146 = vmul.f32 %v1110, %v1119
      %v1147 = vmul.f32 %v1111, %v1119
      %v1148 = vmul.f32 %v1112, %v1119
      %v1149 = vmul.f32 %v1113, %v1119
      %v1150 = vmul.f32 %v1114, %v1119
      %v1151 = vmul.f32 %v1115, %v1119
      %v1152 = vadd.f32 %v1051, %v1120
      %v1153 = vadd.f32 %v1052, %v1121
      %v1154 = vadd.f32 %v1053, %v1122
      %v1155 = vadd.f32 %v1054, %v1123
      %v1156 = vadd.f32 %v1055, %v1124
      %v1157 = vadd.f32 %v1056, %v1125
      %v1158 = vadd.f32 %v1057, %v1126
      %v1159 = vadd.f32 %v1058, %v1127
      %v1160 = vadd.f32 %v1059, %v1128
      %v1161 = vadd.f32 %v1060, %v1129
      %v1162 = vadd.f32 %v1061, %v1130
      %v1163 = vadd.f32 %v1062, %v1131
      %v1164 = vadd.f32 %v1063, %v1132
      %v1165 = vadd.f32 %v1064, %v1133
      %v1166 = vadd.f32 %v1065, %v1134
      %v1167 = vadd.f32 %v1066, %v1135
      %v1168 = vadd.f32 %v1067, %v1136
      %v1169 = vadd.f32 %v1068, %v1137
      %v1170 = vadd.f32 %v1069, %v1138
      %v1171 = vadd.f32 %v1070, %v1139
      %v1172 = vadd.f32 %v1071, %v1140
      %v1173 = vadd.f32 %v1072, %v1141
      %v1174 = vadd.f32 %v1073, %v1142
      %v1175 = vadd.f32 %v1074, %v1143
      %v1176 = vadd.f32 %v1075, %v1144
      %v1177 = vadd.f32 %v1076, %v1145
      %v1178 = vadd.f32 %v1077, %v1146
      %v1179 = vadd.f32 %v1078, %v1147
      %v1180 = vadd.f32 %v1079, %v1148
      %v1181 = vadd.f32 %v1080, %v1149
      %v1182 = vadd.f32 %v1081, %v1150
      %v1183 = vadd.f32 %v1082, %v1151
      %v1184 = vld [vmem:[%s3 + $0x3] sm:$0x1]
      %v1185 = vld [vmem:[%s841] sm:$0xff]
      %v1186 = vld [vmem:[%s841 + $0x8] sm:$0xff]
      %v1187 = vld [vmem:[%s841 + $0x18] sm:$0xff]
      %v1188 = vld [vmem:[%s841 + $0x20] sm:$0xff]
      %v1189 = vld [vmem:[%s841 + $0x30] sm:$0xff]
      %v1190 = vld [vmem:[%s841 + $0x38] sm:$0xff]
      %v1191 = vld [vmem:[%s841 + $0x48] sm:$0xff]
      %v1192 = vld [vmem:[%s841 + $0x50] sm:$0xff]
      %v1193 = vld [vmem:[%s841 + $0x60] sm:$0xff]
      %v1194 = vld [vmem:[%s841 + $0x68] sm:$0xff]
      %v1195 = vld [vmem:[%s841 + $0x78] sm:$0xff]
      %v1196 = vld [vmem:[%s841 + $0x80] sm:$0xff]
      %v1197 = vld [vmem:[%s841 + $0x90] sm:$0xff]
      %v1198 = vld [vmem:[%s841 + $0x98] sm:$0xff]
      %v1199 = vld [vmem:[%s841 + $0xa8] sm:$0xff]
      %v1200 = vld [vmem:[%s841 + $0xb0] sm:$0xff]
      %v1201 = vld [vmem:[%s841 + $0xc0] sm:$0xff]
      %v1202 = vld [vmem:[%s841 + $0xc8] sm:$0xff]
      %v1203 = vld [vmem:[%s841 + $0xd8] sm:$0xff]
      %v1204 = vld [vmem:[%s841 + $0xe0] sm:$0xff]
      %v1205 = vld [vmem:[%s841 + $0xf0] sm:$0xff]
      %v1206 = vld [vmem:[%s841 + $0xf8] sm:$0xff]
      %v1207 = vld [vmem:[%s841 + $0x108] sm:$0xff]
      %v1208 = vld [vmem:[%s841 + $0x110] sm:$0xff]
      %v1209 = vld [vmem:[%s841 + $0x120] sm:$0xff]
      %v1210 = vld [vmem:[%s841 + $0x128] sm:$0xff]
      %v1211 = vld [vmem:[%s841 + $0x138] sm:$0xff]
      %v1212 = vld [vmem:[%s841 + $0x140] sm:$0xff]
      %v1213 = vld [vmem:[%s841 + $0x150] sm:$0xff]
      %v1214 = vld [vmem:[%s841 + $0x158] sm:$0xff]
      %v1215 = vld [vmem:[%s841 + $0x168] sm:$0xff]
      %v1216 = vld [vmem:[%s841 + $0x170] sm:$0xff]
      %v1217 = vlaneseq
      %v1218 = vshrl.u32 %v1217, 7
      %v1219 = vsub.s32 0, %v1218
      %v1220 = vrot.slane %v1184, %v1219
      %v1221 = vmul.f32 %v1185, %v1220
      %v1222 = vmul.f32 %v1186, %v1220
      %v1223 = vmul.f32 %v1187, %v1220
      %v1224 = vmul.f32 %v1188, %v1220
      %v1225 = vmul.f32 %v1189, %v1220
      %v1226 = vmul.f32 %v1190, %v1220
      %v1227 = vmul.f32 %v1191, %v1220
      %v1228 = vmul.f32 %v1192, %v1220
      %v1229 = vmul.f32 %v1193, %v1220
      %v1230 = vmul.f32 %v1194, %v1220
      %v1231 = vmul.f32 %v1195, %v1220
      %v1232 = vmul.f32 %v1196, %v1220
      %v1233 = vmul.f32 %v1197, %v1220
      %v1234 = vmul.f32 %v1198, %v1220
      %v1235 = vmul.f32 %v1199, %v1220
      %v1236 = vmul.f32 %v1200, %v1220
      %v1237 = vmul.f32 %v1201, %v1220
      %v1238 = vmul.f32 %v1202, %v1220
      %v1239 = vmul.f32 %v1203, %v1220
      %v1240 = vmul.f32 %v1204, %v1220
      %v1241 = vmul.f32 %v1205, %v1220
      %v1242 = vmul.f32 %v1206, %v1220
      %v1243 = vmul.f32 %v1207, %v1220
      %v1244 = vmul.f32 %v1208, %v1220
      %v1245 = vmul.f32 %v1209, %v1220
      %v1246 = vmul.f32 %v1210, %v1220
      %v1247 = vmul.f32 %v1211, %v1220
      %v1248 = vmul.f32 %v1212, %v1220
      %v1249 = vmul.f32 %v1213, %v1220
      %v1250 = vmul.f32 %v1214, %v1220
      %v1251 = vmul.f32 %v1215, %v1220
      %v1252 = vmul.f32 %v1216, %v1220
      %v1253 = vadd.f32 %v1152, %v1221
      %v1254 = vadd.f32 %v1153, %v1222
      %v1255 = vadd.f32 %v1154, %v1223
      %v1256 = vadd.f32 %v1155, %v1224
      %v1257 = vadd.f32 %v1156, %v1225
      %v1258 = vadd.f32 %v1157, %v1226
      %v1259 = vadd.f32 %v1158, %v1227
      %v1260 = vadd.f32 %v1159, %v1228
      %v1261 = vadd.f32 %v1160, %v1229
      %v1262 = vadd.f32 %v1161, %v1230
      %v1263 = vadd.f32 %v1162, %v1231
      %v1264 = vadd.f32 %v1163, %v1232
      %v1265 = vadd.f32 %v1164, %v1233
      %v1266 = vadd.f32 %v1165, %v1234
      %v1267 = vadd.f32 %v1166, %v1235
      %v1268 = vadd.f32 %v1167, %v1236
      %v1269 = vadd.f32 %v1168, %v1237
      %v1270 = vadd.f32 %v1169, %v1238
      %v1271 = vadd.f32 %v1170, %v1239
      %v1272 = vadd.f32 %v1171, %v1240
      %v1273 = vadd.f32 %v1172, %v1241
      %v1274 = vadd.f32 %v1173, %v1242
      %v1275 = vadd.f32 %v1174, %v1243
      %v1276 = vadd.f32 %v1175, %v1244
      %v1277 = vadd.f32 %v1176, %v1245
      %v1278 = vadd.f32 %v1177, %v1246
      %v1279 = vadd.f32 %v1178, %v1247
      %v1280 = vadd.f32 %v1179, %v1248
      %v1281 = vadd.f32 %v1180, %v1249
      %v1282 = vadd.f32 %v1181, %v1250
      %v1283 = vadd.f32 %v1182, %v1251
      %v1284 = vadd.f32 %v1183, %v1252
      %v1285 = vld [vmem:[%s3 + $0x4] sm:$0x1]
      %v1286 = vld [vmem:[%s841 + $0x1] sm:$0xff]
      %v1287 = vld [vmem:[%s841 + $0x9] sm:$0xff]
      %v1288 = vld [vmem:[%s841 + $0x19] sm:$0xff]
      %v1289 = vld [vmem:[%s841 + $0x21] sm:$0xff]
      %v1290 = vld [vmem:[%s841 + $0x31] sm:$0xff]
      %v1291 = vld [vmem:[%s841 + $0x39] sm:$0xff]
      %v1292 = vld [vmem:[%s841 + $0x49] sm:$0xff]
      %v1293 = vld [vmem:[%s841 + $0x51] sm:$0xff]
      %v1294 = vld [vmem:[%s841 + $0x61] sm:$0xff]
      %v1295 = vld [vmem:[%s841 + $0x69] sm:$0xff]
      %v1296 = vld [vmem:[%s841 + $0x79] sm:$0xff]
      %v1297 = vld [vmem:[%s841 + $0x81] sm:$0xff]
      %v1298 = vld [vmem:[%s841 + $0x91] sm:$0xff]
      %v1299 = vld [vmem:[%s841 + $0x99] sm:$0xff]
      %v1300 = vld [vmem:[%s841 + $0xa9] sm:$0xff]
      %v1301 = vld [vmem:[%s841 + $0xb1] sm:$0xff]
      %v1302 = vld [vmem:[%s841 + $0xc1] sm:$0xff]
      %v1303 = vld [vmem:[%s841 + $0xc9] sm:$0xff]
      %v1304 = vld [vmem:[%s841 + $0xd9] sm:$0xff]
      %v1305 = vld [vmem:[%s841 + $0xe1] sm:$0xff]
      %v1306 = vld [vmem:[%s841 + $0xf1] sm:$0xff]
      %v1307 = vld [vmem:[%s841 + $0xf9] sm:$0xff]
      %v1308 = vld [vmem:[%s841 + $0x109] sm:$0xff]
      %v1309 = vld [vmem:[%s841 + $0x111] sm:$0xff]
      %v1310 = vld [vmem:[%s841 + $0x121] sm:$0xff]
      %v1311 = vld [vmem:[%s841 + $0x129] sm:$0xff]
      %v1312 = vld [vmem:[%s841 + $0x139] sm:$0xff]
      %v1313 = vld [vmem:[%s841 + $0x141] sm:$0xff]
      %v1314 = vld [vmem:[%s841 + $0x151] sm:$0xff]
      %v1315 = vld [vmem:[%s841 + $0x159] sm:$0xff]
      %v1316 = vld [vmem:[%s841 + $0x169] sm:$0xff]
      %v1317 = vld [vmem:[%s841 + $0x171] sm:$0xff]
      %v1318 = vlaneseq
      %v1319 = vshrl.u32 %v1318, 7
      %v1320 = vsub.s32 0, %v1319
      %v1321 = vrot.slane %v1285, %v1320
      %v1322 = vmul.f32 %v1286, %v1321
      %v1323 = vmul.f32 %v1287, %v1321
      %v1324 = vmul.f32 %v1288, %v1321
      %v1325 = vmul.f32 %v1289, %v1321
      %v1326 = vmul.f32 %v1290, %v1321
      %v1327 = vmul.f32 %v1291, %v1321
      %v1328 = vmul.f32 %v1292, %v1321
      %v1329 = vmul.f32 %v1293, %v1321
      %v1330 = vmul.f32 %v1294, %v1321
      %v1331 = vmul.f32 %v1295, %v1321
      %v1332 = vmul.f32 %v1296, %v1321
      %v1333 = vmul.f32 %v1297, %v1321
      %v1334 = vmul.f32 %v1298, %v1321
      %v1335 = vmul.f32 %v1299, %v1321
      %v1336 = vmul.f32 %v1300, %v1321
      %v1337 = vmul.f32 %v1301, %v1321
      %v1338 = vmul.f32 %v1302, %v1321
      %v1339 = vmul.f32 %v1303, %v1321
      %v1340 = vmul.f32 %v1304, %v1321
      %v1341 = vmul.f32 %v1305, %v1321
      %v1342 = vmul.f32 %v1306, %v1321
      %v1343 = vmul.f32 %v1307, %v1321
      %v1344 = vmul.f32 %v1308, %v1321
      %v1345 = vmul.f32 %v1309, %v1321
      %v1346 = vmul.f32 %v1310, %v1321
      %v1347 = vmul.f32 %v1311, %v1321
      %v1348 = vmul.f32 %v1312, %v1321
      %v1349 = vmul.f32 %v1313, %v1321
      %v1350 = vmul.f32 %v1314, %v1321
      %v1351 = vmul.f32 %v1315, %v1321
      %v1352 = vmul.f32 %v1316, %v1321
      %v1353 = vmul.f32 %v1317, %v1321
      %v1354 = vadd.f32 %v1253, %v1322
      %v1355 = vadd.f32 %v1254, %v1323
      %v1356 = vadd.f32 %v1255, %v1324
      %v1357 = vadd.f32 %v1256, %v1325
      %v1358 = vadd.f32 %v1257, %v1326
      %v1359 = vadd.f32 %v1258, %v1327
      %v1360 = vadd.f32 %v1259, %v1328
      %v1361 = vadd.f32 %v1260, %v1329
      %v1362 = vadd.f32 %v1261, %v1330
      %v1363 = vadd.f32 %v1262, %v1331
      %v1364 = vadd.f32 %v1263, %v1332
      %v1365 = vadd.f32 %v1264, %v1333
      %v1366 = vadd.f32 %v1265, %v1334
      %v1367 = vadd.f32 %v1266, %v1335
      %v1368 = vadd.f32 %v1267, %v1336
      %v1369 = vadd.f32 %v1268, %v1337
      %v1370 = vadd.f32 %v1269, %v1338
      %v1371 = vadd.f32 %v1270, %v1339
      %v1372 = vadd.f32 %v1271, %v1340
      %v1373 = vadd.f32 %v1272, %v1341
      %v1374 = vadd.f32 %v1273, %v1342
      %v1375 = vadd.f32 %v1274, %v1343
      %v1376 = vadd.f32 %v1275, %v1344
      %v1377 = vadd.f32 %v1276, %v1345
      %v1378 = vadd.f32 %v1277, %v1346
      %v1379 = vadd.f32 %v1278, %v1347
      %v1380 = vadd.f32 %v1279, %v1348
      %v1381 = vadd.f32 %v1280, %v1349
      %v1382 = vadd.f32 %v1281, %v1350
      %v1383 = vadd.f32 %v1282, %v1351
      %v1384 = vadd.f32 %v1283, %v1352
      %v1385 = vadd.f32 %v1284, %v1353
      %v1386 = vld [vmem:[%s3 + $0x5] sm:$0x1]
      %v1387 = vld [vmem:[%s841 + $0x2] sm:$0xff]
      %v1388 = vld [vmem:[%s841 + $0xa] sm:$0xff]
      %v1389 = vld [vmem:[%s841 + $0x1a] sm:$0xff]
      %v1390 = vld [vmem:[%s841 + $0x22] sm:$0xff]
      %v1391 = vld [vmem:[%s841 + $0x32] sm:$0xff]
      %v1392 = vld [vmem:[%s841 + $0x3a] sm:$0xff]
      %v1393 = vld [vmem:[%s841 + $0x4a] sm:$0xff]
      %v1394 = vld [vmem:[%s841 + $0x52] sm:$0xff]
      %v1395 = vld [vmem:[%s841 + $0x62] sm:$0xff]
      %v1396 = vld [vmem:[%s841 + $0x6a] sm:$0xff]
      %v1397 = vld [vmem:[%s841 + $0x7a] sm:$0xff]
      %v1398 = vld [vmem:[%s841 + $0x82] sm:$0xff]
      %v1399 = vld [vmem:[%s841 + $0x92] sm:$0xff]
      %v1400 = vld [vmem:[%s841 + $0x9a] sm:$0xff]
      %v1401 = vld [vmem:[%s841 + $0xaa] sm:$0xff]
      %v1402 = vld [vmem:[%s841 + $0xb2] sm:$0xff]
      %v1403 = vld [vmem:[%s841 + $0xc2] sm:$0xff]
      %v1404 = vld [vmem:[%s841 + $0xca] sm:$0xff]
      %v1405 = vld [vmem:[%s841 + $0xda] sm:$0xff]
      %v1406 = vld [vmem:[%s841 + $0xe2] sm:$0xff]
      %v1407 = vld [vmem:[%s841 + $0xf2] sm:$0xff]
      %v1408 = vld [vmem:[%s841 + $0xfa] sm:$0xff]
      %v1409 = vld [vmem:[%s841 + $0x10a] sm:$0xff]
      %v1410 = vld [vmem:[%s841 + $0x112] sm:$0xff]
      %v1411 = vld [vmem:[%s841 + $0x122] sm:$0xff]
      %v1412 = vld [vmem:[%s841 + $0x12a] sm:$0xff]
      %v1413 = vld [vmem:[%s841 + $0x13a] sm:$0xff]
      %v1414 = vld [vmem:[%s841 + $0x142] sm:$0xff]
      %v1415 = vld [vmem:[%s841 + $0x152] sm:$0xff]
      %v1416 = vld [vmem:[%s841 + $0x15a] sm:$0xff]
      %v1417 = vld [vmem:[%s841 + $0x16a] sm:$0xff]
      %v1418 = vld [vmem:[%s841 + $0x172] sm:$0xff]
      %v1419 = vlaneseq
      %v1420 = vshrl.u32 %v1419, 7
      %v1421 = vsub.s32 0, %v1420
      %v1422 = vrot.slane %v1386, %v1421
      %v1423 = vmul.f32 %v1387, %v1422
      %v1424 = vmul.f32 %v1388, %v1422
      %v1425 = vmul.f32 %v1389, %v1422
      %v1426 = vmul.f32 %v1390, %v1422
      %v1427 = vmul.f32 %v1391, %v1422
      %v1428 = vmul.f32 %v1392, %v1422
      %v1429 = vmul.f32 %v1393, %v1422
      %v1430 = vmul.f32 %v1394, %v1422
      %v1431 = vmul.f32 %v1395, %v1422
      %v1432 = vmul.f32 %v1396, %v1422
      %v1433 = vmul.f32 %v1397, %v1422
      %v1434 = vmul.f32 %v1398, %v1422
      %v1435 = vmul.f32 %v1399, %v1422
      %v1436 = vmul.f32 %v1400, %v1422
      %v1437 = vmul.f32 %v1401, %v1422
      %v1438 = vmul.f32 %v1402, %v1422
      %v1439 = vmul.f32 %v1403, %v1422
      %v1440 = vmul.f32 %v1404, %v1422
      %v1441 = vmul.f32 %v1405, %v1422
      %v1442 = vmul.f32 %v1406, %v1422
      %v1443 = vmul.f32 %v1407, %v1422
      %v1444 = vmul.f32 %v1408, %v1422
      %v1445 = vmul.f32 %v1409, %v1422
      %v1446 = vmul.f32 %v1410, %v1422
      %v1447 = vmul.f32 %v1411, %v1422
      %v1448 = vmul.f32 %v1412, %v1422
      %v1449 = vmul.f32 %v1413, %v1422
      %v1450 = vmul.f32 %v1414, %v1422
      %v1451 = vmul.f32 %v1415, %v1422
      %v1452 = vmul.f32 %v1416, %v1422
      %v1453 = vmul.f32 %v1417, %v1422
      %v1454 = vmul.f32 %v1418, %v1422
      %v1455 = vadd.f32 %v1354, %v1423
      %v1456 = vadd.f32 %v1355, %v1424
      %v1457 = vadd.f32 %v1356, %v1425
      %v1458 = vadd.f32 %v1357, %v1426
      %v1459 = vadd.f32 %v1358, %v1427
      %v1460 = vadd.f32 %v1359, %v1428
      %v1461 = vadd.f32 %v1360, %v1429
      %v1462 = vadd.f32 %v1361, %v1430
      %v1463 = vadd.f32 %v1362, %v1431
      %v1464 = vadd.f32 %v1363, %v1432
      %v1465 = vadd.f32 %v1364, %v1433
      %v1466 = vadd.f32 %v1365, %v1434
      %v1467 = vadd.f32 %v1366, %v1435
      %v1468 = vadd.f32 %v1367, %v1436
      %v1469 = vadd.f32 %v1368, %v1437
      %v1470 = vadd.f32 %v1369, %v1438
      %v1471 = vadd.f32 %v1370, %v1439
      %v1472 = vadd.f32 %v1371, %v1440
      %v1473 = vadd.f32 %v1372, %v1441
      %v1474 = vadd.f32 %v1373, %v1442
      %v1475 = vadd.f32 %v1374, %v1443
      %v1476 = vadd.f32 %v1375, %v1444
      %v1477 = vadd.f32 %v1376, %v1445
      %v1478 = vadd.f32 %v1377, %v1446
      %v1479 = vadd.f32 %v1378, %v1447
      %v1480 = vadd.f32 %v1379, %v1448
      %v1481 = vadd.f32 %v1380, %v1449
      %v1482 = vadd.f32 %v1381, %v1450
      %v1483 = vadd.f32 %v1382, %v1451
      %v1484 = vadd.f32 %v1383, %v1452
      %v1485 = vadd.f32 %v1384, %v1453
      %v1486 = vadd.f32 %v1385, %v1454
      %v1487 = vld [vmem:[%s3 + $0x6] sm:$0x1]
      %s1488 = scalar_lea.vmem [#allocation2], 48
      %v1489 = vld [vmem:[%s1488] sm:$0xff]
      %v1490 = vld [vmem:[%s1488 + $0x8] sm:$0xff]
      %v1491 = vld [vmem:[%s1488 + $0x18] sm:$0xff]
      %v1492 = vld [vmem:[%s1488 + $0x20] sm:$0xff]
      %v1493 = vld [vmem:[%s1488 + $0x30] sm:$0xff]
      %v1494 = vld [vmem:[%s1488 + $0x38] sm:$0xff]
      %v1495 = vld [vmem:[%s1488 + $0x48] sm:$0xff]
      %v1496 = vld [vmem:[%s1488 + $0x50] sm:$0xff]
      %v1497 = vld [vmem:[%s1488 + $0x60] sm:$0xff]
      %v1498 = vld [vmem:[%s1488 + $0x68] sm:$0xff]
      %v1499 = vld [vmem:[%s1488 + $0x78] sm:$0xff]
      %v1500 = vld [vmem:[%s1488 + $0x80] sm:$0xff]
      %v1501 = vld [vmem:[%s1488 + $0x90] sm:$0xff]
      %v1502 = vld [vmem:[%s1488 + $0x98] sm:$0xff]
      %v1503 = vld [vmem:[%s1488 + $0xa8] sm:$0xff]
      %v1504 = vld [vmem:[%s1488 + $0xb0] sm:$0xff]
      %v1505 = vld [vmem:[%s1488 + $0xc0] sm:$0xff]
      %v1506 = vld [vmem:[%s1488 + $0xc8] sm:$0xff]
      %v1507 = vld [vmem:[%s1488 + $0xd8] sm:$0xff]
      %v1508 = vld [vmem:[%s1488 + $0xe0] sm:$0xff]
      %v1509 = vld [vmem:[%s1488 + $0xf0] sm:$0xff]
      %v1510 = vld [vmem:[%s1488 + $0xf8] sm:$0xff]
      %v1511 = vld [vmem:[%s1488 + $0x108] sm:$0xff]
      %v1512 = vld [vmem:[%s1488 + $0x110] sm:$0xff]
      %v1513 = vld [vmem:[%s1488 + $0x120] sm:$0xff]
      %v1514 = vld [vmem:[%s1488 + $0x128] sm:$0xff]
      %v1515 = vld [vmem:[%s1488 + $0x138] sm:$0xff]
      %v1516 = vld [vmem:[%s1488 + $0x140] sm:$0xff]
      %v1517 = vld [vmem:[%s1488 + $0x150] sm:$0xff]
      %v1518 = vld [vmem:[%s1488 + $0x158] sm:$0xff]
      %v1519 = vld [vmem:[%s1488 + $0x168] sm:$0xff]
      %v1520 = vld [vmem:[%s1488 + $0x170] sm:$0xff]
      %v1521 = vlaneseq
      %v1522 = vshrl.u32 %v1521, 7
      %v1523 = vsub.s32 0, %v1522
      %v1524 = vrot.slane %v1487, %v1523
      %v1525 = vmul.f32 %v1489, %v1524
      %v1526 = vmul.f32 %v1490, %v1524
      %v1527 = vmul.f32 %v1491, %v1524
      %v1528 = vmul.f32 %v1492, %v1524
      %v1529 = vmul.f32 %v1493, %v1524
      %v1530 = vmul.f32 %v1494, %v1524
      %v1531 = vmul.f32 %v1495, %v1524
      %v1532 = vmul.f32 %v1496, %v1524
      %v1533 = vmul.f32 %v1497, %v1524
      %v1534 = vmul.f32 %v1498, %v1524
      %v1535 = vmul.f32 %v1499, %v1524
      %v1536 = vmul.f32 %v1500, %v1524
      %v1537 = vmul.f32 %v1501, %v1524
      %v1538 = vmul.f32 %v1502, %v1524
      %v1539 = vmul.f32 %v1503, %v1524
      %v1540 = vmul.f32 %v1504, %v1524
      %v1541 = vmul.f32 %v1505, %v1524
      %v1542 = vmul.f32 %v1506, %v1524
      %v1543 = vmul.f32 %v1507, %v1524
      %v1544 = vmul.f32 %v1508, %v1524
      %v1545 = vmul.f32 %v1509, %v1524
      %v1546 = vmul.f32 %v1510, %v1524
      %v1547 = vmul.f32 %v1511, %v1524
      %v1548 = vmul.f32 %v1512, %v1524
      %v1549 = vmul.f32 %v1513, %v1524
      %v1550 = vmul.f32 %v1514, %v1524
      %v1551 = vmul.f32 %v1515, %v1524
      %v1552 = vmul.f32 %v1516, %v1524
      %v1553 = vmul.f32 %v1517, %v1524
      %v1554 = vmul.f32 %v1518, %v1524
      %v1555 = vmul.f32 %v1519, %v1524
      %v1556 = vmul.f32 %v1520, %v1524
      %v1557 = vadd.f32 %v1455, %v1525
      %v1558 = vadd.f32 %v1456, %v1526
      %v1559 = vadd.f32 %v1457, %v1527
      %v1560 = vadd.f32 %v1458, %v1528
      %v1561 = vadd.f32 %v1459, %v1529
      %v1562 = vadd.f32 %v1460, %v1530
      %v1563 = vadd.f32 %v1461, %v1531
      %v1564 = vadd.f32 %v1462, %v1532
      %v1565 = vadd.f32 %v1463, %v1533
      %v1566 = vadd.f32 %v1464, %v1534
      %v1567 = vadd.f32 %v1465, %v1535
      %v1568 = vadd.f32 %v1466, %v1536
      %v1569 = vadd.f32 %v1467, %v1537
      %v1570 = vadd.f32 %v1468, %v1538
      %v1571 = vadd.f32 %v1469, %v1539
      %v1572 = vadd.f32 %v1470, %v1540
      %v1573 = vadd.f32 %v1471, %v1541
      %v1574 = vadd.f32 %v1472, %v1542
      %v1575 = vadd.f32 %v1473, %v1543
      %v1576 = vadd.f32 %v1474, %v1544
      %v1577 = vadd.f32 %v1475, %v1545
      %v1578 = vadd.f32 %v1476, %v1546
      %v1579 = vadd.f32 %v1477, %v1547
      %v1580 = vadd.f32 %v1478, %v1548
      %v1581 = vadd.f32 %v1479, %v1549
      %v1582 = vadd.f32 %v1480, %v1550
      %v1583 = vadd.f32 %v1481, %v1551
      %v1584 = vadd.f32 %v1482, %v1552
      %v1585 = vadd.f32 %v1483, %v1553
      %v1586 = vadd.f32 %v1484, %v1554
      %v1587 = vadd.f32 %v1485, %v1555
      %v1588 = vadd.f32 %v1486, %v1556
      %v1589 = vld [vmem:[%s3 + $0x7] sm:$0x1]
      %v1590 = vld [vmem:[%s1488 + $0x1] sm:$0xff]
      %v1591 = vld [vmem:[%s1488 + $0x9] sm:$0xff]
      %v1592 = vld [vmem:[%s1488 + $0x19] sm:$0xff]
      %v1593 = vld [vmem:[%s1488 + $0x21] sm:$0xff]
      %v1594 = vld [vmem:[%s1488 + $0x31] sm:$0xff]
      %v1595 = vld [vmem:[%s1488 + $0x39] sm:$0xff]
      %v1596 = vld [vmem:[%s1488 + $0x49] sm:$0xff]
      %v1597 = vld [vmem:[%s1488 + $0x51] sm:$0xff]
      %v1598 = vld [vmem:[%s1488 + $0x61] sm:$0xff]
      %v1599 = vld [vmem:[%s1488 + $0x69] sm:$0xff]
      %v1600 = vld [vmem:[%s1488 + $0x79] sm:$0xff]
      %v1601 = vld [vmem:[%s1488 + $0x81] sm:$0xff]
      %v1602 = vld [vmem:[%s1488 + $0x91] sm:$0xff]
      %v1603 = vld [vmem:[%s1488 + $0x99] sm:$0xff]
      %v1604 = vld [vmem:[%s1488 + $0xa9] sm:$0xff]
      %v1605 = vld [vmem:[%s1488 + $0xb1] sm:$0xff]
      %v1606 = vld [vmem:[%s1488 + $0xc1] sm:$0xff]
      %v1607 = vld [vmem:[%s1488 + $0xc9] sm:$0xff]
      %v1608 = vld [vmem:[%s1488 + $0xd9] sm:$0xff]
      %v1609 = vld [vmem:[%s1488 + $0xe1] sm:$0xff]
      %v1610 = vld [vmem:[%s1488 + $0xf1] sm:$0xff]
      %v1611 = vld [vmem:[%s1488 + $0xf9] sm:$0xff]
      %v1612 = vld [vmem:[%s1488 + $0x109] sm:$0xff]
      %v1613 = vld [vmem:[%s1488 + $0x111] sm:$0xff]
      %v1614 = vld [vmem:[%s1488 + $0x121] sm:$0xff]
      %v1615 = vld [vmem:[%s1488 + $0x129] sm:$0xff]
      %v1616 = vld [vmem:[%s1488 + $0x139] sm:$0xff]
      %v1617 = vld [vmem:[%s1488 + $0x141] sm:$0xff]
      %v1618 = vld [vmem:[%s1488 + $0x151] sm:$0xff]
      %v1619 = vld [vmem:[%s1488 + $0x159] sm:$0xff]
      %v1620 = vld [vmem:[%s1488 + $0x169] sm:$0xff]
      %v1621 = vld [vmem:[%s1488 + $0x171] sm:$0xff]
      %v1622 = vlaneseq
      %v1623 = vshrl.u32 %v1622, 7
      %v1624 = vsub.s32 0, %v1623
      %v1625 = vrot.slane %v1589, %v1624
      %v1626 = vmul.f32 %v1590, %v1625
      %v1627 = vmul.f32 %v1591, %v1625
      %v1628 = vmul.f32 %v1592, %v1625
      %v1629 = vmul.f32 %v1593, %v1625
      %v1630 = vmul.f32 %v1594, %v1625
      %v1631 = vmul.f32 %v1595, %v1625
      %v1632 = vmul.f32 %v1596, %v1625
      %v1633 = vmul.f32 %v1597, %v1625
      %v1634 = vmul.f32 %v1598, %v1625
      %v1635 = vmul.f32 %v1599, %v1625
      %v1636 = vmul.f32 %v1600, %v1625
      %v1637 = vmul.f32 %v1601, %v1625
      %v1638 = vmul.f32 %v1602, %v1625
      %v1639 = vmul.f32 %v1603, %v1625
      %v1640 = vmul.f32 %v1604, %v1625
      %v1641 = vmul.f32 %v1605, %v1625
      %v1642 = vmul.f32 %v1606, %v1625
      %v1643 = vmul.f32 %v1607, %v1625
      %v1644 = vmul.f32 %v1608, %v1625
      %v1645 = vmul.f32 %v1609, %v1625
      %v1646 = vmul.f32 %v1610, %v1625
      %v1647 = vmul.f32 %v1611, %v1625
      %v1648 = vmul.f32 %v1612, %v1625
      %v1649 = vmul.f32 %v1613, %v1625
      %v1650 = vmul.f32 %v1614, %v1625
      %v1651 = vmul.f32 %v1615, %v1625
      %v1652 = vmul.f32 %v1616, %v1625
      %v1653 = vmul.f32 %v1617, %v1625
      %v1654 = vmul.f32 %v1618, %v1625
      %v1655 = vmul.f32 %v1619, %v1625
      %v1656 = vmul.f32 %v1620, %v1625
      %v1657 = vmul.f32 %v1621, %v1625
      %v1658 = vadd.f32 %v1557, %v1626
      %v1659 = vadd.f32 %v1558, %v1627
      %v1660 = vadd.f32 %v1559, %v1628
      %v1661 = vadd.f32 %v1560, %v1629
      %v1662 = vadd.f32 %v1561, %v1630
      %v1663 = vadd.f32 %v1562, %v1631
      %v1664 = vadd.f32 %v1563, %v1632
      %v1665 = vadd.f32 %v1564, %v1633
      %v1666 = vadd.f32 %v1565, %v1634
      %v1667 = vadd.f32 %v1566, %v1635
      %v1668 = vadd.f32 %v1567, %v1636
      %v1669 = vadd.f32 %v1568, %v1637
      %v1670 = vadd.f32 %v1569, %v1638
      %v1671 = vadd.f32 %v1570, %v1639
      %v1672 = vadd.f32 %v1571, %v1640
      %v1673 = vadd.f32 %v1572, %v1641
      %v1674 = vadd.f32 %v1573, %v1642
      %v1675 = vadd.f32 %v1574, %v1643
      %v1676 = vadd.f32 %v1575, %v1644
      %v1677 = vadd.f32 %v1576, %v1645
      %v1678 = vadd.f32 %v1577, %v1646
      %v1679 = vadd.f32 %v1578, %v1647
      %v1680 = vadd.f32 %v1579, %v1648
      %v1681 = vadd.f32 %v1580, %v1649
      %v1682 = vadd.f32 %v1581, %v1650
      %v1683 = vadd.f32 %v1582, %v1651
      %v1684 = vadd.f32 %v1583, %v1652
      %v1685 = vadd.f32 %v1584, %v1653
      %v1686 = vadd.f32 %v1585, %v1654
      %v1687 = vadd.f32 %v1586, %v1655
      %v1688 = vadd.f32 %v1587, %v1656
      %v1689 = vadd.f32 %v1588, %v1657
      %v1690 = vld [vmem:[%s3 + $0x8] sm:$0x1]
      %v1691 = vld [vmem:[%s1488 + $0x2] sm:$0xff]
      %v1692 = vld [vmem:[%s1488 + $0xa] sm:$0xff]
      %v1693 = vld [vmem:[%s1488 + $0x1a] sm:$0xff]
      %v1694 = vld [vmem:[%s1488 + $0x22] sm:$0xff]
      %v1695 = vld [vmem:[%s1488 + $0x32] sm:$0xff]
      %v1696 = vld [vmem:[%s1488 + $0x3a] sm:$0xff]
      %v1697 = vld [vmem:[%s1488 + $0x4a] sm:$0xff]
      %v1698 = vld [vmem:[%s1488 + $0x52] sm:$0xff]
      %v1699 = vld [vmem:[%s1488 + $0x62] sm:$0xff]
      %v1700 = vld [vmem:[%s1488 + $0x6a] sm:$0xff]
      %v1701 = vld [vmem:[%s1488 + $0x7a] sm:$0xff]
      %v1702 = vld [vmem:[%s1488 + $0x82] sm:$0xff]
      %v1703 = vld [vmem:[%s1488 + $0x92] sm:$0xff]
      %v1704 = vld [vmem:[%s1488 + $0x9a] sm:$0xff]
      %v1705 = vld [vmem:[%s1488 + $0xaa] sm:$0xff]
      %v1706 = vld [vmem:[%s1488 + $0xb2] sm:$0xff]
      %v1707 = vld [vmem:[%s1488 + $0xc2] sm:$0xff]
      %v1708 = vld [vmem:[%s1488 + $0xca] sm:$0xff]
      %v1709 = vld [vmem:[%s1488 + $0xda] sm:$0xff]
      %v1710 = vld [vmem:[%s1488 + $0xe2] sm:$0xff]
      %v1711 = vld [vmem:[%s1488 + $0xf2] sm:$0xff]
      %v1712 = vld [vmem:[%s1488 + $0xfa] sm:$0xff]
      %v1713 = vld [vmem:[%s1488 + $0x10a] sm:$0xff]
      %v1714 = vld [vmem:[%s1488 + $0x112] sm:$0xff]
      %v1715 = vld [vmem:[%s1488 + $0x122] sm:$0xff]
      %v1716 = vld [vmem:[%s1488 + $0x12a] sm:$0xff]
      %v1717 = vld [vmem:[%s1488 + $0x13a] sm:$0xff]
      %v1718 = vld [vmem:[%s1488 + $0x142] sm:$0xff]
      %v1719 = vld [vmem:[%s1488 + $0x152] sm:$0xff]
      %v1720 = vld [vmem:[%s1488 + $0x15a] sm:$0xff]
      %v1721 = vld [vmem:[%s1488 + $0x16a] sm:$0xff]
      %v1722 = vld [vmem:[%s1488 + $0x172] sm:$0xff]
      %v1723 = vlaneseq
      %v1724 = vshrl.u32 %v1723, 7
      %v1725 = vsub.s32 0, %v1724
      %v1726 = vrot.slane %v1690, %v1725
      %v1727 = vmul.f32 %v1691, %v1726
      %v1728 = vmul.f32 %v1692, %v1726
      %v1729 = vmul.f32 %v1693, %v1726
      %v1730 = vmul.f32 %v1694, %v1726
      %v1731 = vmul.f32 %v1695, %v1726
      %v1732 = vmul.f32 %v1696, %v1726
      %v1733 = vmul.f32 %v1697, %v1726
      %v1734 = vmul.f32 %v1698, %v1726
      %v1735 = vmul.f32 %v1699, %v1726
      %v1736 = vmul.f32 %v1700, %v1726
      %v1737 = vmul.f32 %v1701, %v1726
      %v1738 = vmul.f32 %v1702, %v1726
      %v1739 = vmul.f32 %v1703, %v1726
      %v1740 = vmul.f32 %v1704, %v1726
      %v1741 = vmul.f32 %v1705, %v1726
      %v1742 = vmul.f32 %v1706, %v1726
      %v1743 = vmul.f32 %v1707, %v1726
      %v1744 = vmul.f32 %v1708, %v1726
      %v1745 = vmul.f32 %v1709, %v1726
      %v1746 = vmul.f32 %v1710, %v1726
      %v1747 = vmul.f32 %v1711, %v1726
      %v1748 = vmul.f32 %v1712, %v1726
      %v1749 = vmul.f32 %v1713, %v1726
      %v1750 = vmul.f32 %v1714, %v1726
      %v1751 = vmul.f32 %v1715, %v1726
      %v1752 = vmul.f32 %v1716, %v1726
      %v1753 = vmul.f32 %v1717, %v1726
      %v1754 = vmul.f32 %v1718, %v1726
      %v1755 = vmul.f32 %v1719, %v1726
      %v1756 = vmul.f32 %v1720, %v1726
      %v1757 = vmul.f32 %v1721, %v1726
      %v1758 = vmul.f32 %v1722, %v1726
      %v1759 = vadd.f32 %v1658, %v1727
      %v1760 = vadd.f32 %v1659, %v1728
      %v1761 = vadd.f32 %v1660, %v1729
      %v1762 = vadd.f32 %v1661, %v1730
      %v1763 = vadd.f32 %v1662, %v1731
      %v1764 = vadd.f32 %v1663, %v1732
      %v1765 = vadd.f32 %v1664, %v1733
      %v1766 = vadd.f32 %v1665, %v1734
      %v1767 = vadd.f32 %v1666, %v1735
      %v1768 = vadd.f32 %v1667, %v1736
      %v1769 = vadd.f32 %v1668, %v1737
      %v1770 = vadd.f32 %v1669, %v1738
      %v1771 = vadd.f32 %v1670, %v1739
      %v1772 = vadd.f32 %v1671, %v1740
      %v1773 = vadd.f32 %v1672, %v1741
      %v1774 = vadd.f32 %v1673, %v1742
      %v1775 = vadd.f32 %v1674, %v1743
      %v1776 = vadd.f32 %v1675, %v1744
      %v1777 = vadd.f32 %v1676, %v1745
      %v1778 = vadd.f32 %v1677, %v1746
      %v1779 = vadd.f32 %v1678, %v1747
      %v1780 = vadd.f32 %v1679, %v1748
      %v1781 = vadd.f32 %v1680, %v1749
      %v1782 = vadd.f32 %v1681, %v1750
      %v1783 = vadd.f32 %v1682, %v1751
      %v1784 = vadd.f32 %v1683, %v1752
      %v1785 = vadd.f32 %v1684, %v1753
      %v1786 = vadd.f32 %v1685, %v1754
      %v1787 = vadd.f32 %v1686, %v1755
      %v1788 = vadd.f32 %v1687, %v1756
      %v1789 = vadd.f32 %v1688, %v1757
      %v1790 = vadd.f32 %v1689, %v1758
      %v1791 = vmul.f32 %v1759, %v1759
      %v1792 = vmul.f32 %v1760, %v1760
      %v1793 = vmul.f32 %v1761, %v1761
      %v1794 = vmul.f32 %v1762, %v1762
      %v1795 = vmul.f32 %v1763, %v1763
      %v1796 = vmul.f32 %v1764, %v1764
      %v1797 = vmul.f32 %v1765, %v1765
      %v1798 = vmul.f32 %v1766, %v1766
      %v1799 = vmul.f32 %v1767, %v1767
      %v1800 = vmul.f32 %v1768, %v1768
      %v1801 = vmul.f32 %v1769, %v1769
      %v1802 = vmul.f32 %v1770, %v1770
      %v1803 = vmul.f32 %v1771, %v1771
      %v1804 = vmul.f32 %v1772, %v1772
      %v1805 = vmul.f32 %v1773, %v1773
      %v1806 = vmul.f32 %v1774, %v1774
      %v1807 = vmul.f32 %v1775, %v1775
      %v1808 = vmul.f32 %v1776, %v1776
      %v1809 = vmul.f32 %v1777, %v1777
      %v1810 = vmul.f32 %v1778, %v1778
      %v1811 = vmul.f32 %v1779, %v1779
      %v1812 = vmul.f32 %v1780, %v1780
      %v1813 = vmul.f32 %v1781, %v1781
      %v1814 = vmul.f32 %v1782, %v1782
      %v1815 = vmul.f32 %v1783, %v1783
      %v1816 = vmul.f32 %v1784, %v1784
      %v1817 = vmul.f32 %v1785, %v1785
      %v1818 = vmul.f32 %v1786, %v1786
      %v1819 = vmul.f32 %v1787, %v1787
      %v1820 = vmul.f32 %v1788, %v1788
      %v1821 = vmul.f32 %v1789, %v1789
      %v1822 = vmul.f32 %v1790, %v1790
      %v1823 = vmul.f32 %v1759, %v1791
      %v1824 = vmul.f32 %v1760, %v1792
      %v1825 = vmul.f32 %v1761, %v1793
      %v1826 = vmul.f32 %v1762, %v1794
      %v1827 = vmul.f32 %v1763, %v1795
      %v1828 = vmul.f32 %v1764, %v1796
      %v1829 = vmul.f32 %v1765, %v1797
      %v1830 = vmul.f32 %v1766, %v1798
      %v1831 = vmul.f32 %v1767, %v1799
      %v1832 = vmul.f32 %v1768, %v1800
      %v1833 = vmul.f32 %v1769, %v1801
      %v1834 = vmul.f32 %v1770, %v1802
      %v1835 = vmul.f32 %v1771, %v1803
      %v1836 = vmul.f32 %v1772, %v1804
      %v1837 = vmul.f32 %v1773, %v1805
      %v1838 = vmul.f32 %v1774, %v1806
      %v1839 = vmul.f32 %v1775, %v1807
      %v1840 = vmul.f32 %v1776, %v1808
      %v1841 = vmul.f32 %v1777, %v1809
      %v1842 = vmul.f32 %v1778, %v1810
      %v1843 = vmul.f32 %v1779, %v1811
      %v1844 = vmul.f32 %v1780, %v1812
      %v1845 = vmul.f32 %v1781, %v1813
      %v1846 = vmul.f32 %v1782, %v1814
      %v1847 = vmul.f32 %v1783, %v1815
      %v1848 = vmul.f32 %v1784, %v1816
      %v1849 = vmul.f32 %v1785, %v1817
      %v1850 = vmul.f32 %v1786, %v1818
      %v1851 = vmul.f32 %v1787, %v1819
      %v1852 = vmul.f32 %v1788, %v1820
      %v1853 = vmul.f32 %v1789, %v1821
      %v1854 = vmul.f32 %v1790, %v1822
      %v1855 = vmul.f32 %v1823, 0.044715
      %v1856 = vmul.f32 %v1824, 0.044715
      %v1857 = vmul.f32 %v1825, 0.044715
      %v1858 = vmul.f32 %v1826, 0.044715
      %v1859 = vmul.f32 %v1827, 0.044715
      %v1860 = vmul.f32 %v1828, 0.044715
      %v1861 = vmul.f32 %v1829, 0.044715
      %v1862 = vmul.f32 %v1830, 0.044715
      %v1863 = vmul.f32 %v1831, 0.044715
      %v1864 = vmul.f32 %v1832, 0.044715
      %v1865 = vmul.f32 %v1833, 0.044715
      %v1866 = vmul.f32 %v1834, 0.044715
      %v1867 = vmul.f32 %v1835, 0.044715
      %v1868 = vmul.f32 %v1836, 0.044715
      %v1869 = vmul.f32 %v1837, 0.044715
      %v1870 = vmul.f32 %v1838, 0.044715
      %v1871 = vmul.f32 %v1839, 0.044715
      %v1872 = vmul.f32 %v1840, 0.044715
      %v1873 = vmul.f32 %v1841, 0.044715
      %v1874 = vmul.f32 %v1842, 0.044715
      %v1875 = vmul.f32 %v1843, 0.044715
      %v1876 = vmul.f32 %v1844, 0.044715
      %v1877 = vmul.f32 %v1845, 0.044715
      %v1878 = vmul.f32 %v1846, 0.044715
      %v1879 = vmul.f32 %v1847, 0.044715
      %v1880 = vmul.f32 %v1848, 0.044715
      %v1881 = vmul.f32 %v1849, 0.044715
      %v1882 = vmul.f32 %v1850, 0.044715
      %v1883 = vmul.f32 %v1851, 0.044715
      %v1884 = vmul.f32 %v1852, 0.044715
      %v1885 = vmul.f32 %v1853, 0.044715
      %v1886 = vmul.f32 %v1854, 0.044715
      %v1887 = vadd.f32 %v1759, %v1855
      %v1888 = vadd.f32 %v1760, %v1856
      %v1889 = vadd.f32 %v1761, %v1857
      %v1890 = vadd.f32 %v1762, %v1858
      %v1891 = vadd.f32 %v1763, %v1859
      %v1892 = vadd.f32 %v1764, %v1860
      %v1893 = vadd.f32 %v1765, %v1861
      %v1894 = vadd.f32 %v1766, %v1862
      %v1895 = vadd.f32 %v1767, %v1863
      %v1896 = vadd.f32 %v1768, %v1864
      %v1897 = vadd.f32 %v1769, %v1865
      %v1898 = vadd.f32 %v1770, %v1866
      %v1899 = vadd.f32 %v1771, %v1867
      %v1900 = vadd.f32 %v1772, %v1868
      %v1901 = vadd.f32 %v1773, %v1869
      %v1902 = vadd.f32 %v1774, %v1870
      %v1903 = vadd.f32 %v1775, %v1871
      %v1904 = vadd.f32 %v1776, %v1872
      %v1905 = vadd.f32 %v1777, %v1873
      %v1906 = vadd.f32 %v1778, %v1874
      %v1907 = vadd.f32 %v1779, %v1875
      %v1908 = vadd.f32 %v1780, %v1876
      %v1909 = vadd.f32 %v1781, %v1877
      %v1910 = vadd.f32 %v1782, %v1878
      %v1911 = vadd.f32 %v1783, %v1879
      %v1912 = vadd.f32 %v1784, %v1880
      %v1913 = vadd.f32 %v1785, %v1881
      %v1914 = vadd.f32 %v1786, %v1882
      %v1915 = vadd.f32 %v1787, %v1883
      %v1916 = vadd.f32 %v1788, %v1884
      %v1917 = vadd.f32 %v1789, %v1885
      %v1918 = vadd.f32 %v1790, %v1886
      %v1919 = vmul.f32 %v1887, 0.7978846
      %v1920 = vmul.f32 %v1888, 0.7978846
      %v1921 = vmul.f32 %v1889, 0.7978846
      %v1922 = vmul.f32 %v1890, 0.7978846
      %v1923 = vmul.f32 %v1891, 0.7978846
      %v1924 = vmul.f32 %v1892, 0.7978846
      %v1925 = vmul.f32 %v1893, 0.7978846
      %v1926 = vmul.f32 %v1894, 0.7978846
      %v1927 = vmul.f32 %v1895, 0.7978846
      %v1928 = vmul.f32 %v1896, 0.7978846
      %v1929 = vmul.f32 %v1897, 0.7978846
      %v1930 = vmul.f32 %v1898, 0.7978846
      %v1931 = vmul.f32 %v1899, 0.7978846
      %v1932 = vmul.f32 %v1900, 0.7978846
      %v1933 = vmul.f32 %v1901, 0.7978846
      %v1934 = vmul.f32 %v1902, 0.7978846
      %v1935 = vmul.f32 %v1903, 0.7978846
      %v1936 = vmul.f32 %v1904, 0.7978846
      %v1937 = vmul.f32 %v1905, 0.7978846
      %v1938 = vmul.f32 %v1906, 0.7978846
      %v1939 = vmul.f32 %v1907, 0.7978846
      %v1940 = vmul.f32 %v1908, 0.7978846
      %v1941 = vmul.f32 %v1909, 0.7978846
      %v1942 = vmul.f32 %v1910, 0.7978846
      %v1943 = vmul.f32 %v1911, 0.7978846
      %v1944 = vmul.f32 %v1912, 0.7978846
      %v1945 = vmul.f32 %v1913, 0.7978846
      %v1946 = vmul.f32 %v1914, 0.7978846
      %v1947 = vmul.f32 %v1915, 0.7978846
      %v1948 = vmul.f32 %v1916, 0.7978846
      %v1949 = vmul.f32 %v1917, 0.7978846
      %v1950 = vmul.f32 %v1918, 0.7978846
      %v1951 = vtanh.pop %v1919
      %v1952 = vtanh.pop %v1920
      %v1953 = vtanh.pop %v1921
      %v1954 = vtanh.pop %v1922
      %v1955 = vtanh.pop %v1923
      %v1956 = vtanh.pop %v1924
      %v1957 = vtanh.pop %v1925
      %v1958 = vtanh.pop %v1926
      %v1959 = vtanh.pop %v1927
      %v1960 = vtanh.pop %v1928
      %v1961 = vtanh.pop %v1929
      %v1962 = vtanh.pop %v1930
      %v1963 = vtanh.pop %v1931
      %v1964 = vtanh.pop %v1932
      %v1965 = vtanh.pop %v1933
      %v1966 = vtanh.pop %v1934
      %v1967 = vtanh.pop %v1935
      %v1968 = vtanh.pop %v1936
      %v1969 = vtanh.pop %v1937
      %v1970 = vtanh.pop %v1938
      %v1971 = vtanh.pop %v1939
      %v1972 = vtanh.pop %v1940
      %v1973 = vtanh.pop %v1941
      %v1974 = vtanh.pop %v1942
      %v1975 = vtanh.pop %v1943
      %v1976 = vtanh.pop %v1944
      %v1977 = vtanh.pop %v1945
      %v1978 = vtanh.pop %v1946
      %v1979 = vtanh.pop %v1947
      %v1980 = vtanh.pop %v1948
      %v1981 = vtanh.pop %v1949
      %v1982 = vtanh.pop %v1950
      %v1983 = vadd.f32 %v1951, 1.0
      %v1984 = vadd.f32 %v1952, 1.0
      %v1985 = vadd.f32 %v1953, 1.0
      %v1986 = vadd.f32 %v1954, 1.0
      %v1987 = vadd.f32 %v1955, 1.0
      %v1988 = vadd.f32 %v1956, 1.0
      %v1989 = vadd.f32 %v1957, 1.0
      %v1990 = vadd.f32 %v1958, 1.0
      %v1991 = vadd.f32 %v1959, 1.0
      %v1992 = vadd.f32 %v1960, 1.0
      %v1993 = vadd.f32 %v1961, 1.0
      %v1994 = vadd.f32 %v1962, 1.0
      %v1995 = vadd.f32 %v1963, 1.0
      %v1996 = vadd.f32 %v1964, 1.0
      %v1997 = vadd.f32 %v1965, 1.0
      %v1998 = vadd.f32 %v1966, 1.0
      %v1999 = vadd.f32 %v1967, 1.0
      %v2000 = vadd.f32 %v1968, 1.0
      %v2001 = vadd.f32 %v1969, 1.0
      %v2002 = vadd.f32 %v1970, 1.0
      %v2003 = vadd.f32 %v1971, 1.0
      %v2004 = vadd.f32 %v1972, 1.0
      %v2005 = vadd.f32 %v1973, 1.0
      %v2006 = vadd.f32 %v1974, 1.0
      %v2007 = vadd.f32 %v1975, 1.0
      %v2008 = vadd.f32 %v1976, 1.0
      %v2009 = vadd.f32 %v1977, 1.0
      %v2010 = vadd.f32 %v1978, 1.0
      %v2011 = vadd.f32 %v1979, 1.0
      %v2012 = vadd.f32 %v1980, 1.0
      %v2013 = vadd.f32 %v1981, 1.0
      %v2014 = vadd.f32 %v1982, 1.0
      %v2015 = vmul.f32 %v1983, 0.5
      %v2016 = vmul.f32 %v1984, 0.5
      %v2017 = vmul.f32 %v1985, 0.5
      %v2018 = vmul.f32 %v1986, 0.5
      %v2019 = vmul.f32 %v1987, 0.5
      %v2020 = vmul.f32 %v1988, 0.5
      %v2021 = vmul.f32 %v1989, 0.5
      %v2022 = vmul.f32 %v1990, 0.5
      %v2023 = vmul.f32 %v1991, 0.5
      %v2024 = vmul.f32 %v1992, 0.5
      %v2025 = vmul.f32 %v1993, 0.5
      %v2026 = vmul.f32 %v1994, 0.5
      %v2027 = vmul.f32 %v1995, 0.5
      %v2028 = vmul.f32 %v1996, 0.5
      %v2029 = vmul.f32 %v1997, 0.5
      %v2030 = vmul.f32 %v1998, 0.5
      %v2031 = vmul.f32 %v1999, 0.5
      %v2032 = vmul.f32 %v2000, 0.5
      %v2033 = vmul.f32 %v2001, 0.5
      %v2034 = vmul.f32 %v2002, 0.5
      %v2035 = vmul.f32 %v2003, 0.5
      %v2036 = vmul.f32 %v2004, 0.5
      %v2037 = vmul.f32 %v2005, 0.5
      %v2038 = vmul.f32 %v2006, 0.5
      %v2039 = vmul.f32 %v2007, 0.5
      %v2040 = vmul.f32 %v2008, 0.5
      %v2041 = vmul.f32 %v2009, 0.5
      %v2042 = vmul.f32 %v2010, 0.5
      %v2043 = vmul.f32 %v2011, 0.5
      %v2044 = vmul.f32 %v2012, 0.5
      %v2045 = vmul.f32 %v2013, 0.5
      %v2046 = vmul.f32 %v2014, 0.5
      %v2047 = vmul.f32 %v1759, %v2015
      %v2048 = vmul.f32 %v1760, %v2016
      %v2049 = vmul.f32 %v1761, %v2017
      %v2050 = vmul.f32 %v1762, %v2018
      %v2051 = vmul.f32 %v1763, %v2019
      %v2052 = vmul.f32 %v1764, %v2020
      %v2053 = vmul.f32 %v1765, %v2021
      %v2054 = vmul.f32 %v1766, %v2022
      %v2055 = vmul.f32 %v1767, %v2023
      %v2056 = vmul.f32 %v1768, %v2024
      %v2057 = vmul.f32 %v1769, %v2025
      %v2058 = vmul.f32 %v1770, %v2026
      %v2059 = vmul.f32 %v1771, %v2027
      %v2060 = vmul.f32 %v1772, %v2028
      %v2061 = vmul.f32 %v1773, %v2029
      %v2062 = vmul.f32 %v1774, %v2030
      %v2063 = vmul.f32 %v1775, %v2031
      %v2064 = vmul.f32 %v1776, %v2032
      %v2065 = vmul.f32 %v1777, %v2033
      %v2066 = vmul.f32 %v1778, %v2034
      %v2067 = vmul.f32 %v1779, %v2035
      %v2068 = vmul.f32 %v1780, %v2036
      %v2069 = vmul.f32 %v1781, %v2037
      %v2070 = vmul.f32 %v1782, %v2038
      %v2071 = vmul.f32 %v1783, %v2039
      %v2072 = vmul.f32 %v1784, %v2040
      %v2073 = vmul.f32 %v1785, %v2041
      %v2074 = vmul.f32 %v1786, %v2042
      %v2075 = vmul.f32 %v1787, %v2043
      %v2076 = vmul.f32 %v1788, %v2044
      %v2077 = vmul.f32 %v1789, %v2045
      %v2078 = vmul.f32 %v1790, %v2046
      %v2079 = vld [vmem:[%s5] sm:$0x1]
      %v2081 = vlaneseq
      %v2082 = vshrl.u32 %v2081, 7
      %v2083 = vsub.s32 0, %v2082
      %v2084 = vrot.slane %v2079, %v2083
      %v2086 = vmul.f32 %v2047, %v2084
      %v2087 = vmul.f32 %v2048, %v2084
      %v2088 = vmul.f32 %v2049, %v2084
      %v2089 = vmul.f32 %v2050, %v2084
      %v2090 = vmul.f32 %v2051, %v2084
      %v2091 = vmul.f32 %v2052, %v2084
      %v2092 = vmul.f32 %v2053, %v2084
      %v2093 = vmul.f32 %v2054, %v2084
      %v2094 = vmul.f32 %v2055, %v2084
      %v2095 = vmul.f32 %v2056, %v2084
      %v2096 = vmul.f32 %v2057, %v2084
      %v2097 = vmul.f32 %v2058, %v2084
      %v2098 = vmul.f32 %v2059, %v2084
      %v2099 = vmul.f32 %v2060, %v2084
      %v2100 = vmul.f32 %v2061, %v2084
      %v2101 = vmul.f32 %v2062, %v2084
      %v2102 = vmul.f32 %v2063, %v2084
      %v2103 = vmul.f32 %v2064, %v2084
      %v2104 = vmul.f32 %v2065, %v2084
      %v2105 = vmul.f32 %v2066, %v2084
      %v2106 = vmul.f32 %v2067, %v2084
      %v2107 = vmul.f32 %v2068, %v2084
      %v2108 = vmul.f32 %v2069, %v2084
      %v2109 = vmul.f32 %v2070, %v2084
      %v2110 = vmul.f32 %v2071, %v2084
      %v2111 = vmul.f32 %v2072, %v2084
      %v2112 = vmul.f32 %v2073, %v2084
      %v2113 = vmul.f32 %v2074, %v2084
      %v2114 = vmul.f32 %v2075, %v2084
      %v2115 = vmul.f32 %v2076, %v2084
      %v2116 = vmul.f32 %v2077, %v2084
      %v2117 = vmul.f32 %v2078, %v2084
      %v2118 = vld [vmem:[%s6] sm:$0x1]
      %v2120 = vlaneseq
      %v2121 = vshrl.u32 %v2120, 7
      %v2122 = vsub.s32 0, %v2121
      %v2123 = vrot.slane %v2118, %v2122
      %v2125 = vadd.f32 %v2086, %v2123
      %v2126 = vadd.f32 %v2087, %v2123
      %v2127 = vadd.f32 %v2088, %v2123
      %v2128 = vadd.f32 %v2089, %v2123
      %v2129 = vadd.f32 %v2090, %v2123
      %v2130 = vadd.f32 %v2091, %v2123
      %v2131 = vadd.f32 %v2092, %v2123
      %v2132 = vadd.f32 %v2093, %v2123
      %v2133 = vadd.f32 %v2094, %v2123
      %v2134 = vadd.f32 %v2095, %v2123
      %v2135 = vadd.f32 %v2096, %v2123
      %v2136 = vadd.f32 %v2097, %v2123
      %v2137 = vadd.f32 %v2098, %v2123
      %v2138 = vadd.f32 %v2099, %v2123
      %v2139 = vadd.f32 %v2100, %v2123
      %v2140 = vadd.f32 %v2101, %v2123
      %v2141 = vadd.f32 %v2102, %v2123
      %v2142 = vadd.f32 %v2103, %v2123
      %v2143 = vadd.f32 %v2104, %v2123
      %v2144 = vadd.f32 %v2105, %v2123
      %v2145 = vadd.f32 %v2106, %v2123
      %v2146 = vadd.f32 %v2107, %v2123
      %v2147 = vadd.f32 %v2108, %v2123
      %v2148 = vadd.f32 %v2109, %v2123
      %v2149 = vadd.f32 %v2110, %v2123
      %v2150 = vadd.f32 %v2111, %v2123
      %v2151 = vadd.f32 %v2112, %v2123
      %v2152 = vadd.f32 %v2113, %v2123
      %v2153 = vadd.f32 %v2114, %v2123
      %v2154 = vadd.f32 %v2115, %v2123
      %v2155 = vadd.f32 %v2116, %v2123
      %v2156 = vadd.f32 %v2117, %v2123
      %2157 = vst [vmem:[%s841 + $0x1] sm:$0xff] %v2125
      %2158 = vst [vmem:[%s841 + $0x9] sm:$0xff] %v2126
      %2159 = vst [vmem:[%s841 + $0x19] sm:$0xff] %v2127
      %2160 = vst [vmem:[%s841 + $0x21] sm:$0xff] %v2128
      %2161 = vst [vmem:[%s841 + $0x31] sm:$0xff] %v2129
      %2162 = vst [vmem:[%s841 + $0x39] sm:$0xff] %v2130
      %2163 = vst [vmem:[%s841 + $0x49] sm:$0xff] %v2131
      %2164 = vst [vmem:[%s841 + $0x51] sm:$0xff] %v2132
      %2165 = vst [vmem:[%s841 + $0x61] sm:$0xff] %v2133
      %2166 = vst [vmem:[%s841 + $0x69] sm:$0xff] %v2134
      %2167 = vst [vmem:[%s841 + $0x79] sm:$0xff] %v2135
      %2168 = vst [vmem:[%s841 + $0x81] sm:$0xff] %v2136
      %2169 = vst [vmem:[%s841 + $0x91] sm:$0xff] %v2137
      %2170 = vst [vmem:[%s841 + $0x99] sm:$0xff] %v2138
      %2171 = vst [vmem:[%s841 + $0xa9] sm:$0xff] %v2139
      %2172 = vst [vmem:[%s841 + $0xb1] sm:$0xff] %v2140
      %2173 = vst [vmem:[%s841 + $0xc1] sm:$0xff] %v2141
      %2174 = vst [vmem:[%s841 + $0xc9] sm:$0xff] %v2142
      %2175 = vst [vmem:[%s841 + $0xd9] sm:$0xff] %v2143
      %2176 = vst [vmem:[%s841 + $0xe1] sm:$0xff] %v2144
      %2177 = vst [vmem:[%s841 + $0xf1] sm:$0xff] %v2145
      %2178 = vst [vmem:[%s841 + $0xf9] sm:$0xff] %v2146
      %2179 = vst [vmem:[%s841 + $0x109] sm:$0xff] %v2147
      %2180 = vst [vmem:[%s841 + $0x111] sm:$0xff] %v2148
      %2181 = vst [vmem:[%s841 + $0x121] sm:$0xff] %v2149
      %2182 = vst [vmem:[%s841 + $0x129] sm:$0xff] %v2150
      %2183 = vst [vmem:[%s841 + $0x139] sm:$0xff] %v2151
      %2184 = vst [vmem:[%s841 + $0x141] sm:$0xff] %v2152
      %2185 = vst [vmem:[%s841 + $0x151] sm:$0xff] %v2153
      %2186 = vst [vmem:[%s841 + $0x159] sm:$0xff] %v2154
      %2187 = vst [vmem:[%s841 + $0x169] sm:$0xff] %v2155
      %2188 = vst [vmem:[%s841 + $0x171] sm:$0xff] %v2156
      %v2189 = vld [vmem:[%s8] sm:$0x1]
      %v2191 = vlaneseq
      %v2192 = vshrl.u32 %v2191, 7
      %v2193 = vsub.s32 0, %v2192
      %v2194 = vrot.slane %v2189, %v2193
      %v2196 = vld [vmem:[%s7] sm:$0x1]
      %v2197 = vld [vmem:[#allocation2] sm:$0xff]
      %v2198 = vld [vmem:[#allocation2 + $0x8] sm:$0xff]
      %v2199 = vld [vmem:[#allocation2 + $0x18] sm:$0xff]
      %v2200 = vld [vmem:[#allocation2 + $0x20] sm:$0xff]
      %v2201 = vld [vmem:[#allocation2 + $0x30] sm:$0xff]
      %v2202 = vld [vmem:[#allocation2 + $0x38] sm:$0xff]
      %v2203 = vld [vmem:[#allocation2 + $0x48] sm:$0xff]
      %v2204 = vld [vmem:[#allocation2 + $0x50] sm:$0xff]
      %v2205 = vld [vmem:[#allocation2 + $0x60] sm:$0xff]
      %v2206 = vld [vmem:[#allocation2 + $0x68] sm:$0xff]
      %v2207 = vld [vmem:[#allocation2 + $0x78] sm:$0xff]
      %v2208 = vld [vmem:[#allocation2 + $0x80] sm:$0xff]
      %v2209 = vld [vmem:[#allocation2 + $0x90] sm:$0xff]
      %v2210 = vld [vmem:[#allocation2 + $0x98] sm:$0xff]
      %v2211 = vld [vmem:[#allocation2 + $0xa8] sm:$0xff]
      %v2212 = vld [vmem:[#allocation2 + $0xb0] sm:$0xff]
      %v2213 = vld [vmem:[#allocation2 + $0xc0] sm:$0xff]
      %v2214 = vld [vmem:[#allocation2 + $0xc8] sm:$0xff]
      %v2215 = vld [vmem:[#allocation2 + $0xd8] sm:$0xff]
      %v2216 = vld [vmem:[#allocation2 + $0xe0] sm:$0xff]
      %v2217 = vld [vmem:[#allocation2 + $0xf0] sm:$0xff]
      %v2218 = vld [vmem:[#allocation2 + $0xf8] sm:$0xff]
      %v2219 = vld [vmem:[#allocation2 + $0x108] sm:$0xff]
      %v2220 = vld [vmem:[#allocation2 + $0x110] sm:$0xff]
      %v2221 = vld [vmem:[#allocation2 + $0x120] sm:$0xff]
      %v2222 = vld [vmem:[#allocation2 + $0x128] sm:$0xff]
      %v2223 = vld [vmem:[#allocation2 + $0x138] sm:$0xff]
      %v2224 = vld [vmem:[#allocation2 + $0x140] sm:$0xff]
      %v2225 = vld [vmem:[#allocation2 + $0x150] sm:$0xff]
      %v2226 = vld [vmem:[#allocation2 + $0x158] sm:$0xff]
      %v2227 = vld [vmem:[#allocation2 + $0x168] sm:$0xff]
      %v2228 = vld [vmem:[#allocation2 + $0x170] sm:$0xff]
      %v2229 = vlaneseq
      %v2230 = vshrl.u32 %v2229, 7
      %v2231 = vsub.s32 0, %v2230
      %v2232 = vrot.slane %v2196, %v2231
      %v2233 = vmul.f32 %v2197, %v2232
      %v2234 = vmul.f32 %v2198, %v2232
      %v2235 = vmul.f32 %v2199, %v2232
      %v2236 = vmul.f32 %v2200, %v2232
      %v2237 = vmul.f32 %v2201, %v2232
      %v2238 = vmul.f32 %v2202, %v2232
      %v2239 = vmul.f32 %v2203, %v2232
      %v2240 = vmul.f32 %v2204, %v2232
      %v2241 = vmul.f32 %v2205, %v2232
      %v2242 = vmul.f32 %v2206, %v2232
      %v2243 = vmul.f32 %v2207, %v2232
      %v2244 = vmul.f32 %v2208, %v2232
      %v2245 = vmul.f32 %v2209, %v2232
      %v2246 = vmul.f32 %v2210, %v2232
      %v2247 = vmul.f32 %v2211, %v2232
      %v2248 = vmul.f32 %v2212, %v2232
      %v2249 = vmul.f32 %v2213, %v2232
      %v2250 = vmul.f32 %v2214, %v2232
      %v2251 = vmul.f32 %v2215, %v2232
      %v2252 = vmul.f32 %v2216, %v2232
      %v2253 = vmul.f32 %v2217, %v2232
      %v2254 = vmul.f32 %v2218, %v2232
      %v2255 = vmul.f32 %v2219, %v2232
      %v2256 = vmul.f32 %v2220, %v2232
      %v2257 = vmul.f32 %v2221, %v2232
      %v2258 = vmul.f32 %v2222, %v2232
      %v2259 = vmul.f32 %v2223, %v2232
      %v2260 = vmul.f32 %v2224, %v2232
      %v2261 = vmul.f32 %v2225, %v2232
      %v2262 = vmul.f32 %v2226, %v2232
      %v2263 = vmul.f32 %v2227, %v2232
      %v2264 = vmul.f32 %v2228, %v2232
      %v2265 = vadd.f32 %v2194, %v2233
      %v2266 = vadd.f32 %v2194, %v2234
      %v2267 = vadd.f32 %v2194, %v2235
      %v2268 = vadd.f32 %v2194, %v2236
      %v2269 = vadd.f32 %v2194, %v2237
      %v2270 = vadd.f32 %v2194, %v2238
      %v2271 = vadd.f32 %v2194, %v2239
      %v2272 = vadd.f32 %v2194, %v2240
      %v2273 = vadd.f32 %v2194, %v2241
      %v2274 = vadd.f32 %v2194, %v2242
      %v2275 = vadd.f32 %v2194, %v2243
      %v2276 = vadd.f32 %v2194, %v2244
      %v2277 = vadd.f32 %v2194, %v2245
      %v2278 = vadd.f32 %v2194, %v2246
      %v2279 = vadd.f32 %v2194, %v2247
      %v2280 = vadd.f32 %v2194, %v2248
      %v2281 = vadd.f32 %v2194, %v2249
      %v2282 = vadd.f32 %v2194, %v2250
      %v2283 = vadd.f32 %v2194, %v2251
      %v2284 = vadd.f32 %v2194, %v2252
      %v2285 = vadd.f32 %v2194, %v2253
      %v2286 = vadd.f32 %v2194, %v2254
      %v2287 = vadd.f32 %v2194, %v2255
      %v2288 = vadd.f32 %v2194, %v2256
      %v2289 = vadd.f32 %v2194, %v2257
      %v2290 = vadd.f32 %v2194, %v2258
      %v2291 = vadd.f32 %v2194, %v2259
      %v2292 = vadd.f32 %v2194, %v2260
      %v2293 = vadd.f32 %v2194, %v2261
      %v2294 = vadd.f32 %v2194, %v2262
      %v2295 = vadd.f32 %v2194, %v2263
      %v2296 = vadd.f32 %v2194, %v2264
      %v2297 = vld [vmem:[%s7 + $0x1] sm:$0x1]
      %v2298 = vld [vmem:[#allocation2 + $0x1] sm:$0xff]
      %v2299 = vld [vmem:[#allocation2 + $0x9] sm:$0xff]
      %v2300 = vld [vmem:[#allocation2 + $0x19] sm:$0xff]
      %v2301 = vld [vmem:[#allocation2 + $0x21] sm:$0xff]
      %v2302 = vld [vmem:[#allocation2 + $0x31] sm:$0xff]
      %v2303 = vld [vmem:[#allocation2 + $0x39] sm:$0xff]
      %v2304 = vld [vmem:[#allocation2 + $0x49] sm:$0xff]
      %v2305 = vld [vmem:[#allocation2 + $0x51] sm:$0xff]
      %v2306 = vld [vmem:[#allocation2 + $0x61] sm:$0xff]
      %v2307 = vld [vmem:[#allocation2 + $0x69] sm:$0xff]
      %v2308 = vld [vmem:[#allocation2 + $0x79] sm:$0xff]
      %v2309 = vld [vmem:[#allocation2 + $0x81] sm:$0xff]
      %v2310 = vld [vmem:[#allocation2 + $0x91] sm:$0xff]
      %v2311 = vld [vmem:[#allocation2 + $0x99] sm:$0xff]
      %v2312 = vld [vmem:[#allocation2 + $0xa9] sm:$0xff]
      %v2313 = vld [vmem:[#allocation2 + $0xb1] sm:$0xff]
      %v2314 = vld [vmem:[#allocation2 + $0xc1] sm:$0xff]
      %v2315 = vld [vmem:[#allocation2 + $0xc9] sm:$0xff]
      %v2316 = vld [vmem:[#allocation2 + $0xd9] sm:$0xff]
      %v2317 = vld [vmem:[#allocation2 + $0xe1] sm:$0xff]
      %v2318 = vld [vmem:[#allocation2 + $0xf1] sm:$0xff]
      %v2319 = vld [vmem:[#allocation2 + $0xf9] sm:$0xff]
      %v2320 = vld [vmem:[#allocation2 + $0x109] sm:$0xff]
      %v2321 = vld [vmem:[#allocation2 + $0x111] sm:$0xff]
      %v2322 = vld [vmem:[#allocation2 + $0x121] sm:$0xff]
      %v2323 = vld [vmem:[#allocation2 + $0x129] sm:$0xff]
      %v2324 = vld [vmem:[#allocation2 + $0x139] sm:$0xff]
      %v2325 = vld [vmem:[#allocation2 + $0x141] sm:$0xff]
      %v2326 = vld [vmem:[#allocation2 + $0x151] sm:$0xff]
      %v2327 = vld [vmem:[#allocation2 + $0x159] sm:$0xff]
      %v2328 = vld [vmem:[#allocation2 + $0x169] sm:$0xff]
      %v2329 = vld [vmem:[#allocation2 + $0x171] sm:$0xff]
      %v2330 = vlaneseq
      %v2331 = vshrl.u32 %v2330, 7
      %v2332 = vsub.s32 0, %v2331
      %v2333 = vrot.slane %v2297, %v2332
      %v2334 = vmul.f32 %v2298, %v2333
      %v2335 = vmul.f32 %v2299, %v2333
      %v2336 = vmul.f32 %v2300, %v2333
      %v2337 = vmul.f32 %v2301, %v2333
      %v2338 = vmul.f32 %v2302, %v2333
      %v2339 = vmul.f32 %v2303, %v2333
      %v2340 = vmul.f32 %v2304, %v2333
      %v2341 = vmul.f32 %v2305, %v2333
      %v2342 = vmul.f32 %v2306, %v2333
      %v2343 = vmul.f32 %v2307, %v2333
      %v2344 = vmul.f32 %v2308, %v2333
      %v2345 = vmul.f32 %v2309, %v2333
      %v2346 = vmul.f32 %v2310, %v2333
      %v2347 = vmul.f32 %v2311, %v2333
      %v2348 = vmul.f32 %v2312, %v2333
      %v2349 = vmul.f32 %v2313, %v2333
      %v2350 = vmul.f32 %v2314, %v2333
      %v2351 = vmul.f32 %v2315, %v2333
      %v2352 = vmul.f32 %v2316, %v2333
      %v2353 = vmul.f32 %v2317, %v2333
      %v2354 = vmul.f32 %v2318, %v2333
      %v2355 = vmul.f32 %v2319, %v2333
      %v2356 = vmul.f32 %v2320, %v2333
      %v2357 = vmul.f32 %v2321, %v2333
      %v2358 = vmul.f32 %v2322, %v2333
      %v2359 = vmul.f32 %v2323, %v2333
      %v2360 = vmul.f32 %v2324, %v2333
      %v2361 = vmul.f32 %v2325, %v2333
      %v2362 = vmul.f32 %v2326, %v2333
      %v2363 = vmul.f32 %v2327, %v2333
      %v2364 = vmul.f32 %v2328, %v2333
      %v2365 = vmul.f32 %v2329, %v2333
      %v2366 = vadd.f32 %v2265, %v2334
      %v2367 = vadd.f32 %v2266, %v2335
      %v2368 = vadd.f32 %v2267, %v2336
      %v2369 = vadd.f32 %v2268, %v2337
      %v2370 = vadd.f32 %v2269, %v2338
      %v2371 = vadd.f32 %v2270, %v2339
      %v2372 = vadd.f32 %v2271, %v2340
      %v2373 = vadd.f32 %v2272, %v2341
      %v2374 = vadd.f32 %v2273, %v2342
      %v2375 = vadd.f32 %v2274, %v2343
      %v2376 = vadd.f32 %v2275, %v2344
      %v2377 = vadd.f32 %v2276, %v2345
      %v2378 = vadd.f32 %v2277, %v2346
      %v2379 = vadd.f32 %v2278, %v2347
      %v2380 = vadd.f32 %v2279, %v2348
      %v2381 = vadd.f32 %v2280, %v2349
      %v2382 = vadd.f32 %v2281, %v2350
      %v2383 = vadd.f32 %v2282, %v2351
      %v2384 = vadd.f32 %v2283, %v2352
      %v2385 = vadd.f32 %v2284, %v2353
      %v2386 = vadd.f32 %v2285, %v2354
      %v2387 = vadd.f32 %v2286, %v2355
      %v2388 = vadd.f32 %v2287, %v2356
      %v2389 = vadd.f32 %v2288, %v2357
      %v2390 = vadd.f32 %v2289, %v2358
      %v2391 = vadd.f32 %v2290, %v2359
      %v2392 = vadd.f32 %v2291, %v2360
      %v2393 = vadd.f32 %v2292, %v2361
      %v2394 = vadd.f32 %v2293, %v2362
      %v2395 = vadd.f32 %v2294, %v2363
      %v2396 = vadd.f32 %v2295, %v2364
      %v2397 = vadd.f32 %v2296, %v2365
      %v2398 = vld [vmem:[%s7 + $0x2] sm:$0x1]
      %v2399 = vld [vmem:[#allocation2 + $0x2] sm:$0xff]
      %v2400 = vld [vmem:[#allocation2 + $0xa] sm:$0xff]
      %v2401 = vld [vmem:[#allocation2 + $0x1a] sm:$0xff]
      %v2402 = vld [vmem:[#allocation2 + $0x22] sm:$0xff]
      %v2403 = vld [vmem:[#allocation2 + $0x32] sm:$0xff]
      %v2404 = vld [vmem:[#allocation2 + $0x3a] sm:$0xff]
      %v2405 = vld [vmem:[#allocation2 + $0x4a] sm:$0xff]
      %v2406 = vld [vmem:[#allocation2 + $0x52] sm:$0xff]
      %v2407 = vld [vmem:[#allocation2 + $0x62] sm:$0xff]
      %v2408 = vld [vmem:[#allocation2 + $0x6a] sm:$0xff]
      %v2409 = vld [vmem:[#allocation2 + $0x7a] sm:$0xff]
      %v2410 = vld [vmem:[#allocation2 + $0x82] sm:$0xff]
      %v2411 = vld [vmem:[#allocation2 + $0x92] sm:$0xff]
      %v2412 = vld [vmem:[#allocation2 + $0x9a] sm:$0xff]
      %v2413 = vld [vmem:[#allocation2 + $0xaa] sm:$0xff]
      %v2414 = vld [vmem:[#allocation2 + $0xb2] sm:$0xff]
      %v2415 = vld [vmem:[#allocation2 + $0xc2] sm:$0xff]
      %v2416 = vld [vmem:[#allocation2 + $0xca] sm:$0xff]
      %v2417 = vld [vmem:[#allocation2 + $0xda] sm:$0xff]
      %v2418 = vld [vmem:[#allocation2 + $0xe2] sm:$0xff]
      %v2419 = vld [vmem:[#allocation2 + $0xf2] sm:$0xff]
      %v2420 = vld [vmem:[#allocation2 + $0xfa] sm:$0xff]
      %v2421 = vld [vmem:[#allocation2 + $0x10a] sm:$0xff]
      %v2422 = vld [vmem:[#allocation2 + $0x112] sm:$0xff]
      %v2423 = vld [vmem:[#allocation2 + $0x122] sm:$0xff]
      %v2424 = vld [vmem:[#allocation2 + $0x12a] sm:$0xff]
      %v2425 = vld [vmem:[#allocation2 + $0x13a] sm:$0xff]
      %v2426 = vld [vmem:[#allocation2 + $0x142] sm:$0xff]
      %v2427 = vld [vmem:[#allocation2 + $0x152] sm:$0xff]
      %v2428 = vld [vmem:[#allocation2 + $0x15a] sm:$0xff]
      %v2429 = vld [vmem:[#allocation2 + $0x16a] sm:$0xff]
      %v2430 = vld [vmem:[#allocation2 + $0x172] sm:$0xff]
      %v2431 = vlaneseq
      %v2432 = vshrl.u32 %v2431, 7
      %v2433 = vsub.s32 0, %v2432
      %v2434 = vrot.slane %v2398, %v2433
      %v2435 = vmul.f32 %v2399, %v2434
      %v2436 = vmul.f32 %v2400, %v2434
      %v2437 = vmul.f32 %v2401, %v2434
      %v2438 = vmul.f32 %v2402, %v2434
      %v2439 = vmul.f32 %v2403, %v2434
      %v2440 = vmul.f32 %v2404, %v2434
      %v2441 = vmul.f32 %v2405, %v2434
      %v2442 = vmul.f32 %v2406, %v2434
      %v2443 = vmul.f32 %v2407, %v2434
      %v2444 = vmul.f32 %v2408, %v2434
      %v2445 = vmul.f32 %v2409, %v2434
      %v2446 = vmul.f32 %v2410, %v2434
      %v2447 = vmul.f32 %v2411, %v2434
      %v2448 = vmul.f32 %v2412, %v2434
      %v2449 = vmul.f32 %v2413, %v2434
      %v2450 = vmul.f32 %v2414, %v2434
      %v2451 = vmul.f32 %v2415, %v2434
      %v2452 = vmul.f32 %v2416, %v2434
      %v2453 = vmul.f32 %v2417, %v2434
      %v2454 = vmul.f32 %v2418, %v2434
      %v2455 = vmul.f32 %v2419, %v2434
      %v2456 = vmul.f32 %v2420, %v2434
      %v2457 = vmul.f32 %v2421, %v2434
      %v2458 = vmul.f32 %v2422, %v2434
      %v2459 = vmul.f32 %v2423, %v2434
      %v2460 = vmul.f32 %v2424, %v2434
      %v2461 = vmul.f32 %v2425, %v2434
      %v2462 = vmul.f32 %v2426, %v2434
      %v2463 = vmul.f32 %v2427, %v2434
      %v2464 = vmul.f32 %v2428, %v2434
      %v2465 = vmul.f32 %v2429, %v2434
      %v2466 = vmul.f32 %v2430, %v2434
      %v2467 = vadd.f32 %v2366, %v2435
      %v2468 = vadd.f32 %v2367, %v2436
      %v2469 = vadd.f32 %v2368, %v2437
      %v2470 = vadd.f32 %v2369, %v2438
      %v2471 = vadd.f32 %v2370, %v2439
      %v2472 = vadd.f32 %v2371, %v2440
      %v2473 = vadd.f32 %v2372, %v2441
      %v2474 = vadd.f32 %v2373, %v2442
      %v2475 = vadd.f32 %v2374, %v2443
      %v2476 = vadd.f32 %v2375, %v2444
      %v2477 = vadd.f32 %v2376, %v2445
      %v2478 = vadd.f32 %v2377, %v2446
      %v2479 = vadd.f32 %v2378, %v2447
      %v2480 = vadd.f32 %v2379, %v2448
      %v2481 = vadd.f32 %v2380, %v2449
      %v2482 = vadd.f32 %v2381, %v2450
      %v2483 = vadd.f32 %v2382, %v2451
      %v2484 = vadd.f32 %v2383, %v2452
      %v2485 = vadd.f32 %v2384, %v2453
      %v2486 = vadd.f32 %v2385, %v2454
      %v2487 = vadd.f32 %v2386, %v2455
      %v2488 = vadd.f32 %v2387, %v2456
      %v2489 = vadd.f32 %v2388, %v2457
      %v2490 = vadd.f32 %v2389, %v2458
      %v2491 = vadd.f32 %v2390, %v2459
      %v2492 = vadd.f32 %v2391, %v2460
      %v2493 = vadd.f32 %v2392, %v2461
      %v2494 = vadd.f32 %v2393, %v2462
      %v2495 = vadd.f32 %v2394, %v2463
      %v2496 = vadd.f32 %v2395, %v2464
      %v2497 = vadd.f32 %v2396, %v2465
      %v2498 = vadd.f32 %v2397, %v2466
      %v2499 = vld [vmem:[%s7 + $0x3] sm:$0x1]
      %v2500 = vld [vmem:[%s841] sm:$0xff]
      %v2501 = vld [vmem:[%s841 + $0x8] sm:$0xff]
      %v2502 = vld [vmem:[%s841 + $0x18] sm:$0xff]
      %v2503 = vld [vmem:[%s841 + $0x20] sm:$0xff]
      %v2504 = vld [vmem:[%s841 + $0x30] sm:$0xff]
      %v2505 = vld [vmem:[%s841 + $0x38] sm:$0xff]
      %v2506 = vld [vmem:[%s841 + $0x48] sm:$0xff]
      %v2507 = vld [vmem:[%s841 + $0x50] sm:$0xff]
      %v2508 = vld [vmem:[%s841 + $0x60] sm:$0xff]
      %v2509 = vld [vmem:[%s841 + $0x68] sm:$0xff]
      %v2510 = vld [vmem:[%s841 + $0x78] sm:$0xff]
      %v2511 = vld [vmem:[%s841 + $0x80] sm:$0xff]
      %v2512 = vld [vmem:[%s841 + $0x90] sm:$0xff]
      %v2513 = vld [vmem:[%s841 + $0x98] sm:$0xff]
      %v2514 = vld [vmem:[%s841 + $0xa8] sm:$0xff]
      %v2515 = vld [vmem:[%s841 + $0xb0] sm:$0xff]
      %v2516 = vld [vmem:[%s841 + $0xc0] sm:$0xff]
      %v2517 = vld [vmem:[%s841 + $0xc8] sm:$0xff]
      %v2518 = vld [vmem:[%s841 + $0xd8] sm:$0xff]
      %v2519 = vld [vmem:[%s841 + $0xe0] sm:$0xff]
      %v2520 = vld [vmem:[%s841 + $0xf0] sm:$0xff]
      %v2521 = vld [vmem:[%s841 + $0xf8] sm:$0xff]
      %v2522 = vld [vmem:[%s841 + $0x108] sm:$0xff]
      %v2523 = vld [vmem:[%s841 + $0x110] sm:$0xff]
      %v2524 = vld [vmem:[%s841 + $0x120] sm:$0xff]
      %v2525 = vld [vmem:[%s841 + $0x128] sm:$0xff]
      %v2526 = vld [vmem:[%s841 + $0x138] sm:$0xff]
      %v2527 = vld [vmem:[%s841 + $0x140] sm:$0xff]
      %v2528 = vld [vmem:[%s841 + $0x150] sm:$0xff]
      %v2529 = vld [vmem:[%s841 + $0x158] sm:$0xff]
      %v2530 = vld [vmem:[%s841 + $0x168] sm:$0xff]
      %v2531 = vld [vmem:[%s841 + $0x170] sm:$0xff]
      %v2532 = vlaneseq
      %v2533 = vshrl.u32 %v2532, 7
      %v2534 = vsub.s32 0, %v2533
      %v2535 = vrot.slane %v2499, %v2534
      %v2536 = vmul.f32 %v2500, %v2535
      %v2537 = vmul.f32 %v2501, %v2535
      %v2538 = vmul.f32 %v2502, %v2535
      %v2539 = vmul.f32 %v2503, %v2535
      %v2540 = vmul.f32 %v2504, %v2535
      %v2541 = vmul.f32 %v2505, %v2535
      %v2542 = vmul.f32 %v2506, %v2535
      %v2543 = vmul.f32 %v2507, %v2535
      %v2544 = vmul.f32 %v2508, %v2535
      %v2545 = vmul.f32 %v2509, %v2535
      %v2546 = vmul.f32 %v2510, %v2535
      %v2547 = vmul.f32 %v2511, %v2535
      %v2548 = vmul.f32 %v2512, %v2535
      %v2549 = vmul.f32 %v2513, %v2535
      %v2550 = vmul.f32 %v2514, %v2535
      %v2551 = vmul.f32 %v2515, %v2535
      %v2552 = vmul.f32 %v2516, %v2535
      %v2553 = vmul.f32 %v2517, %v2535
      %v2554 = vmul.f32 %v2518, %v2535
      %v2555 = vmul.f32 %v2519, %v2535
      %v2556 = vmul.f32 %v2520, %v2535
      %v2557 = vmul.f32 %v2521, %v2535
      %v2558 = vmul.f32 %v2522, %v2535
      %v2559 = vmul.f32 %v2523, %v2535
      %v2560 = vmul.f32 %v2524, %v2535
      %v2561 = vmul.f32 %v2525, %v2535
      %v2562 = vmul.f32 %v2526, %v2535
      %v2563 = vmul.f32 %v2527, %v2535
      %v2564 = vmul.f32 %v2528, %v2535
      %v2565 = vmul.f32 %v2529, %v2535
      %v2566 = vmul.f32 %v2530, %v2535
      %v2567 = vmul.f32 %v2531, %v2535
      %v2568 = vadd.f32 %v2467, %v2536
      %v2569 = vadd.f32 %v2468, %v2537
      %v2570 = vadd.f32 %v2469, %v2538
      %v2571 = vadd.f32 %v2470, %v2539
      %v2572 = vadd.f32 %v2471, %v2540
      %v2573 = vadd.f32 %v2472, %v2541
      %v2574 = vadd.f32 %v2473, %v2542
      %v2575 = vadd.f32 %v2474, %v2543
      %v2576 = vadd.f32 %v2475, %v2544
      %v2577 = vadd.f32 %v2476, %v2545
      %v2578 = vadd.f32 %v2477, %v2546
      %v2579 = vadd.f32 %v2478, %v2547
      %v2580 = vadd.f32 %v2479, %v2548
      %v2581 = vadd.f32 %v2480, %v2549
      %v2582 = vadd.f32 %v2481, %v2550
      %v2583 = vadd.f32 %v2482, %v2551
      %v2584 = vadd.f32 %v2483, %v2552
      %v2585 = vadd.f32 %v2484, %v2553
      %v2586 = vadd.f32 %v2485, %v2554
      %v2587 = vadd.f32 %v2486, %v2555
      %v2588 = vadd.f32 %v2487, %v2556
      %v2589 = vadd.f32 %v2488, %v2557
      %v2590 = vadd.f32 %v2489, %v2558
      %v2591 = vadd.f32 %v2490, %v2559
      %v2592 = vadd.f32 %v2491, %v2560
      %v2593 = vadd.f32 %v2492, %v2561
      %v2594 = vadd.f32 %v2493, %v2562
      %v2595 = vadd.f32 %v2494, %v2563
      %v2596 = vadd.f32 %v2495, %v2564
      %v2597 = vadd.f32 %v2496, %v2565
      %v2598 = vadd.f32 %v2497, %v2566
      %v2599 = vadd.f32 %v2498, %v2567
      %v2600 = vld [vmem:[%s7 + $0x4] sm:$0x1]
      %v2601 = vld [vmem:[%s841 + $0x1] sm:$0xff]
      %v2602 = vld [vmem:[%s841 + $0x9] sm:$0xff]
      %v2603 = vld [vmem:[%s841 + $0x19] sm:$0xff]
      %v2604 = vld [vmem:[%s841 + $0x21] sm:$0xff]
      %v2605 = vld [vmem:[%s841 + $0x31] sm:$0xff]
      %v2606 = vld [vmem:[%s841 + $0x39] sm:$0xff]
      %v2607 = vld [vmem:[%s841 + $0x49] sm:$0xff]
      %v2608 = vld [vmem:[%s841 + $0x51] sm:$0xff]
      %v2609 = vld [vmem:[%s841 + $0x61] sm:$0xff]
      %v2610 = vld [vmem:[%s841 + $0x69] sm:$0xff]
      %v2611 = vld [vmem:[%s841 + $0x79] sm:$0xff]
      %v2612 = vld [vmem:[%s841 + $0x81] sm:$0xff]
      %v2613 = vld [vmem:[%s841 + $0x91] sm:$0xff]
      %v2614 = vld [vmem:[%s841 + $0x99] sm:$0xff]
      %v2615 = vld [vmem:[%s841 + $0xa9] sm:$0xff]
      %v2616 = vld [vmem:[%s841 + $0xb1] sm:$0xff]
      %v2617 = vld [vmem:[%s841 + $0xc1] sm:$0xff]
      %v2618 = vld [vmem:[%s841 + $0xc9] sm:$0xff]
      %v2619 = vld [vmem:[%s841 + $0xd9] sm:$0xff]
      %v2620 = vld [vmem:[%s841 + $0xe1] sm:$0xff]
      %v2621 = vld [vmem:[%s841 + $0xf1] sm:$0xff]
      %v2622 = vld [vmem:[%s841 + $0xf9] sm:$0xff]
      %v2623 = vld [vmem:[%s841 + $0x109] sm:$0xff]
      %v2624 = vld [vmem:[%s841 + $0x111] sm:$0xff]
      %v2625 = vld [vmem:[%s841 + $0x121] sm:$0xff]
      %v2626 = vld [vmem:[%s841 + $0x129] sm:$0xff]
      %v2627 = vld [vmem:[%s841 + $0x139] sm:$0xff]
      %v2628 = vld [vmem:[%s841 + $0x141] sm:$0xff]
      %v2629 = vld [vmem:[%s841 + $0x151] sm:$0xff]
      %v2630 = vld [vmem:[%s841 + $0x159] sm:$0xff]
      %v2631 = vld [vmem:[%s841 + $0x169] sm:$0xff]
      %v2632 = vld [vmem:[%s841 + $0x171] sm:$0xff]
      %v2633 = vlaneseq
      %v2634 = vshrl.u32 %v2633, 7
      %v2635 = vsub.s32 0, %v2634
      %v2636 = vrot.slane %v2600, %v2635
      %v2637 = vmul.f32 %v2601, %v2636
      %v2638 = vmul.f32 %v2602, %v2636
      %v2639 = vmul.f32 %v2603, %v2636
      %v2640 = vmul.f32 %v2604, %v2636
      %v2641 = vmul.f32 %v2605, %v2636
      %v2642 = vmul.f32 %v2606, %v2636
      %v2643 = vmul.f32 %v2607, %v2636
      %v2644 = vmul.f32 %v2608, %v2636
      %v2645 = vmul.f32 %v2609, %v2636
      %v2646 = vmul.f32 %v2610, %v2636
      %v2647 = vmul.f32 %v2611, %v2636
      %v2648 = vmul.f32 %v2612, %v2636
      %v2649 = vmul.f32 %v2613, %v2636
      %v2650 = vmul.f32 %v2614, %v2636
      %v2651 = vmul.f32 %v2615, %v2636
      %v2652 = vmul.f32 %v2616, %v2636
      %v2653 = vmul.f32 %v2617, %v2636
      %v2654 = vmul.f32 %v2618, %v2636
      %v2655 = vmul.f32 %v2619, %v2636
      %v2656 = vmul.f32 %v2620, %v2636
      %v2657 = vmul.f32 %v2621, %v2636
      %v2658 = vmul.f32 %v2622, %v2636
      %v2659 = vmul.f32 %v2623, %v2636
      %v2660 = vmul.f32 %v2624, %v2636
      %v2661 = vmul.f32 %v2625, %v2636
      %v2662 = vmul.f32 %v2626, %v2636
      %v2663 = vmul.f32 %v2627, %v2636
      %v2664 = vmul.f32 %v2628, %v2636
      %v2665 = vmul.f32 %v2629, %v2636
      %v2666 = vmul.f32 %v2630, %v2636
      %v2667 = vmul.f32 %v2631, %v2636
      %v2668 = vmul.f32 %v2632, %v2636
      %v2669 = vadd.f32 %v2568, %v2637
      %v2670 = vadd.f32 %v2569, %v2638
      %v2671 = vadd.f32 %v2570, %v2639
      %v2672 = vadd.f32 %v2571, %v2640
      %v2673 = vadd.f32 %v2572, %v2641
      %v2674 = vadd.f32 %v2573, %v2642
      %v2675 = vadd.f32 %v2574, %v2643
      %v2676 = vadd.f32 %v2575, %v2644
      %v2677 = vadd.f32 %v2576, %v2645
      %v2678 = vadd.f32 %v2577, %v2646
      %v2679 = vadd.f32 %v2578, %v2647
      %v2680 = vadd.f32 %v2579, %v2648
      %v2681 = vadd.f32 %v2580, %v2649
      %v2682 = vadd.f32 %v2581, %v2650
      %v2683 = vadd.f32 %v2582, %v2651
      %v2684 = vadd.f32 %v2583, %v2652
      %v2685 = vadd.f32 %v2584, %v2653
      %v2686 = vadd.f32 %v2585, %v2654
      %v2687 = vadd.f32 %v2586, %v2655
      %v2688 = vadd.f32 %v2587, %v2656
      %v2689 = vadd.f32 %v2588, %v2657
      %v2690 = vadd.f32 %v2589, %v2658
      %v2691 = vadd.f32 %v2590, %v2659
      %v2692 = vadd.f32 %v2591, %v2660
      %v2693 = vadd.f32 %v2592, %v2661
      %v2694 = vadd.f32 %v2593, %v2662
      %v2695 = vadd.f32 %v2594, %v2663
      %v2696 = vadd.f32 %v2595, %v2664
      %v2697 = vadd.f32 %v2596, %v2665
      %v2698 = vadd.f32 %v2597, %v2666
      %v2699 = vadd.f32 %v2598, %v2667
      %v2700 = vadd.f32 %v2599, %v2668
      %v2701 = vld [vmem:[%s7 + $0x5] sm:$0x1]
      %v2702 = vld [vmem:[%s841 + $0x2] sm:$0xff]
      %v2703 = vld [vmem:[%s841 + $0xa] sm:$0xff]
      %v2704 = vld [vmem:[%s841 + $0x1a] sm:$0xff]
      %v2705 = vld [vmem:[%s841 + $0x22] sm:$0xff]
      %v2706 = vld [vmem:[%s841 + $0x32] sm:$0xff]
      %v2707 = vld [vmem:[%s841 + $0x3a] sm:$0xff]
      %v2708 = vld [vmem:[%s841 + $0x4a] sm:$0xff]
      %v2709 = vld [vmem:[%s841 + $0x52] sm:$0xff]
      %v2710 = vld [vmem:[%s841 + $0x62] sm:$0xff]
      %v2711 = vld [vmem:[%s841 + $0x6a] sm:$0xff]
      %v2712 = vld [vmem:[%s841 + $0x7a] sm:$0xff]
      %v2713 = vld [vmem:[%s841 + $0x82] sm:$0xff]
      %v2714 = vld [vmem:[%s841 + $0x92] sm:$0xff]
      %v2715 = vld [vmem:[%s841 + $0x9a] sm:$0xff]
      %v2716 = vld [vmem:[%s841 + $0xaa] sm:$0xff]
      %v2717 = vld [vmem:[%s841 + $0xb2] sm:$0xff]
      %v2718 = vld [vmem:[%s841 + $0xc2] sm:$0xff]
      %v2719 = vld [vmem:[%s841 + $0xca] sm:$0xff]
      %v2720 = vld [vmem:[%s841 + $0xda] sm:$0xff]
      %v2721 = vld [vmem:[%s841 + $0xe2] sm:$0xff]
      %v2722 = vld [vmem:[%s841 + $0xf2] sm:$0xff]
      %v2723 = vld [vmem:[%s841 + $0xfa] sm:$0xff]
      %v2724 = vld [vmem:[%s841 + $0x10a] sm:$0xff]
      %v2725 = vld [vmem:[%s841 + $0x112] sm:$0xff]
      %v2726 = vld [vmem:[%s841 + $0x122] sm:$0xff]
      %v2727 = vld [vmem:[%s841 + $0x12a] sm:$0xff]
      %v2728 = vld [vmem:[%s841 + $0x13a] sm:$0xff]
      %v2729 = vld [vmem:[%s841 + $0x142] sm:$0xff]
      %v2730 = vld [vmem:[%s841 + $0x152] sm:$0xff]
      %v2731 = vld [vmem:[%s841 + $0x15a] sm:$0xff]
      %v2732 = vld [vmem:[%s841 + $0x16a] sm:$0xff]
      %v2733 = vld [vmem:[%s841 + $0x172] sm:$0xff]
      %v2734 = vlaneseq
      %v2735 = vshrl.u32 %v2734, 7
      %v2736 = vsub.s32 0, %v2735
      %v2737 = vrot.slane %v2701, %v2736
      %v2738 = vmul.f32 %v2702, %v2737
      %v2739 = vmul.f32 %v2703, %v2737
      %v2740 = vmul.f32 %v2704, %v2737
      %v2741 = vmul.f32 %v2705, %v2737
      %v2742 = vmul.f32 %v2706, %v2737
      %v2743 = vmul.f32 %v2707, %v2737
      %v2744 = vmul.f32 %v2708, %v2737
      %v2745 = vmul.f32 %v2709, %v2737
      %v2746 = vmul.f32 %v2710, %v2737
      %v2747 = vmul.f32 %v2711, %v2737
      %v2748 = vmul.f32 %v2712, %v2737
      %v2749 = vmul.f32 %v2713, %v2737
      %v2750 = vmul.f32 %v2714, %v2737
      %v2751 = vmul.f32 %v2715, %v2737
      %v2752 = vmul.f32 %v2716, %v2737
      %v2753 = vmul.f32 %v2717, %v2737
      %v2754 = vmul.f32 %v2718, %v2737
      %v2755 = vmul.f32 %v2719, %v2737
      %v2756 = vmul.f32 %v2720, %v2737
      %v2757 = vmul.f32 %v2721, %v2737
      %v2758 = vmul.f32 %v2722, %v2737
      %v2759 = vmul.f32 %v2723, %v2737
      %v2760 = vmul.f32 %v2724, %v2737
      %v2761 = vmul.f32 %v2725, %v2737
      %v2762 = vmul.f32 %v2726, %v2737
      %v2763 = vmul.f32 %v2727, %v2737
      %v2764 = vmul.f32 %v2728, %v2737
      %v2765 = vmul.f32 %v2729, %v2737
      %v2766 = vmul.f32 %v2730, %v2737
      %v2767 = vmul.f32 %v2731, %v2737
      %v2768 = vmul.f32 %v2732, %v2737
      %v2769 = vmul.f32 %v2733, %v2737
      %v2770 = vadd.f32 %v2669, %v2738
      %v2771 = vadd.f32 %v2670, %v2739
      %v2772 = vadd.f32 %v2671, %v2740
      %v2773 = vadd.f32 %v2672, %v2741
      %v2774 = vadd.f32 %v2673, %v2742
      %v2775 = vadd.f32 %v2674, %v2743
      %v2776 = vadd.f32 %v2675, %v2744
      %v2777 = vadd.f32 %v2676, %v2745
      %v2778 = vadd.f32 %v2677, %v2746
      %v2779 = vadd.f32 %v2678, %v2747
      %v2780 = vadd.f32 %v2679, %v2748
      %v2781 = vadd.f32 %v2680, %v2749
      %v2782 = vadd.f32 %v2681, %v2750
      %v2783 = vadd.f32 %v2682, %v2751
      %v2784 = vadd.f32 %v2683, %v2752
      %v2785 = vadd.f32 %v2684, %v2753
      %v2786 = vadd.f32 %v2685, %v2754
      %v2787 = vadd.f32 %v2686, %v2755
      %v2788 = vadd.f32 %v2687, %v2756
      %v2789 = vadd.f32 %v2688, %v2757
      %v2790 = vadd.f32 %v2689, %v2758
      %v2791 = vadd.f32 %v2690, %v2759
      %v2792 = vadd.f32 %v2691, %v2760
      %v2793 = vadd.f32 %v2692, %v2761
      %v2794 = vadd.f32 %v2693, %v2762
      %v2795 = vadd.f32 %v2694, %v2763
      %v2796 = vadd.f32 %v2695, %v2764
      %v2797 = vadd.f32 %v2696, %v2765
      %v2798 = vadd.f32 %v2697, %v2766
      %v2799 = vadd.f32 %v2698, %v2767
      %v2800 = vadd.f32 %v2699, %v2768
      %v2801 = vadd.f32 %v2700, %v2769
      %v2802 = vld [vmem:[%s7 + $0x6] sm:$0x1]
      %v2803 = vld [vmem:[%s1488] sm:$0xff]
      %v2804 = vld [vmem:[%s1488 + $0x8] sm:$0xff]
      %v2805 = vld [vmem:[%s1488 + $0x18] sm:$0xff]
      %v2806 = vld [vmem:[%s1488 + $0x20] sm:$0xff]
      %v2807 = vld [vmem:[%s1488 + $0x30] sm:$0xff]
      %v2808 = vld [vmem:[%s1488 + $0x38] sm:$0xff]
      %v2809 = vld [vmem:[%s1488 + $0x48] sm:$0xff]
      %v2810 = vld [vmem:[%s1488 + $0x50] sm:$0xff]
      %v2811 = vld [vmem:[%s1488 + $0x60] sm:$0xff]
      %v2812 = vld [vmem:[%s1488 + $0x68] sm:$0xff]
      %v2813 = vld [vmem:[%s1488 + $0x78] sm:$0xff]
      %v2814 = vld [vmem:[%s1488 + $0x80] sm:$0xff]
      %v2815 = vld [vmem:[%s1488 + $0x90] sm:$0xff]
      %v2816 = vld [vmem:[%s1488 + $0x98] sm:$0xff]
      %v2817 = vld [vmem:[%s1488 + $0xa8] sm:$0xff]
      %v2818 = vld [vmem:[%s1488 + $0xb0] sm:$0xff]
      %v2819 = vld [vmem:[%s1488 + $0xc0] sm:$0xff]
      %v2820 = vld [vmem:[%s1488 + $0xc8] sm:$0xff]
      %v2821 = vld [vmem:[%s1488 + $0xd8] sm:$0xff]
      %v2822 = vld [vmem:[%s1488 + $0xe0] sm:$0xff]
      %v2823 = vld [vmem:[%s1488 + $0xf0] sm:$0xff]
      %v2824 = vld [vmem:[%s1488 + $0xf8] sm:$0xff]
      %v2825 = vld [vmem:[%s1488 + $0x108] sm:$0xff]
      %v2826 = vld [vmem:[%s1488 + $0x110] sm:$0xff]
      %v2827 = vld [vmem:[%s1488 + $0x120] sm:$0xff]
      %v2828 = vld [vmem:[%s1488 + $0x128] sm:$0xff]
      %v2829 = vld [vmem:[%s1488 + $0x138] sm:$0xff]
      %v2830 = vld [vmem:[%s1488 + $0x140] sm:$0xff]
      %v2831 = vld [vmem:[%s1488 + $0x150] sm:$0xff]
      %v2832 = vld [vmem:[%s1488 + $0x158] sm:$0xff]
      %v2833 = vld [vmem:[%s1488 + $0x168] sm:$0xff]
      %v2834 = vld [vmem:[%s1488 + $0x170] sm:$0xff]
      %v2835 = vlaneseq
      %v2836 = vshrl.u32 %v2835, 7
      %v2837 = vsub.s32 0, %v2836
      %v2838 = vrot.slane %v2802, %v2837
      %v2839 = vmul.f32 %v2803, %v2838
      %v2840 = vmul.f32 %v2804, %v2838
      %v2841 = vmul.f32 %v2805, %v2838
      %v2842 = vmul.f32 %v2806, %v2838
      %v2843 = vmul.f32 %v2807, %v2838
      %v2844 = vmul.f32 %v2808, %v2838
      %v2845 = vmul.f32 %v2809, %v2838
      %v2846 = vmul.f32 %v2810, %v2838
      %v2847 = vmul.f32 %v2811, %v2838
      %v2848 = vmul.f32 %v2812, %v2838
      %v2849 = vmul.f32 %v2813, %v2838
      %v2850 = vmul.f32 %v2814, %v2838
      %v2851 = vmul.f32 %v2815, %v2838
      %v2852 = vmul.f32 %v2816, %v2838
      %v2853 = vmul.f32 %v2817, %v2838
      %v2854 = vmul.f32 %v2818, %v2838
      %v2855 = vmul.f32 %v2819, %v2838
      %v2856 = vmul.f32 %v2820, %v2838
      %v2857 = vmul.f32 %v2821, %v2838
      %v2858 = vmul.f32 %v2822, %v2838
      %v2859 = vmul.f32 %v2823, %v2838
      %v2860 = vmul.f32 %v2824, %v2838
      %v2861 = vmul.f32 %v2825, %v2838
      %v2862 = vmul.f32 %v2826, %v2838
      %v2863 = vmul.f32 %v2827, %v2838
      %v2864 = vmul.f32 %v2828, %v2838
      %v2865 = vmul.f32 %v2829, %v2838
      %v2866 = vmul.f32 %v2830, %v2838
      %v2867 = vmul.f32 %v2831, %v2838
      %v2868 = vmul.f32 %v2832, %v2838
      %v2869 = vmul.f32 %v2833, %v2838
      %v2870 = vmul.f32 %v2834, %v2838
      %v2871 = vadd.f32 %v2770, %v2839
      %v2872 = vadd.f32 %v2771, %v2840
      %v2873 = vadd.f32 %v2772, %v2841
      %v2874 = vadd.f32 %v2773, %v2842
      %v2875 = vadd.f32 %v2774, %v2843
      %v2876 = vadd.f32 %v2775, %v2844
      %v2877 = vadd.f32 %v2776, %v2845
      %v2878 = vadd.f32 %v2777, %v2846
      %v2879 = vadd.f32 %v2778, %v2847
      %v2880 = vadd.f32 %v2779, %v2848
      %v2881 = vadd.f32 %v2780, %v2849
      %v2882 = vadd.f32 %v2781, %v2850
      %v2883 = vadd.f32 %v2782, %v2851
      %v2884 = vadd.f32 %v2783, %v2852
      %v2885 = vadd.f32 %v2784, %v2853
      %v2886 = vadd.f32 %v2785, %v2854
      %v2887 = vadd.f32 %v2786, %v2855
      %v2888 = vadd.f32 %v2787, %v2856
      %v2889 = vadd.f32 %v2788, %v2857
      %v2890 = vadd.f32 %v2789, %v2858
      %v2891 = vadd.f32 %v2790, %v2859
      %v2892 = vadd.f32 %v2791, %v2860
      %v2893 = vadd.f32 %v2792, %v2861
      %v2894 = vadd.f32 %v2793, %v2862
      %v2895 = vadd.f32 %v2794, %v2863
      %v2896 = vadd.f32 %v2795, %v2864
      %v2897 = vadd.f32 %v2796, %v2865
      %v2898 = vadd.f32 %v2797, %v2866
      %v2899 = vadd.f32 %v2798, %v2867
      %v2900 = vadd.f32 %v2799, %v2868
      %v2901 = vadd.f32 %v2800, %v2869
      %v2902 = vadd.f32 %v2801, %v2870
      %v2903 = vld [vmem:[%s7 + $0x7] sm:$0x1]
      %v2904 = vld [vmem:[%s1488 + $0x1] sm:$0xff]
      %v2905 = vld [vmem:[%s1488 + $0x9] sm:$0xff]
      %v2906 = vld [vmem:[%s1488 + $0x19] sm:$0xff]
      %v2907 = vld [vmem:[%s1488 + $0x21] sm:$0xff]
      %v2908 = vld [vmem:[%s1488 + $0x31] sm:$0xff]
      %v2909 = vld [vmem:[%s1488 + $0x39] sm:$0xff]
      %v2910 = vld [vmem:[%s1488 + $0x49] sm:$0xff]
      %v2911 = vld [vmem:[%s1488 + $0x51] sm:$0xff]
      %v2912 = vld [vmem:[%s1488 + $0x61] sm:$0xff]
      %v2913 = vld [vmem:[%s1488 + $0x69] sm:$0xff]
      %v2914 = vld [vmem:[%s1488 + $0x79] sm:$0xff]
      %v2915 = vld [vmem:[%s1488 + $0x81] sm:$0xff]
      %v2916 = vld [vmem:[%s1488 + $0x91] sm:$0xff]
      %v2917 = vld [vmem:[%s1488 + $0x99] sm:$0xff]
      %v2918 = vld [vmem:[%s1488 + $0xa9] sm:$0xff]
      %v2919 = vld [vmem:[%s1488 + $0xb1] sm:$0xff]
      %v2920 = vld [vmem:[%s1488 + $0xc1] sm:$0xff]
      %v2921 = vld [vmem:[%s1488 + $0xc9] sm:$0xff]
      %v2922 = vld [vmem:[%s1488 + $0xd9] sm:$0xff]
      %v2923 = vld [vmem:[%s1488 + $0xe1] sm:$0xff]
      %v2924 = vld [vmem:[%s1488 + $0xf1] sm:$0xff]
      %v2925 = vld [vmem:[%s1488 + $0xf9] sm:$0xff]
      %v2926 = vld [vmem:[%s1488 + $0x109] sm:$0xff]
      %v2927 = vld [vmem:[%s1488 + $0x111] sm:$0xff]
      %v2928 = vld [vmem:[%s1488 + $0x121] sm:$0xff]
      %v2929 = vld [vmem:[%s1488 + $0x129] sm:$0xff]
      %v2930 = vld [vmem:[%s1488 + $0x139] sm:$0xff]
      %v2931 = vld [vmem:[%s1488 + $0x141] sm:$0xff]
      %v2932 = vld [vmem:[%s1488 + $0x151] sm:$0xff]
      %v2933 = vld [vmem:[%s1488 + $0x159] sm:$0xff]
      %v2934 = vld [vmem:[%s1488 + $0x169] sm:$0xff]
      %v2935 = vld [vmem:[%s1488 + $0x171] sm:$0xff]
      %v2936 = vlaneseq
      %v2937 = vshrl.u32 %v2936, 7
      %v2938 = vsub.s32 0, %v2937
      %v2939 = vrot.slane %v2903, %v2938
      %v2940 = vmul.f32 %v2904, %v2939
      %v2941 = vmul.f32 %v2905, %v2939
      %v2942 = vmul.f32 %v2906, %v2939
      %v2943 = vmul.f32 %v2907, %v2939
      %v2944 = vmul.f32 %v2908, %v2939
      %v2945 = vmul.f32 %v2909, %v2939
      %v2946 = vmul.f32 %v2910, %v2939
      %v2947 = vmul.f32 %v2911, %v2939
      %v2948 = vmul.f32 %v2912, %v2939
      %v2949 = vmul.f32 %v2913, %v2939
      %v2950 = vmul.f32 %v2914, %v2939
      %v2951 = vmul.f32 %v2915, %v2939
      %v2952 = vmul.f32 %v2916, %v2939
      %v2953 = vmul.f32 %v2917, %v2939
      %v2954 = vmul.f32 %v2918, %v2939
      %v2955 = vmul.f32 %v2919, %v2939
      %v2956 = vmul.f32 %v2920, %v2939
      %v2957 = vmul.f32 %v2921, %v2939
      %v2958 = vmul.f32 %v2922, %v2939
      %v2959 = vmul.f32 %v2923, %v2939
      %v2960 = vmul.f32 %v2924, %v2939
      %v2961 = vmul.f32 %v2925, %v2939
      %v2962 = vmul.f32 %v2926, %v2939
      %v2963 = vmul.f32 %v2927, %v2939
      %v2964 = vmul.f32 %v2928, %v2939
      %v2965 = vmul.f32 %v2929, %v2939
      %v2966 = vmul.f32 %v2930, %v2939
      %v2967 = vmul.f32 %v2931, %v2939
      %v2968 = vmul.f32 %v2932, %v2939
      %v2969 = vmul.f32 %v2933, %v2939
      %v2970 = vmul.f32 %v2934, %v2939
      %v2971 = vmul.f32 %v2935, %v2939
      %v2972 = vadd.f32 %v2871, %v2940
      %v2973 = vadd.f32 %v2872, %v2941
      %v2974 = vadd.f32 %v2873, %v2942
      %v2975 = vadd.f32 %v2874, %v2943
      %v2976 = vadd.f32 %v2875, %v2944
      %v2977 = vadd.f32 %v2876, %v2945
      %v2978 = vadd.f32 %v2877, %v2946
      %v2979 = vadd.f32 %v2878, %v2947
      %v2980 = vadd.f32 %v2879, %v2948
      %v2981 = vadd.f32 %v2880, %v2949
      %v2982 = vadd.f32 %v2881, %v2950
      %v2983 = vadd.f32 %v2882, %v2951
      %v2984 = vadd.f32 %v2883, %v2952
      %v2985 = vadd.f32 %v2884, %v2953
      %v2986 = vadd.f32 %v2885, %v2954
      %v2987 = vadd.f32 %v2886, %v2955
      %v2988 = vadd.f32 %v2887, %v2956
      %v2989 = vadd.f32 %v2888, %v2957
      %v2990 = vadd.f32 %v2889, %v2958
      %v2991 = vadd.f32 %v2890, %v2959
      %v2992 = vadd.f32 %v2891, %v2960
      %v2993 = vadd.f32 %v2892, %v2961
      %v2994 = vadd.f32 %v2893, %v2962
      %v2995 = vadd.f32 %v2894, %v2963
      %v2996 = vadd.f32 %v2895, %v2964
      %v2997 = vadd.f32 %v2896, %v2965
      %v2998 = vadd.f32 %v2897, %v2966
      %v2999 = vadd.f32 %v2898, %v2967
      %v3000 = vadd.f32 %v2899, %v2968
      %v3001 = vadd.f32 %v2900, %v2969
      %v3002 = vadd.f32 %v2901, %v2970
      %v3003 = vadd.f32 %v2902, %v2971
      %v3004 = vld [vmem:[%s7 + $0x8] sm:$0x1]
      %v3005 = vld [vmem:[%s1488 + $0x2] sm:$0xff]
      %v3006 = vld [vmem:[%s1488 + $0xa] sm:$0xff]
      %v3007 = vld [vmem:[%s1488 + $0x1a] sm:$0xff]
      %v3008 = vld [vmem:[%s1488 + $0x22] sm:$0xff]
      %v3009 = vld [vmem:[%s1488 + $0x32] sm:$0xff]
      %v3010 = vld [vmem:[%s1488 + $0x3a] sm:$0xff]
      %v3011 = vld [vmem:[%s1488 + $0x4a] sm:$0xff]
      %v3012 = vld [vmem:[%s1488 + $0x52] sm:$0xff]
      %v3013 = vld [vmem:[%s1488 + $0x62] sm:$0xff]
      %v3014 = vld [vmem:[%s1488 + $0x6a] sm:$0xff]
      %v3015 = vld [vmem:[%s1488 + $0x7a] sm:$0xff]
      %v3016 = vld [vmem:[%s1488 + $0x82] sm:$0xff]
      %v3017 = vld [vmem:[%s1488 + $0x92] sm:$0xff]
      %v3018 = vld [vmem:[%s1488 + $0x9a] sm:$0xff]
      %v3019 = vld [vmem:[%s1488 + $0xaa] sm:$0xff]
      %v3020 = vld [vmem:[%s1488 + $0xb2] sm:$0xff]
      %v3021 = vld [vmem:[%s1488 + $0xc2] sm:$0xff]
      %v3022 = vld [vmem:[%s1488 + $0xca] sm:$0xff]
      %v3023 = vld [vmem:[%s1488 + $0xda] sm:$0xff]
      %v3024 = vld [vmem:[%s1488 + $0xe2] sm:$0xff]
      %v3025 = vld [vmem:[%s1488 + $0xf2] sm:$0xff]
      %v3026 = vld [vmem:[%s1488 + $0xfa] sm:$0xff]
      %v3027 = vld [vmem:[%s1488 + $0x10a] sm:$0xff]
      %v3028 = vld [vmem:[%s1488 + $0x112] sm:$0xff]
      %v3029 = vld [vmem:[%s1488 + $0x122] sm:$0xff]
      %v3030 = vld [vmem:[%s1488 + $0x12a] sm:$0xff]
      %v3031 = vld [vmem:[%s1488 + $0x13a] sm:$0xff]
      %v3032 = vld [vmem:[%s1488 + $0x142] sm:$0xff]
      %v3033 = vld [vmem:[%s1488 + $0x152] sm:$0xff]
      %v3034 = vld [vmem:[%s1488 + $0x15a] sm:$0xff]
      %v3035 = vld [vmem:[%s1488 + $0x16a] sm:$0xff]
      %v3036 = vld [vmem:[%s1488 + $0x172] sm:$0xff]
      %v3037 = vlaneseq
      %v3038 = vshrl.u32 %v3037, 7
      %v3039 = vsub.s32 0, %v3038
      %v3040 = vrot.slane %v3004, %v3039
      %v3041 = vmul.f32 %v3005, %v3040
      %v3042 = vmul.f32 %v3006, %v3040
      %v3043 = vmul.f32 %v3007, %v3040
      %v3044 = vmul.f32 %v3008, %v3040
      %v3045 = vmul.f32 %v3009, %v3040
      %v3046 = vmul.f32 %v3010, %v3040
      %v3047 = vmul.f32 %v3011, %v3040
      %v3048 = vmul.f32 %v3012, %v3040
      %v3049 = vmul.f32 %v3013, %v3040
      %v3050 = vmul.f32 %v3014, %v3040
      %v3051 = vmul.f32 %v3015, %v3040
      %v3052 = vmul.f32 %v3016, %v3040
      %v3053 = vmul.f32 %v3017, %v3040
      %v3054 = vmul.f32 %v3018, %v3040
      %v3055 = vmul.f32 %v3019, %v3040
      %v3056 = vmul.f32 %v3020, %v3040
      %v3057 = vmul.f32 %v3021, %v3040
      %v3058 = vmul.f32 %v3022, %v3040
      %v3059 = vmul.f32 %v3023, %v3040
      %v3060 = vmul.f32 %v3024, %v3040
      %v3061 = vmul.f32 %v3025, %v3040
      %v3062 = vmul.f32 %v3026, %v3040
      %v3063 = vmul.f32 %v3027, %v3040
      %v3064 = vmul.f32 %v3028, %v3040
      %v3065 = vmul.f32 %v3029, %v3040
      %v3066 = vmul.f32 %v3030, %v3040
      %v3067 = vmul.f32 %v3031, %v3040
      %v3068 = vmul.f32 %v3032, %v3040
      %v3069 = vmul.f32 %v3033, %v3040
      %v3070 = vmul.f32 %v3034, %v3040
      %v3071 = vmul.f32 %v3035, %v3040
      %v3072 = vmul.f32 %v3036, %v3040
      %v3073 = vadd.f32 %v2972, %v3041
      %v3074 = vadd.f32 %v2973, %v3042
      %v3075 = vadd.f32 %v2974, %v3043
      %v3076 = vadd.f32 %v2975, %v3044
      %v3077 = vadd.f32 %v2976, %v3045
      %v3078 = vadd.f32 %v2977, %v3046
      %v3079 = vadd.f32 %v2978, %v3047
      %v3080 = vadd.f32 %v2979, %v3048
      %v3081 = vadd.f32 %v2980, %v3049
      %v3082 = vadd.f32 %v2981, %v3050
      %v3083 = vadd.f32 %v2982, %v3051
      %v3084 = vadd.f32 %v2983, %v3052
      %v3085 = vadd.f32 %v2984, %v3053
      %v3086 = vadd.f32 %v2985, %v3054
      %v3087 = vadd.f32 %v2986, %v3055
      %v3088 = vadd.f32 %v2987, %v3056
      %v3089 = vadd.f32 %v2988, %v3057
      %v3090 = vadd.f32 %v2989, %v3058
      %v3091 = vadd.f32 %v2990, %v3059
      %v3092 = vadd.f32 %v2991, %v3060
      %v3093 = vadd.f32 %v2992, %v3061
      %v3094 = vadd.f32 %v2993, %v3062
      %v3095 = vadd.f32 %v2994, %v3063
      %v3096 = vadd.f32 %v2995, %v3064
      %v3097 = vadd.f32 %v2996, %v3065
      %v3098 = vadd.f32 %v2997, %v3066
      %v3099 = vadd.f32 %v2998, %v3067
      %v3100 = vadd.f32 %v2999, %v3068
      %v3101 = vadd.f32 %v3000, %v3069
      %v3102 = vadd.f32 %v3001, %v3070
      %v3103 = vadd.f32 %v3002, %v3071
      %v3104 = vadd.f32 %v3003, %v3072
      %v3105 = vmul.f32 %v3073, %v3073
      %v3106 = vmul.f32 %v3074, %v3074
      %v3107 = vmul.f32 %v3075, %v3075
      %v3108 = vmul.f32 %v3076, %v3076
      %v3109 = vmul.f32 %v3077, %v3077
      %v3110 = vmul.f32 %v3078, %v3078
      %v3111 = vmul.f32 %v3079, %v3079
      %v3112 = vmul.f32 %v3080, %v3080
      %v3113 = vmul.f32 %v3081, %v3081
      %v3114 = vmul.f32 %v3082, %v3082
      %v3115 = vmul.f32 %v3083, %v3083
      %v3116 = vmul.f32 %v3084, %v3084
      %v3117 = vmul.f32 %v3085, %v3085
      %v3118 = vmul.f32 %v3086, %v3086
      %v3119 = vmul.f32 %v3087, %v3087
      %v3120 = vmul.f32 %v3088, %v3088
      %v3121 = vmul.f32 %v3089, %v3089
      %v3122 = vmul.f32 %v3090, %v3090
      %v3123 = vmul.f32 %v3091, %v3091
      %v3124 = vmul.f32 %v3092, %v3092
      %v3125 = vmul.f32 %v3093, %v3093
      %v3126 = vmul.f32 %v3094, %v3094
      %v3127 = vmul.f32 %v3095, %v3095
      %v3128 = vmul.f32 %v3096, %v3096
      %v3129 = vmul.f32 %v3097, %v3097
      %v3130 = vmul.f32 %v3098, %v3098
      %v3131 = vmul.f32 %v3099, %v3099
      %v3132 = vmul.f32 %v3100, %v3100
      %v3133 = vmul.f32 %v3101, %v3101
      %v3134 = vmul.f32 %v3102, %v3102
      %v3135 = vmul.f32 %v3103, %v3103
      %v3136 = vmul.f32 %v3104, %v3104
      %v3137 = vmul.f32 %v3073, %v3105
      %v3138 = vmul.f32 %v3074, %v3106
      %v3139 = vmul.f32 %v3075, %v3107
      %v3140 = vmul.f32 %v3076, %v3108
      %v3141 = vmul.f32 %v3077, %v3109
      %v3142 = vmul.f32 %v3078, %v3110
      %v3143 = vmul.f32 %v3079, %v3111
      %v3144 = vmul.f32 %v3080, %v3112
      %v3145 = vmul.f32 %v3081, %v3113
      %v3146 = vmul.f32 %v3082, %v3114
      %v3147 = vmul.f32 %v3083, %v3115
      %v3148 = vmul.f32 %v3084, %v3116
      %v3149 = vmul.f32 %v3085, %v3117
      %v3150 = vmul.f32 %v3086, %v3118
      %v3151 = vmul.f32 %v3087, %v3119
      %v3152 = vmul.f32 %v3088, %v3120
      %v3153 = vmul.f32 %v3089, %v3121
      %v3154 = vmul.f32 %v3090, %v3122
      %v3155 = vmul.f32 %v3091, %v3123
      %v3156 = vmul.f32 %v3092, %v3124
      %v3157 = vmul.f32 %v3093, %v3125
      %v3158 = vmul.f32 %v3094, %v3126
      %v3159 = vmul.f32 %v3095, %v3127
      %v3160 = vmul.f32 %v3096, %v3128
      %v3161 = vmul.f32 %v3097, %v3129
      %v3162 = vmul.f32 %v3098, %v3130
      %v3163 = vmul.f32 %v3099, %v3131
      %v3164 = vmul.f32 %v3100, %v3132
      %v3165 = vmul.f32 %v3101, %v3133
      %v3166 = vmul.f32 %v3102, %v3134
      %v3167 = vmul.f32 %v3103, %v3135
      %v3168 = vmul.f32 %v3104, %v3136
      %v3169 = vmul.f32 %v3137, 0.044715
      %v3170 = vmul.f32 %v3138, 0.044715
      %v3171 = vmul.f32 %v3139, 0.044715
      %v3172 = vmul.f32 %v3140, 0.044715
      %v3173 = vmul.f32 %v3141, 0.044715
      %v3174 = vmul.f32 %v3142, 0.044715
      %v3175 = vmul.f32 %v3143, 0.044715
      %v3176 = vmul.f32 %v3144, 0.044715
      %v3177 = vmul.f32 %v3145, 0.044715
      %v3178 = vmul.f32 %v3146, 0.044715
      %v3179 = vmul.f32 %v3147, 0.044715
      %v3180 = vmul.f32 %v3148, 0.044715
      %v3181 = vmul.f32 %v3149, 0.044715
      %v3182 = vmul.f32 %v3150, 0.044715
      %v3183 = vmul.f32 %v3151, 0.044715
      %v3184 = vmul.f32 %v3152, 0.044715
      %v3185 = vmul.f32 %v3153, 0.044715
      %v3186 = vmul.f32 %v3154, 0.044715
      %v3187 = vmul.f32 %v3155, 0.044715
      %v3188 = vmul.f32 %v3156, 0.044715
      %v3189 = vmul.f32 %v3157, 0.044715
      %v3190 = vmul.f32 %v3158, 0.044715
      %v3191 = vmul.f32 %v3159, 0.044715
      %v3192 = vmul.f32 %v3160, 0.044715
      %v3193 = vmul.f32 %v3161, 0.044715
      %v3194 = vmul.f32 %v3162, 0.044715
      %v3195 = vmul.f32 %v3163, 0.044715
      %v3196 = vmul.f32 %v3164, 0.044715
      %v3197 = vmul.f32 %v3165, 0.044715
      %v3198 = vmul.f32 %v3166, 0.044715
      %v3199 = vmul.f32 %v3167, 0.044715
      %v3200 = vmul.f32 %v3168, 0.044715
      %v3201 = vadd.f32 %v3073, %v3169
      %v3202 = vadd.f32 %v3074, %v3170
      %v3203 = vadd.f32 %v3075, %v3171
      %v3204 = vadd.f32 %v3076, %v3172
      %v3205 = vadd.f32 %v3077, %v3173
      %v3206 = vadd.f32 %v3078, %v3174
      %v3207 = vadd.f32 %v3079, %v3175
      %v3208 = vadd.f32 %v3080, %v3176
      %v3209 = vadd.f32 %v3081, %v3177
      %v3210 = vadd.f32 %v3082, %v3178
      %v3211 = vadd.f32 %v3083, %v3179
      %v3212 = vadd.f32 %v3084, %v3180
      %v3213 = vadd.f32 %v3085, %v3181
      %v3214 = vadd.f32 %v3086, %v3182
      %v3215 = vadd.f32 %v3087, %v3183
      %v3216 = vadd.f32 %v3088, %v3184
      %v3217 = vadd.f32 %v3089, %v3185
      %v3218 = vadd.f32 %v3090, %v3186
      %v3219 = vadd.f32 %v3091, %v3187
      %v3220 = vadd.f32 %v3092, %v3188
      %v3221 = vadd.f32 %v3093, %v3189
      %v3222 = vadd.f32 %v3094, %v3190
      %v3223 = vadd.f32 %v3095, %v3191
      %v3224 = vadd.f32 %v3096, %v3192
      %v3225 = vadd.f32 %v3097, %v3193
      %v3226 = vadd.f32 %v3098, %v3194
      %v3227 = vadd.f32 %v3099, %v3195
      %v3228 = vadd.f32 %v3100, %v3196
      %v3229 = vadd.f32 %v3101, %v3197
      %v3230 = vadd.f32 %v3102, %v3198
      %v3231 = vadd.f32 %v3103, %v3199
      %v3232 = vadd.f32 %v3104, %v3200
      %v3233 = vmul.f32 %v3201, 0.7978846
      %v3234 = vmul.f32 %v3202, 0.7978846
      %v3235 = vmul.f32 %v3203, 0.7978846
      %v3236 = vmul.f32 %v3204, 0.7978846
      %v3237 = vmul.f32 %v3205, 0.7978846
      %v3238 = vmul.f32 %v3206, 0.7978846
      %v3239 = vmul.f32 %v3207, 0.7978846
      %v3240 = vmul.f32 %v3208, 0.7978846
      %v3241 = vmul.f32 %v3209, 0.7978846
      %v3242 = vmul.f32 %v3210, 0.7978846
      %v3243 = vmul.f32 %v3211, 0.7978846
      %v3244 = vmul.f32 %v3212, 0.7978846
      %v3245 = vmul.f32 %v3213, 0.7978846
      %v3246 = vmul.f32 %v3214, 0.7978846
      %v3247 = vmul.f32 %v3215, 0.7978846
      %v3248 = vmul.f32 %v3216, 0.7978846
      %v3249 = vmul.f32 %v3217, 0.7978846
      %v3250 = vmul.f32 %v3218, 0.7978846
      %v3251 = vmul.f32 %v3219, 0.7978846
      %v3252 = vmul.f32 %v3220, 0.7978846
      %v3253 = vmul.f32 %v3221, 0.7978846
      %v3254 = vmul.f32 %v3222, 0.7978846
      %v3255 = vmul.f32 %v3223, 0.7978846
      %v3256 = vmul.f32 %v3224, 0.7978846
      %v3257 = vmul.f32 %v3225, 0.7978846
      %v3258 = vmul.f32 %v3226, 0.7978846
      %v3259 = vmul.f32 %v3227, 0.7978846
      %v3260 = vmul.f32 %v3228, 0.7978846
      %v3261 = vmul.f32 %v3229, 0.7978846
      %v3262 = vmul.f32 %v3230, 0.7978846
      %v3263 = vmul.f32 %v3231, 0.7978846
      %v3264 = vmul.f32 %v3232, 0.7978846
      %v3265 = vtanh.pop %v3233
      %v3266 = vtanh.pop %v3234
      %v3267 = vtanh.pop %v3235
      %v3268 = vtanh.pop %v3236
      %v3269 = vtanh.pop %v3237
      %v3270 = vtanh.pop %v3238
      %v3271 = vtanh.pop %v3239
      %v3272 = vtanh.pop %v3240
      %v3273 = vtanh.pop %v3241
      %v3274 = vtanh.pop %v3242
      %v3275 = vtanh.pop %v3243
      %v3276 = vtanh.pop %v3244
      %v3277 = vtanh.pop %v3245
      %v3278 = vtanh.pop %v3246
      %v3279 = vtanh.pop %v3247
      %v3280 = vtanh.pop %v3248
      %v3281 = vtanh.pop %v3249
      %v3282 = vtanh.pop %v3250
      %v3283 = vtanh.pop %v3251
      %v3284 = vtanh.pop %v3252
      %v3285 = vtanh.pop %v3253
      %v3286 = vtanh.pop %v3254
      %v3287 = vtanh.pop %v3255
      %v3288 = vtanh.pop %v3256
      %v3289 = vtanh.pop %v3257
      %v3290 = vtanh.pop %v3258
      %v3291 = vtanh.pop %v3259
      %v3292 = vtanh.pop %v3260
      %v3293 = vtanh.pop %v3261
      %v3294 = vtanh.pop %v3262
      %v3295 = vtanh.pop %v3263
      %v3296 = vtanh.pop %v3264
      %v3297 = vadd.f32 %v3265, 1.0
      %v3298 = vadd.f32 %v3266, 1.0
      %v3299 = vadd.f32 %v3267, 1.0
      %v3300 = vadd.f32 %v3268, 1.0
      %v3301 = vadd.f32 %v3269, 1.0
      %v3302 = vadd.f32 %v3270, 1.0
      %v3303 = vadd.f32 %v3271, 1.0
      %v3304 = vadd.f32 %v3272, 1.0
      %v3305 = vadd.f32 %v3273, 1.0
      %v3306 = vadd.f32 %v3274, 1.0
      %v3307 = vadd.f32 %v3275, 1.0
      %v3308 = vadd.f32 %v3276, 1.0
      %v3309 = vadd.f32 %v3277, 1.0
      %v3310 = vadd.f32 %v3278, 1.0
      %v3311 = vadd.f32 %v3279, 1.0
      %v3312 = vadd.f32 %v3280, 1.0
      %v3313 = vadd.f32 %v3281, 1.0
      %v3314 = vadd.f32 %v3282, 1.0
      %v3315 = vadd.f32 %v3283, 1.0
      %v3316 = vadd.f32 %v3284, 1.0
      %v3317 = vadd.f32 %v3285, 1.0
      %v3318 = vadd.f32 %v3286, 1.0
      %v3319 = vadd.f32 %v3287, 1.0
      %v3320 = vadd.f32 %v3288, 1.0
      %v3321 = vadd.f32 %v3289, 1.0
      %v3322 = vadd.f32 %v3290, 1.0
      %v3323 = vadd.f32 %v3291, 1.0
      %v3324 = vadd.f32 %v3292, 1.0
      %v3325 = vadd.f32 %v3293, 1.0
      %v3326 = vadd.f32 %v3294, 1.0
      %v3327 = vadd.f32 %v3295, 1.0
      %v3328 = vadd.f32 %v3296, 1.0
      %v3329 = vmul.f32 %v3297, 0.5
      %v3330 = vmul.f32 %v3298, 0.5
      %v3331 = vmul.f32 %v3299, 0.5
      %v3332 = vmul.f32 %v3300, 0.5
      %v3333 = vmul.f32 %v3301, 0.5
      %v3334 = vmul.f32 %v3302, 0.5
      %v3335 = vmul.f32 %v3303, 0.5
      %v3336 = vmul.f32 %v3304, 0.5
      %v3337 = vmul.f32 %v3305, 0.5
      %v3338 = vmul.f32 %v3306, 0.5
      %v3339 = vmul.f32 %v3307, 0.5
      %v3340 = vmul.f32 %v3308, 0.5
      %v3341 = vmul.f32 %v3309, 0.5
      %v3342 = vmul.f32 %v3310, 0.5
      %v3343 = vmul.f32 %v3311, 0.5
      %v3344 = vmul.f32 %v3312, 0.5
      %v3345 = vmul.f32 %v3313, 0.5
      %v3346 = vmul.f32 %v3314, 0.5
      %v3347 = vmul.f32 %v3315, 0.5
      %v3348 = vmul.f32 %v3316, 0.5
      %v3349 = vmul.f32 %v3317, 0.5
      %v3350 = vmul.f32 %v3318, 0.5
      %v3351 = vmul.f32 %v3319, 0.5
      %v3352 = vmul.f32 %v3320, 0.5
      %v3353 = vmul.f32 %v3321, 0.5
      %v3354 = vmul.f32 %v3322, 0.5
      %v3355 = vmul.f32 %v3323, 0.5
      %v3356 = vmul.f32 %v3324, 0.5
      %v3357 = vmul.f32 %v3325, 0.5
      %v3358 = vmul.f32 %v3326, 0.5
      %v3359 = vmul.f32 %v3327, 0.5
      %v3360 = vmul.f32 %v3328, 0.5
      %v3361 = vmul.f32 %v3073, %v3329
      %v3362 = vmul.f32 %v3074, %v3330
      %v3363 = vmul.f32 %v3075, %v3331
      %v3364 = vmul.f32 %v3076, %v3332
      %v3365 = vmul.f32 %v3077, %v3333
      %v3366 = vmul.f32 %v3078, %v3334
      %v3367 = vmul.f32 %v3079, %v3335
      %v3368 = vmul.f32 %v3080, %v3336
      %v3369 = vmul.f32 %v3081, %v3337
      %v3370 = vmul.f32 %v3082, %v3338
      %v3371 = vmul.f32 %v3083, %v3339
      %v3372 = vmul.f32 %v3084, %v3340
      %v3373 = vmul.f32 %v3085, %v3341
      %v3374 = vmul.f32 %v3086, %v3342
      %v3375 = vmul.f32 %v3087, %v3343
      %v3376 = vmul.f32 %v3088, %v3344
      %v3377 = vmul.f32 %v3089, %v3345
      %v3378 = vmul.f32 %v3090, %v3346
      %v3379 = vmul.f32 %v3091, %v3347
      %v3380 = vmul.f32 %v3092, %v3348
      %v3381 = vmul.f32 %v3093, %v3349
      %v3382 = vmul.f32 %v3094, %v3350
      %v3383 = vmul.f32 %v3095, %v3351
      %v3384 = vmul.f32 %v3096, %v3352
      %v3385 = vmul.f32 %v3097, %v3353
      %v3386 = vmul.f32 %v3098, %v3354
      %v3387 = vmul.f32 %v3099, %v3355
      %v3388 = vmul.f32 %v3100, %v3356
      %v3389 = vmul.f32 %v3101, %v3357
      %v3390 = vmul.f32 %v3102, %v3358
      %v3391 = vmul.f32 %v3103, %v3359
      %v3392 = vmul.f32 %v3104, %v3360
      %v3393 = vld [vmem:[%s9] sm:$0x1]
      %v3395 = vlaneseq
      %v3396 = vshrl.u32 %v3395, 7
      %v3397 = vsub.s32 0, %v3396
      %v3398 = vrot.slane %v3393, %v3397
      %v3400 = vmul.f32 %v3361, %v3398
      %v3401 = vmul.f32 %v3362, %v3398
      %v3402 = vmul.f32 %v3363, %v3398
      %v3403 = vmul.f32 %v3364, %v3398
      %v3404 = vmul.f32 %v3365, %v3398
      %v3405 = vmul.f32 %v3366, %v3398
      %v3406 = vmul.f32 %v3367, %v3398
      %v3407 = vmul.f32 %v3368, %v3398
      %v3408 = vmul.f32 %v3369, %v3398
      %v3409 = vmul.f32 %v3370, %v3398
      %v3410 = vmul.f32 %v3371, %v3398
      %v3411 = vmul.f32 %v3372, %v3398
      %v3412 = vmul.f32 %v3373, %v3398
      %v3413 = vmul.f32 %v3374, %v3398
      %v3414 = vmul.f32 %v3375, %v3398
      %v3415 = vmul.f32 %v3376, %v3398
      %v3416 = vmul.f32 %v3377, %v3398
      %v3417 = vmul.f32 %v3378, %v3398
      %v3418 = vmul.f32 %v3379, %v3398
      %v3419 = vmul.f32 %v3380, %v3398
      %v3420 = vmul.f32 %v3381, %v3398
      %v3421 = vmul.f32 %v3382, %v3398
      %v3422 = vmul.f32 %v3383, %v3398
      %v3423 = vmul.f32 %v3384, %v3398
      %v3424 = vmul.f32 %v3385, %v3398
      %v3425 = vmul.f32 %v3386, %v3398
      %v3426 = vmul.f32 %v3387, %v3398
      %v3427 = vmul.f32 %v3388, %v3398
      %v3428 = vmul.f32 %v3389, %v3398
      %v3429 = vmul.f32 %v3390, %v3398
      %v3430 = vmul.f32 %v3391, %v3398
      %v3431 = vmul.f32 %v3392, %v3398
      %v3432 = vld [vmem:[%s10] sm:$0x1]
      %v3434 = vlaneseq
      %v3435 = vshrl.u32 %v3434, 7
      %v3436 = vsub.s32 0, %v3435
      %v3437 = vrot.slane %v3432, %v3436
      %v3439 = vadd.f32 %v3400, %v3437
      %v3440 = vadd.f32 %v3401, %v3437
      %v3441 = vadd.f32 %v3402, %v3437
      %v3442 = vadd.f32 %v3403, %v3437
      %v3443 = vadd.f32 %v3404, %v3437
      %v3444 = vadd.f32 %v3405, %v3437
      %v3445 = vadd.f32 %v3406, %v3437
      %v3446 = vadd.f32 %v3407, %v3437
      %v3447 = vadd.f32 %v3408, %v3437
      %v3448 = vadd.f32 %v3409, %v3437
      %v3449 = vadd.f32 %v3410, %v3437
      %v3450 = vadd.f32 %v3411, %v3437
      %v3451 = vadd.f32 %v3412, %v3437
      %v3452 = vadd.f32 %v3413, %v3437
      %v3453 = vadd.f32 %v3414, %v3437
      %v3454 = vadd.f32 %v3415, %v3437
      %v3455 = vadd.f32 %v3416, %v3437
      %v3456 = vadd.f32 %v3417, %v3437
      %v3457 = vadd.f32 %v3418, %v3437
      %v3458 = vadd.f32 %v3419, %v3437
      %v3459 = vadd.f32 %v3420, %v3437
      %v3460 = vadd.f32 %v3421, %v3437
      %v3461 = vadd.f32 %v3422, %v3437
      %v3462 = vadd.f32 %v3423, %v3437
      %v3463 = vadd.f32 %v3424, %v3437
      %v3464 = vadd.f32 %v3425, %v3437
      %v3465 = vadd.f32 %v3426, %v3437
      %v3466 = vadd.f32 %v3427, %v3437
      %v3467 = vadd.f32 %v3428, %v3437
      %v3468 = vadd.f32 %v3429, %v3437
      %v3469 = vadd.f32 %v3430, %v3437
      %v3470 = vadd.f32 %v3431, %v3437
      %v3471 = vadd.f32 %v2125, %v3439
      %v3472 = vadd.f32 %v2126, %v3440
      %v3473 = vadd.f32 %v2127, %v3441
      %v3474 = vadd.f32 %v2128, %v3442
      %v3475 = vadd.f32 %v2129, %v3443
      %v3476 = vadd.f32 %v2130, %v3444
      %v3477 = vadd.f32 %v2131, %v3445
      %v3478 = vadd.f32 %v2132, %v3446
      %v3479 = vadd.f32 %v2133, %v3447
      %v3480 = vadd.f32 %v2134, %v3448
      %v3481 = vadd.f32 %v2135, %v3449
      %v3482 = vadd.f32 %v2136, %v3450
      %v3483 = vadd.f32 %v2137, %v3451
      %v3484 = vadd.f32 %v2138, %v3452
      %v3485 = vadd.f32 %v2139, %v3453
      %v3486 = vadd.f32 %v2140, %v3454
      %v3487 = vadd.f32 %v2141, %v3455
      %v3488 = vadd.f32 %v2142, %v3456
      %v3489 = vadd.f32 %v2143, %v3457
      %v3490 = vadd.f32 %v2144, %v3458
      %v3491 = vadd.f32 %v2145, %v3459
      %v3492 = vadd.f32 %v2146, %v3460
      %v3493 = vadd.f32 %v2147, %v3461
      %v3494 = vadd.f32 %v2148, %v3462
      %v3495 = vadd.f32 %v2149, %v3463
      %v3496 = vadd.f32 %v2150, %v3464
      %v3497 = vadd.f32 %v2151, %v3465
      %v3498 = vadd.f32 %v2152, %v3466
      %v3499 = vadd.f32 %v2153, %v3467
      %v3500 = vadd.f32 %v2154, %v3468
      %v3501 = vadd.f32 %v2155, %v3469
      %v3502 = vadd.f32 %v2156, %v3470
      %v3503 = vpack.c.bf16 %v3472, %v3471
      %v3504 = vpack.c.bf16 %v3474, %v3473
      %v3505 = vpack.c.bf16 %v3476, %v3475
      %v3506 = vpack.c.bf16 %v3478, %v3477
      %v3507 = vpack.c.bf16 %v3480, %v3479
      %v3508 = vpack.c.bf16 %v3482, %v3481
      %v3509 = vpack.c.bf16 %v3484, %v3483
      %v3510 = vpack.c.bf16 %v3486, %v3485
      %v3511 = vpack.c.bf16 %v3488, %v3487
      %v3512 = vpack.c.bf16 %v3490, %v3489
      %v3513 = vpack.c.bf16 %v3492, %v3491
      %v3514 = vpack.c.bf16 %v3494, %v3493
      %v3515 = vpack.c.bf16 %v3496, %v3495
      %v3516 = vpack.c.bf16 %v3498, %v3497
      %v3517 = vpack.c.bf16 %v3500, %v3499
      %v3518 = vpack.c.bf16 %v3502, %v3501
      %v3519 = vld [vmem:[%s11] sm:$0xf]
      %v3520 = vld [vmem:[%s11 + $0x4] sm:$0xf]
      %v3521 = vld [vmem:[%s11 + $0x8] sm:$0xf]
      %v3522 = vld [vmem:[%s11 + $0xc] sm:$0xf]
      %v3523 = vld [vmem:[%s11 + $0x10] sm:$0xf]
      %v3524 = vld [vmem:[%s11 + $0x14] sm:$0xf]
      %v3525 = vld [vmem:[%s11 + $0x18] sm:$0xf]
      %v3526 = vld [vmem:[%s11 + $0x1c] sm:$0xf]
      %v3527 = vld [vmem:[%s11 + $0x20] sm:$0xf]
      %v3528 = vld [vmem:[%s11 + $0x24] sm:$0xf]
      %v3529 = vld [vmem:[%s11 + $0x28] sm:$0xf]
      %v3530 = vld [vmem:[%s11 + $0x2c] sm:$0xf]
      %v3531 = vld [vmem:[%s11 + $0x30] sm:$0xf]
      %v3532 = vld [vmem:[%s11 + $0x34] sm:$0xf]
      %v3533 = vld [vmem:[%s11 + $0x38] sm:$0xf]
      %v3534 = vld [vmem:[%s11 + $0x3c] sm:$0xf]
      %v3535 = vld [vmem:[%s12] sm:$0x1]
      %v3537 = vlaneseq
      %v3538 = vshrl.u32 %v3537, 7
      %v3539 = vsub.s32 0, %v3538
      %v3540 = vrot.slane %v3535, %v3539
      %v3558 = vunpack.c.l.b16 %v3519
      %v3559 = vunpack.c.l.b16 %v3520
      %v3560 = vunpack.c.l.b16 %v3521
      %v3561 = vunpack.c.l.b16 %v3522
      %v3562 = vunpack.c.l.b16 %v3523
      %v3563 = vunpack.c.l.b16 %v3524
      %v3564 = vunpack.c.l.b16 %v3525
      %v3565 = vunpack.c.l.b16 %v3526
      %v3566 = vunpack.c.l.b16 %v3527
      %v3567 = vunpack.c.l.b16 %v3528
      %v3568 = vunpack.c.l.b16 %v3529
      %v3569 = vunpack.c.l.b16 %v3530
      %v3570 = vunpack.c.l.b16 %v3531
      %v3571 = vunpack.c.l.b16 %v3532
      %v3572 = vunpack.c.l.b16 %v3533
      %v3573 = vunpack.c.l.b16 %v3534
      %v3574 = vpack.c.b16 %v3559, %v3558
      %v3575 = vpack.c.b16 %v3561, %v3560
      %v3576 = vpack.c.b16 %v3563, %v3562
      %v3577 = vpack.c.b16 %v3565, %v3564
      %v3578 = vpack.c.b16 %v3567, %v3566
      %v3579 = vpack.c.b16 %v3569, %v3568
      %v3580 = vpack.c.b16 %v3571, %v3570
      %v3581 = vpack.c.b16 %v3573, %v3572
      %3590 = vmatprep.subr.bf16.mxu0 0
      %3591 = vmatpush1.bf16.msra.mxu0 %v3574
      %3592 = vmatprep.subr.bf16.mxu0 0
      %3593 = vmatpush1.bf16.msra.mxu0 %v3575
      %3594 = vmatprep.subr.bf16.mxu0 0
      %3595 = vmatpush1.bf16.msra.mxu0 %v3576
      %3596 = vmatprep.subr.bf16.mxu0 0
      %3597 = vmatpush1.bf16.msra.mxu0 %v3577
      %3598 = vmatprep.subr.bf16.mxu0 0
      %3599 = vmatpush1.bf16.msra.mxu0 %v3578
      %3600 = vmatprep.subr.bf16.mxu0 0
      %3601 = vmatpush1.bf16.msra.mxu0 %v3579
      %3602 = vmatprep.subr.bf16.mxu0 0
      %3603 = vmatpush1.bf16.msra.mxu0 %v3580
      %3604 = vmatprep.subr.bf16.mxu0 0
      %3605 = vmatpush1.bf16.msra.mxu0 %v3581
      %3606 = vmatprep.subr.bf16.mxu0 0
      %3607 = vmatpush1.bf16.msra.mxu0 0
      %3608 = vmatprep.subr.bf16.mxu0 0
      %3609 = vmatpush1.bf16.msra.mxu0 0
      %3610 = vmatprep.subr.bf16.mxu0 0
      %3611 = vmatpush1.bf16.msra.mxu0 0
      %3612 = vmatprep.subr.bf16.mxu0 0
      %3613 = vmatpush1.bf16.msra.mxu0 0
      %3614 = vmatprep.subr.bf16.mxu0 0
      %3615 = vmatpush1.bf16.msra.mxu0 0
      %3616 = vmatprep.subr.bf16.mxu0 0
      %3617 = vmatpush1.bf16.msra.mxu0 0
      %3618 = vmatprep.subr.bf16.mxu0 0
      %3619 = vmatpush1.bf16.msra.mxu0 0
      %3620 = vmatprep.subr.bf16.mxu0 0
      %3621 = vmatpush1.bf16.msra.mxu0 0
      %3622 = vmatprep.mubr.bf16.mxu0 0
      %3623 = vmatmul.mubr.bf16.gmra.mrb[0].mxu0 %v3503
      %v3624 = vpop.f32.mrb[0].mxu0
      %v3625 = vadd.f32 %v3540, %v3624
      %v3626 = vpop.f32.mrb[0].mxu0
      %v3627 = vpop.f32.mrb[0].mxu0
      %v3628 = vadd.f32 %v3540, %v3627
      %v3629 = vpop.f32.mrb[0].mxu0
      %3630 = vmatprep.mubr.bf16.mxu0 0
      %3631 = vmatmul.mubr.bf16.gmra.mrb[0].mxu0 %v3504
      %v3632 = vpop.f32.mrb[0].mxu0
      %v3633 = vadd.f32 %v3540, %v3632
      %v3634 = vpop.f32.mrb[0].mxu0
      %v3635 = vpop.f32.mrb[0].mxu0
      %v3636 = vadd.f32 %v3540, %v3635
      %v3637 = vpop.f32.mrb[0].mxu0
      %3638 = vmatprep.mubr.bf16.mxu0 0
      %3639 = vmatmul.mubr.bf16.gmra.mrb[0].mxu0 %v3505
      %v3640 = vpop.f32.mrb[0].mxu0
      %v3641 = vadd.f32 %v3540, %v3640
      %v3642 = vpop.f32.mrb[0].mxu0
      %v3643 = vpop.f32.mrb[0].mxu0
      %v3644 = vadd.f32 %v3540, %v3643
      %v3645 = vpop.f32.mrb[0].mxu0
      %3646 = vmatprep.mubr.bf16.mxu0 0
      %3647 = vmatmul.mubr.bf16.gmra.mrb[0].mxu0 %v3506
      %v3648 = vpop.f32.mrb[0].mxu0
      %v3649 = vadd.f32 %v3540, %v3648
      %v3650 = vpop.f32.mrb[0].mxu0
      %v3651 = vpop.f32.mrb[0].mxu0
      %v3652 = vadd.f32 %v3540, %v3651
      %v3653 = vpop.f32.mrb[0].mxu0
      %3654 = vmatprep.mubr.bf16.mxu0 0
      %3655 = vmatmul.mubr.bf16.gmra.mrb[0].mxu0 %v3507
      %v3656 = vpop.f32.mrb[0].mxu0
      %v3657 = vadd.f32 %v3540, %v3656
      %v3658 = vpop.f32.mrb[0].mxu0
      %v3659 = vpop.f32.mrb[0].mxu0
      %v3660 = vadd.f32 %v3540, %v3659
      %v3661 = vpop.f32.mrb[0].mxu0
      %3662 = vmatprep.mubr.bf16.mxu0 0
      %3663 = vmatmul.mubr.bf16.gmra.mrb[0].mxu0 %v3508
      %v3664 = vpop.f32.mrb[0].mxu0
      %v3665 = vadd.f32 %v3540, %v3664
      %v3666 = vpop.f32.mrb[0].mxu0
      %v3667 = vpop.f32.mrb[0].mxu0
      %v3668 = vadd.f32 %v3540, %v3667
      %v3669 = vpop.f32.mrb[0].mxu0
      %3670 = vmatprep.mubr.bf16.mxu0 0
      %3671 = vmatmul.mubr.bf16.gmra.mrb[0].mxu0 %v3509
      %v3672 = vpop.f32.mrb[0].mxu0
      %v3673 = vadd.f32 %v3540, %v3672
      %v3674 = vpop.f32.mrb[0].mxu0
      %v3675 = vpop.f32.mrb[0].mxu0
      %v3676 = vadd.f32 %v3540, %v3675
      %v3677 = vpop.f32.mrb[0].mxu0
      %3678 = vmatprep.mubr.bf16.mxu0 0
      %3679 = vmatmul.mubr.bf16.gmra.mrb[0].mxu0 %v3510
      %v3680 = vpop.f32.mrb[0].mxu0
      %v3681 = vadd.f32 %v3540, %v3680
      %v3682 = vpop.f32.mrb[0].mxu0
      %v3683 = vpop.f32.mrb[0].mxu0
      %v3684 = vadd.f32 %v3540, %v3683
      %v3685 = vpop.f32.mrb[0].mxu0
      %3686 = vmatprep.mubr.bf16.mxu0 0
      %3687 = vmatmul.mubr.bf16.gmra.mrb[0].mxu0 %v3511
      %v3688 = vpop.f32.mrb[0].mxu0
      %v3689 = vadd.f32 %v3540, %v3688
      %v3690 = vpop.f32.mrb[0].mxu0
      %v3691 = vpop.f32.mrb[0].mxu0
      %v3692 = vadd.f32 %v3540, %v3691
      %v3693 = vpop.f32.mrb[0].mxu0
      %3694 = vmatprep.mubr.bf16.mxu0 0
      %3695 = vmatmul.mubr.bf16.gmra.mrb[0].mxu0 %v3512
      %v3696 = vpop.f32.mrb[0].mxu0
      %v3697 = vadd.f32 %v3540, %v3696
      %v3698 = vpop.f32.mrb[0].mxu0
      %v3699 = vpop.f32.mrb[0].mxu0
      %v3700 = vadd.f32 %v3540, %v3699
      %v3701 = vpop.f32.mrb[0].mxu0
      %3702 = vmatprep.mubr.bf16.mxu0 0
      %3703 = vmatmul.mubr.bf16.gmra.mrb[0].mxu0 %v3513
      %v3704 = vpop.f32.mrb[0].mxu0
      %v3705 = vadd.f32 %v3540, %v3704
      %v3706 = vpop.f32.mrb[0].mxu0
      %v3707 = vpop.f32.mrb[0].mxu0
      %v3708 = vadd.f32 %v3540, %v3707
      %v3709 = vpop.f32.mrb[0].mxu0
      %3710 = vmatprep.mubr.bf16.mxu0 0
      %3711 = vmatmul.mubr.bf16.gmra.mrb[0].mxu0 %v3514
      %v3712 = vpop.f32.mrb[0].mxu0
      %v3713 = vadd.f32 %v3540, %v3712
      %v3714 = vpop.f32.mrb[0].mxu0
      %v3715 = vpop.f32.mrb[0].mxu0
      %v3716 = vadd.f32 %v3540, %v3715
      %v3717 = vpop.f32.mrb[0].mxu0
      %3718 = vmatprep.mubr.bf16.mxu0 0
      %3719 = vmatmul.mubr.bf16.gmra.mrb[0].mxu0 %v3515
      %v3720 = vpop.f32.mrb[0].mxu0
      %v3721 = vadd.f32 %v3540, %v3720
      %v3722 = vpop.f32.mrb[0].mxu0
      %v3723 = vpop.f32.mrb[0].mxu0
      %v3724 = vadd.f32 %v3540, %v3723
      %v3725 = vpop.f32.mrb[0].mxu0
      %3726 = vmatprep.mubr.bf16.mxu0 0
      %3727 = vmatmul.mubr.bf16.gmra.mrb[0].mxu0 %v3516
      %v3728 = vpop.f32.mrb[0].mxu0
      %v3729 = vadd.f32 %v3540, %v3728
      %v3730 = vpop.f32.mrb[0].mxu0
      %v3731 = vpop.f32.mrb[0].mxu0
      %v3732 = vadd.f32 %v3540, %v3731
      %v3733 = vpop.f32.mrb[0].mxu0
      %3734 = vmatprep.mubr.bf16.mxu0 0
      %3735 = vmatmul.mubr.bf16.gmra.mrb[0].mxu0 %v3517
      %v3736 = vpop.f32.mrb[0].mxu0
      %v3737 = vadd.f32 %v3540, %v3736
      %v3738 = vpop.f32.mrb[0].mxu0
      %v3739 = vpop.f32.mrb[0].mxu0
      %v3740 = vadd.f32 %v3540, %v3739
      %v3741 = vpop.f32.mrb[0].mxu0
      %3742 = vmatprep.mubr.bf16.mxu0 0
      %3743 = vmatmul.mubr.bf16.gmra.mrb[0].mxu0 %v3518
      %v3744 = vpop.f32.mrb[0].mxu0
      %v3745 = vadd.f32 %v3540, %v3744
      %v3746 = vpop.f32.mrb[0].mxu0
      %v3747 = vpop.f32.mrb[0].mxu0
      %v3748 = vadd.f32 %v3540, %v3747
      %v3749 = vpop.f32.mrb[0].mxu0
      %3750 = vdwg.mxu0
      %3751 = vst.msk [vmem:[%s440] sm:$0xff] %vm577, %v3625
      %3752 = vst.msk [vmem:[%s440 + $0x8] sm:$0xff] %vm577, %v3628
      %3753 = vst.msk [vmem:[%s440 + $0x10] sm:$0xff] %vm577, %v3633
      %3754 = vst.msk [vmem:[%s440 + $0x18] sm:$0xff] %vm577, %v3636
      %3755 = vst.msk [vmem:[%s440 + $0x20] sm:$0xff] %vm577, %v3641
      %3756 = vst.msk [vmem:[%s440 + $0x28] sm:$0xff] %vm577, %v3644
      %3757 = vst.msk [vmem:[%s440 + $0x30] sm:$0xff] %vm577, %v3649
      %3758 = vst.msk [vmem:[%s440 + $0x38] sm:$0xff] %vm577, %v3652
      %3759 = vst.msk [vmem:[%s440 + $0x40] sm:$0xff] %vm577, %v3657
      %3760 = vst.msk [vmem:[%s440 + $0x48] sm:$0xff] %vm577, %v3660
      %3761 = vst.msk [vmem:[%s440 + $0x50] sm:$0xff] %vm577, %v3665
      %3762 = vst.msk [vmem:[%s440 + $0x58] sm:$0xff] %vm577, %v3668
      %3763 = vst.msk [vmem:[%s440 + $0x60] sm:$0xff] %vm577, %v3673
      %3764 = vst.msk [vmem:[%s440 + $0x68] sm:$0xff] %vm577, %v3676
      %3765 = vst.msk [vmem:[%s440 + $0x70] sm:$0xff] %vm577, %v3681
      %3766 = vst.msk [vmem:[%s440 + $0x78] sm:$0xff] %vm577, %v3684
      %3767 = vst.msk [vmem:[%s440 + $0x80] sm:$0xff] %vm577, %v3689
      %3768 = vst.msk [vmem:[%s440 + $0x88] sm:$0xff] %vm577, %v3692
      %3769 = vst.msk [vmem:[%s440 + $0x90] sm:$0xff] %vm577, %v3697
      %3770 = vst.msk [vmem:[%s440 + $0x98] sm:$0xff] %vm577, %v3700
      %3771 = vst.msk [vmem:[%s440 + $0xa0] sm:$0xff] %vm577, %v3705
      %3772 = vst.msk [vmem:[%s440 + $0xa8] sm:$0xff] %vm577, %v3708
      %3773 = vst.msk [vmem:[%s440 + $0xb0] sm:$0xff] %vm577, %v3713
      %3774 = vst.msk [vmem:[%s440 + $0xb8] sm:$0xff] %vm577, %v3716
      %3775 = vst.msk [vmem:[%s440 + $0xc0] sm:$0xff] %vm577, %v3721
      %3776 = vst.msk [vmem:[%s440 + $0xc8] sm:$0xff] %vm577, %v3724
      %3777 = vst.msk [vmem:[%s440 + $0xd0] sm:$0xff] %vm577, %v3729
      %3778 = vst.msk [vmem:[%s440 + $0xd8] sm:$0xff] %vm577, %v3732
      %3779 = vst.msk [vmem:[%s440 + $0xe0] sm:$0xff] %vm577, %v3737
      %3780 = vst.msk [vmem:[%s440 + $0xe8] sm:$0xff] %vm577, %v3740
      %3781 = vst.msk [vmem:[%s440 + $0xf0] sm:$0xff] %vm577, %v3745
      %3782 = vst.msk [vmem:[%s440 + $0xf8] sm:$0xff] %vm577, %v3748
      %p3783 = scmp.lt.s32.totalorder %s24, 1
      %s3784 = scalar_select %p3783, %s24, 1
      %s3785 = smul.addr %s3784, 32
      %s3786 = smul.addr %s3785, 8
      %s3787 = scalar_lea.vmem %s13, %s3786
      // Predicated region
      $region73: #{tpu_custom_call.1} parent=71 // pred_check
        %p3788 = pneg %p320
      $region74: #{tpu_custom_call.1} parent=71 // pred_check_branch
        %3790 = sbr.rel (%p3788) target = $region76
      $region75: #{tpu_custom_call.1} parent=71 // pred_region
        _
      $region76: #{tpu_custom_call.1} parent=71 // pred_fallthru
        _
    $region72: #{tpu_custom_call.1} parent=5 // pred_fallthru
      _
    %p3791 = scmp.le.s32.totalorder 2, %s19
    // Predicated region
    $region77: #{tpu_custom_call.1} parent=5 // pred_check
      %p3792 = pneg %p3791
    $region78: #{tpu_custom_call.1} parent=5 // pred_check_branch
      %3794 = sbr.rel (%p3792) target = $region80
    $region79: #{tpu_custom_call.1} parent=5 // pred_region
      %s3795 = ssub.s32 %s19, 2
      // Predicated region
      $region81: #{tpu_custom_call.1} parent=79 // pred_check
        %p3796 = pneg %p326
      $region82: #{tpu_custom_call.1} parent=79 // pred_check_branch
        %3798 = sbr.rel (%p3796) target = $region84
      $region83: #{tpu_custom_call.1} parent=79 // pred_region
        %p3799 = scmp.lt.s32.totalorder %s25, 1
        %s3800 = scalar_select %p3799, %s25, 1
        %s3801 = smul.addr %s3800, 32
        %s3802 = smul.addr %s3801, 8
        %s3803 = scalar_lea.vmem %s13, %s3802
      $region84: #{tpu_custom_call.1} parent=79 // pred_fallthru
        _
    $region80: #{tpu_custom_call.1} parent=5 // pred_fallthru
      _
  $region6: #{tpu_custom_call.1} parent=0 // loop_footer
    %s23 = sadd.s32 1, %s19
  $region7: #{tpu_custom_call.1} parent=0 // loop_footer_branch
    %18 = sbr.rel target = $region3
  $region8: #{tpu_custom_call.1} parent=0 // loop_exit
    _

</llo_original>
